<compile_context>
chip_gen: v7x
topology: tpu7x:2x2x1
jax: 0.10.0
libtpu: 0.0.40
codegen_flags: <defaults>
</compile_context>

<pallas_src>
import numpy as np
import jax
import jax.numpy as jnp
from jax.experimental import pallas as pl
from jax.experimental.pallas import tpu as pltpu

_SQRT_HALF = float(1.0 / np.sqrt(2.0))
_LN_EPS = 1e-5


def _erf(x):
    # Abramowitz & Stegun 7.1.26 (max abs err ~1.5e-7): float32-exact in
    # practice, matches torch.nn.GELU() (exact erf) semantics without relying
    # on a lax.erf Mosaic lowering.  exp() runs on the otherwise-idle EUP.
    p = 0.3275911
    a1, a2, a3, a4, a5 = (0.254829592, -0.284496736, 1.421413741,
                          -1.453152027, 1.061405429)
    ax = jnp.abs(x)
    t = 1.0 / (1.0 + p * ax)
    poly = ((((a5 * t + a4) * t + a3) * t + a2) * t + a1) * t
    y = 1.0 - poly * jnp.exp(-ax * ax)
    return jnp.where(x >= 0, y, -y)          # cheap copysign


def _gelu(x):
    return 0.5 * x * (1.0 + _erf(x * _SQRT_HALF))


def _pick_nb(n):
    # Samples per grid step: a multiple of 8 (fills f32 sublanes, satisfies the
    # (8,128) BlockSpec rule) while keeping >= 2 grid steps (v7x: 2 TCs);
    # otherwise the full batch (block dim == array dim is always legal).
    cands = [nb for nb in range(8, min(n, 32) + 1, 8)
             if n % nb == 0 and n // nb >= 2]
    return max(cands) if cands else n


def basic_block(x, w1, g1, b1, w2, g2, b2):
    """Pallas-TPU forward of hmvit.BasicBlock (stride=1).  x: (N,C,H,W) f32."""
    N, C, H, W = x.shape
    O = w1.shape[0]
    assert O == C, "residual add requires in_C == out_C"
    HW = H * W
    NB = _pick_nb(N)

    # 3x3 taps: (dh, dw) offsets, flat lane shift s = dh*W + dw, and the
    # zero-padding border mask for each tap (host-side, shared by both convs).
    taps = [(dh, dw) for dh in (-1, 0, 1) for dw in (-1, 0, 1)]
    shifts = [dh * W + dw for (dh, dw) in taps]
    ii = np.arange(H)[:, None]
    jj = np.arange(W)[None, :]
    masks_np = np.stack([
        (((ii + dh) >= 0) & ((ii + dh) < H) &
         ((jj + dw) >= 0) & ((jj + dw) < W)).astype(np.float32).reshape(HW)
        for (dh, dw) in taps])                                    # (9, HW)
    masks = jnp.asarray(masks_np)

    # Channel-major, lane-dense layouts (wrapper-side layout plumbing only).
    x_cm = jnp.transpose(x, (1, 0, 2, 3)).reshape(C, N, HW)       # (C, N, HW)
    g1f, b1f = g1.reshape(1, HW), b1.reshape(1, HW)
    g2f, b2f = g2.reshape(1, HW), b2.reshape(1, HW)
    w1f = w1.reshape(O * C * 9)                                   # SMEM scalars
    w2f = w2.reshape(O * C * 9)

    def kernel(mask_ref, x_ref, w1_ref, g1_ref, b1_ref,
               w2_ref, g2_ref, b2_ref, out_ref):
        masks_v = mask_ref[...]                                   # (9, HW)
        m_rows = [masks_v[t:t + 1, :] for t in range(9)]          # hoisted
        g1v, b1v = g1_ref[...], b1_ref[...]
        g2v, b2v = g2_ref[...], b2_ref[...]

        x_ch = [x_ref[c] for c in range(C)]     # C contiguous (NB, HW) slabs

        def conv(ch, w_ref):
            # Per (c, tap): one roll (XLU) + one mask multiply, reused across
            # all O output channels; scalar weights come straight from SMEM.
            accs = [None] * O
            for t in range(9):
                s = shifts[t]
                for c in range(C):
                    if s == 0:
                        tap = ch[c]                               # center tap
                    else:
                        tap = pltpu.roll(ch[c], shift=(-s) % HW, axis=1)
                        tap = tap * m_rows[t]
                    for o in range(O):
                        term = w_ref[(o * C + c) * 9 + t] * tap
                        accs[o] = term if accs[o] is None else accs[o] + term
            return accs

        def layernorm(y, g, b):
            # nn.LayerNorm([H, W]): per-(n, c) row over the HW lanes, biased
            # variance, centered two-pass form (cancellation-safe).
            mu = jnp.mean(y, axis=1, keepdims=True)
            d = y - mu
            var = jnp.mean(d * d, axis=1, keepdims=True)
            return d * jax.lax.rsqrt(var + _LN_EPS) * g + b

        # conv1 -> ln1 -> gelu
        h = conv(x_ch, w1_ref)
        h = [_gelu(layernorm(y, g1v, b1v)) for y in h]

        # conv2 -> ln2 -> +residual -> gelu  (per-channel lane-dense stores)
        h = conv(h, w2_ref)
        for c in range(O):
            y = layernorm(h[c], g2v, b2v)
            out_ref[c] = _gelu(y + x_ch[c])

    grid_spec = pltpu.PrefetchScalarGridSpec(
        num_scalar_prefetch=0,
        grid=(N // NB,),
        in_specs=[
            pl.BlockSpec((9, HW), lambda i: (0, 0)),                 # masks
            pl.BlockSpec((C, NB, HW), lambda i: (0, i, 0)),          # x
            pl.BlockSpec(memory_space=pltpu.MemorySpace.SMEM),       # w1
            pl.BlockSpec((1, HW), lambda i: (0, 0)),                 # g1
            pl.BlockSpec((1, HW), lambda i: (0, 0)),                 # b1
            pl.BlockSpec(memory_space=pltpu.MemorySpace.SMEM),       # w2
            pl.BlockSpec((1, HW), lambda i: (0, 0)),                 # g2
            pl.BlockSpec((1, HW), lambda i: (0, 0)),                 # b2
        ],
        out_specs=pl.BlockSpec((C, NB, HW), lambda i: (0, i, 0)),
    )

    out_cm = pl.pallas_call(
        kernel,
        out_shape=jax.ShapeDtypeStruct((C, N, HW), x.dtype),
        grid_spec=grid_spec,
        compiler_params=pltpu.CompilerParams(
            dimension_semantics=("parallel",)),
    )(masks, x_cm, w1f, g1f, b1f, w2f, g2f, b2f)

    return jnp.transpose(out_cm.reshape(C, N, H, W), (1, 0, 2, 3))


def reference(x, w1, g1, b1, w2, g2, b2):
    # pure-JAX reference mirroring the PyTorch module
    def conv(y, w):
        return jax.lax.conv_general_dilated(
            y, w, window_strides=(1, 1), padding=((1, 1), (1, 1)),
            dimension_numbers=("NCHW", "OIHW", "NCHW"))

    def ln(y, g, b):
        mu = jnp.mean(y, axis=(2, 3), keepdims=True)
        var = jnp.mean((y - mu) ** 2, axis=(2, 3), keepdims=True)
        return (y - mu) / jnp.sqrt(var + _LN_EPS) * g + b

    def gelu(y):
        return 0.5 * y * (1.0 + jax.lax.erf(y * _SQRT_HALF))

    out = gelu(ln(conv(x, w1), g1, b1))
    out = ln(conv(out, w2), g2, b2)
    return gelu(out + x)


if __name__ == "__main__":
    N, C, H, W = 2, 4, 16, 16   # in_C == out_C (required for the residual add)
    key = jax.random.PRNGKey(0)
    k = jax.random.split(key, 7)
    x = jax.random.normal(k[0], (N, C, H, W), jnp.float32)
    w1 = 0.1 * jax.random.normal(k[1], (C, C, 3, 3), jnp.float32)
    g1 = 1.0 + 0.02 * jax.random.normal(k[2], (H, W), jnp.float32)
    b1 = 0.02 * jax.random.normal(k[3], (H, W), jnp.float32)
    w2 = 0.1 * jax.random.normal(k[4], (C, C, 3, 3), jnp.float32)
    g2 = 1.0 + 0.02 * jax.random.normal(k[5], (H, W), jnp.float32)
    b2 = 0.02 * jax.random.normal(k[6], (H, W), jnp.float32)

    out = basic_block(x, w1, g1, b1, w2, g2, b2)
    jax.block_until_ready(out)

    ref = reference(x, w1, g1, b1, w2, g2, b2)
    assert out.shape == (N, C, H, W) and out.dtype == jnp.float32
    assert jnp.allclose(out, ref, atol=1e-4, rtol=1e-4), "mismatch vs reference"
    print("KERNEL_OK")
</pallas_src>

<mosaic_0001>
module attributes {stable_mosaic.version = 11 : i64} {
  func.func @kernel(%arg0: i32, %arg1: memref<9x256xf32, #tpu.memory_space<vmem>>, %arg2: memref<4x2x256xf32, #tpu.memory_space<vmem>>, %arg3: memref<144xf32, #tpu.memory_space<smem>>, %arg4: memref<1x256xf32, #tpu.memory_space<vmem>>, %arg5: memref<1x256xf32, #tpu.memory_space<vmem>>, %arg6: memref<144xf32, #tpu.memory_space<smem>>, %arg7: memref<1x256xf32, #tpu.memory_space<vmem>>, %arg8: memref<1x256xf32, #tpu.memory_space<vmem>>, %arg9: memref<4x2x256xf32, #tpu.memory_space<vmem>>) attributes {dimension_semantics = [#tpu.dimension_semantics<parallel>], iteration_bounds = array<i64: 1>, scalar_prefetch = 0 : i64, scratch_operands = 0 : i64, tpu.core_type = #tpu.core_type<tc>, window_params = [{pipeline_mode = #tpu.pipeline_mode<synchronous>, transform_indices = @transform_0, window_bounds = array<i64: 9, 256>}, {transform_indices = @transform_1, window_bounds = array<i64: 4, 2, 256>}, {transform_indices = @transform_2, window_bounds = array<i64: 144>}, {pipeline_mode = #tpu.pipeline_mode<synchronous>, transform_indices = @transform_3, window_bounds = array<i64: 1, 256>}, {pipeline_mode = #tpu.pipeline_mode<synchronous>, transform_indices = @transform_4, window_bounds = array<i64: 1, 256>}, {transform_indices = @transform_5, window_bounds = array<i64: 144>}, {pipeline_mode = #tpu.pipeline_mode<synchronous>, transform_indices = @transform_6, window_bounds = array<i64: 1, 256>}, {pipeline_mode = #tpu.pipeline_mode<synchronous>, transform_indices = @transform_7, window_bounds = array<i64: 1, 256>}, {transform_indices = @transform_8, window_bounds = array<i64: 4, 2, 256>}]} {
    %c0 = arith.constant 0 : index
    %c0_0 = arith.constant 0 : index
    %0 = vector.load %arg1[%c0, %c0_0] : memref<9x256xf32, #tpu.memory_space<vmem>>, vector<9x256xf32>
    %1 = vector.extract_strided_slice %0 {offsets = [0, 0], sizes = [1, 256], strides = [1, 1]} : vector<9x256xf32> to vector<1x256xf32>
    %2 = vector.extract_strided_slice %0 {offsets = [1, 0], sizes = [1, 256], strides = [1, 1]} : vector<9x256xf32> to vector<1x256xf32>
    %3 = vector.extract_strided_slice %0 {offsets = [2, 0], sizes = [1, 256], strides = [1, 1]} : vector<9x256xf32> to vector<1x256xf32>
    %4 = vector.extract_strided_slice %0 {offsets = [3, 0], sizes = [1, 256], strides = [1, 1]} : vector<9x256xf32> to vector<1x256xf32>
    %5 = vector.extract_strided_slice %0 {offsets = [5, 0], sizes = [1, 256], strides = [1, 1]} : vector<9x256xf32> to vector<1x256xf32>
    %6 = vector.extract_strided_slice %0 {offsets = [6, 0], sizes = [1, 256], strides = [1, 1]} : vector<9x256xf32> to vector<1x256xf32>
    %7 = vector.extract_strided_slice %0 {offsets = [7, 0], sizes = [1, 256], strides = [1, 1]} : vector<9x256xf32> to vector<1x256xf32>
    %8 = vector.extract_strided_slice %0 {offsets = [8, 0], sizes = [1, 256], strides = [1, 1]} : vector<9x256xf32> to vector<1x256xf32>
    %c0_1 = arith.constant 0 : index
    %c0_2 = arith.constant 0 : index
    %9 = vector.load %arg4[%c0_1, %c0_2] : memref<1x256xf32, #tpu.memory_space<vmem>>, vector<1x256xf32>
    %c0_3 = arith.constant 0 : index
    %c0_4 = arith.constant 0 : index
    %10 = vector.load %arg5[%c0_3, %c0_4] : memref<1x256xf32, #tpu.memory_space<vmem>>, vector<1x256xf32>
    %c0_5 = arith.constant 0 : index
    %c0_6 = arith.constant 0 : index
    %11 = vector.load %arg7[%c0_5, %c0_6] : memref<1x256xf32, #tpu.memory_space<vmem>>, vector<1x256xf32>
    %c0_7 = arith.constant 0 : index
    %c0_8 = arith.constant 0 : index
    %12 = vector.load %arg8[%c0_7, %c0_8] : memref<1x256xf32, #tpu.memory_space<vmem>>, vector<1x256xf32>
    %c0_9 = arith.constant 0 : index
    %c0_10 = arith.constant 0 : index
    %c0_11 = arith.constant 0 : index
    %13 = vector.load %arg2[%c0_9, %c0_10, %c0_11] : memref<4x2x256xf32, #tpu.memory_space<vmem>>, vector<1x2x256xf32>
    %14 = vector.shape_cast %13 : vector<1x2x256xf32> to vector<2x256xf32>
    %c1 = arith.constant 1 : index
    %c0_12 = arith.constant 0 : index
    %c0_13 = arith.constant 0 : index
    %15 = vector.load %arg2[%c1, %c0_12, %c0_13] : memref<4x2x256xf32, #tpu.memory_space<vmem>>, vector<1x2x256xf32>
    %16 = vector.shape_cast %15 : vector<1x2x256xf32> to vector<2x256xf32>
    %c2 = arith.constant 2 : index
    %c0_14 = arith.constant 0 : index
    %c0_15 = arith.constant 0 : index
    %17 = vector.load %arg2[%c2, %c0_14, %c0_15] : memref<4x2x256xf32, #tpu.memory_space<vmem>>, vector<1x2x256xf32>
    %18 = vector.shape_cast %17 : vector<1x2x256xf32> to vector<2x256xf32>
    %c3 = arith.constant 3 : index
    %c0_16 = arith.constant 0 : index
    %c0_17 = arith.constant 0 : index
    %19 = vector.load %arg2[%c3, %c0_16, %c0_17] : memref<4x2x256xf32, #tpu.memory_space<vmem>>, vector<1x2x256xf32>
    %20 = vector.shape_cast %19 : vector<1x2x256xf32> to vector<2x256xf32>
    %c17_i32 = arith.constant 17 : i32
    %21 = tpu.dynamic_rotate %14 by %c17_i32 dim 1 : vector<2x256xf32>, i32 -> vector<2x256xf32>
    %22 = vector.broadcast %1 : vector<1x256xf32> to vector<2x256xf32>
    %23 = arith.mulf %21, %22 : vector<2x256xf32>
    %c0_18 = arith.constant 0 : index
    %24 = memref.load %arg3[%c0_18] : memref<144xf32, #tpu.memory_space<smem>>
    %25 = vector.broadcast %24 : f32 to vector<2x256xf32>
    %26 = arith.mulf %25, %23 : vector<2x256xf32>
    %c36 = arith.constant 36 : index
    %27 = memref.load %arg3[%c36] : memref<144xf32, #tpu.memory_space<smem>>
    %28 = vector.broadcast %27 : f32 to vector<2x256xf32>
    %29 = arith.mulf %28, %23 : vector<2x256xf32>
    %c72 = arith.constant 72 : index
    %30 = memref.load %arg3[%c72] : memref<144xf32, #tpu.memory_space<smem>>
    %31 = vector.broadcast %30 : f32 to vector<2x256xf32>
    %32 = arith.mulf %31, %23 : vector<2x256xf32>
    %c108 = arith.constant 108 : index
    %33 = memref.load %arg3[%c108] : memref<144xf32, #tpu.memory_space<smem>>
    %34 = vector.broadcast %33 : f32 to vector<2x256xf32>
    %35 = arith.mulf %34, %23 : vector<2x256xf32>
    %c17_i32_19 = arith.constant 17 : i32
    %36 = tpu.dynamic_rotate %16 by %c17_i32_19 dim 1 : vector<2x256xf32>, i32 -> vector<2x256xf32>
    %37 = vector.broadcast %1 : vector<1x256xf32> to vector<2x256xf32>
    %38 = arith.mulf %36, %37 : vector<2x256xf32>
    %c9 = arith.constant 9 : index
    %39 = memref.load %arg3[%c9] : memref<144xf32, #tpu.memory_space<smem>>
    %40 = vector.broadcast %39 : f32 to vector<2x256xf32>
    %41 = arith.mulf %40, %38 : vector<2x256xf32>
    %42 = arith.addf %26, %41 : vector<2x256xf32>
    %c45 = arith.constant 45 : index
    %43 = memref.load %arg3[%c45] : memref<144xf32, #tpu.memory_space<smem>>
    %44 = vector.broadcast %43 : f32 to vector<2x256xf32>
    %45 = arith.mulf %44, %38 : vector<2x256xf32>
    %46 = arith.addf %29, %45 : vector<2x256xf32>
    %c81 = arith.constant 81 : index
    %47 = memref.load %arg3[%c81] : memref<144xf32, #tpu.memory_space<smem>>
    %48 = vector.broadcast %47 : f32 to vector<2x256xf32>
    %49 = arith.mulf %48, %38 : vector<2x256xf32>
    %50 = arith.addf %32, %49 : vector<2x256xf32>
    %c117 = arith.constant 117 : index
    %51 = memref.load %arg3[%c117] : memref<144xf32, #tpu.memory_space<smem>>
    %52 = vector.broadcast %51 : f32 to vector<2x256xf32>
    %53 = arith.mulf %52, %38 : vector<2x256xf32>
    %54 = arith.addf %35, %53 : vector<2x256xf32>
    %c17_i32_20 = arith.constant 17 : i32
    %55 = tpu.dynamic_rotate %18 by %c17_i32_20 dim 1 : vector<2x256xf32>, i32 -> vector<2x256xf32>
    %56 = vector.broadcast %1 : vector<1x256xf32> to vector<2x256xf32>
    %57 = arith.mulf %55, %56 : vector<2x256xf32>
    %c18 = arith.constant 18 : index
    %58 = memref.load %arg3[%c18] : memref<144xf32, #tpu.memory_space<smem>>
    %59 = vector.broadcast %58 : f32 to vector<2x256xf32>
    %60 = arith.mulf %59, %57 : vector<2x256xf32>
    %61 = arith.addf %42, %60 : vector<2x256xf32>
    %c54 = arith.constant 54 : index
    %62 = memref.load %arg3[%c54] : memref<144xf32, #tpu.memory_space<smem>>
    %63 = vector.broadcast %62 : f32 to vector<2x256xf32>
    %64 = arith.mulf %63, %57 : vector<2x256xf32>
    %65 = arith.addf %46, %64 : vector<2x256xf32>
    %c90 = arith.constant 90 : index
    %66 = memref.load %arg3[%c90] : memref<144xf32, #tpu.memory_space<smem>>
    %67 = vector.broadcast %66 : f32 to vector<2x256xf32>
    %68 = arith.mulf %67, %57 : vector<2x256xf32>
    %69 = arith.addf %50, %68 : vector<2x256xf32>
    %c126 = arith.constant 126 : index
    %70 = memref.load %arg3[%c126] : memref<144xf32, #tpu.memory_space<smem>>
    %71 = vector.broadcast %70 : f32 to vector<2x256xf32>
    %72 = arith.mulf %71, %57 : vector<2x256xf32>
    %73 = arith.addf %54, %72 : vector<2x256xf32>
    %c17_i32_21 = arith.constant 17 : i32
    %74 = tpu.dynamic_rotate %20 by %c17_i32_21 dim 1 : vector<2x256xf32>, i32 -> vector<2x256xf32>
    %75 = vector.broadcast %1 : vector<1x256xf32> to vector<2x256xf32>
    %76 = arith.mulf %74, %75 : vector<2x256xf32>
    %c27 = arith.constant 27 : index
    %77 = memref.load %arg3[%c27] : memref<144xf32, #tpu.memory_space<smem>>
    %78 = vector.broadcast %77 : f32 to vector<2x256xf32>
    %79 = arith.mulf %78, %76 : vector<2x256xf32>
    %80 = arith.addf %61, %79 : vector<2x256xf32>
    %c63 = arith.constant 63 : index
    %81 = memref.load %arg3[%c63] : memref<144xf32, #tpu.memory_space<smem>>
    %82 = vector.broadcast %81 : f32 to vector<2x256xf32>
    %83 = arith.mulf %82, %76 : vector<2x256xf32>
    %84 = arith.addf %65, %83 : vector<2x256xf32>
    %c99 = arith.constant 99 : index
    %85 = memref.load %arg3[%c99] : memref<144xf32, #tpu.memory_space<smem>>
    %86 = vector.broadcast %85 : f32 to vector<2x256xf32>
    %87 = arith.mulf %86, %76 : vector<2x256xf32>
    %88 = arith.addf %69, %87 : vector<2x256xf32>
    %c135 = arith.constant 135 : index
    %89 = memref.load %arg3[%c135] : memref<144xf32, #tpu.memory_space<smem>>
    %90 = vector.broadcast %89 : f32 to vector<2x256xf32>
    %91 = arith.mulf %90, %76 : vector<2x256xf32>
    %92 = arith.addf %73, %91 : vector<2x256xf32>
    %c16_i32 = arith.constant 16 : i32
    %93 = tpu.dynamic_rotate %14 by %c16_i32 dim 1 : vector<2x256xf32>, i32 -> vector<2x256xf32>
    %94 = vector.broadcast %2 : vector<1x256xf32> to vector<2x256xf32>
    %95 = arith.mulf %93, %94 : vector<2x256xf32>
    %c1_22 = arith.constant 1 : index
    %96 = memref.load %arg3[%c1_22] : memref<144xf32, #tpu.memory_space<smem>>
    %97 = vector.broadcast %96 : f32 to vector<2x256xf32>
    %98 = arith.mulf %97, %95 : vector<2x256xf32>
    %99 = arith.addf %80, %98 : vector<2x256xf32>
    %c37 = arith.constant 37 : index
    %100 = memref.load %arg3[%c37] : memref<144xf32, #tpu.memory_space<smem>>
    %101 = vector.broadcast %100 : f32 to vector<2x256xf32>
    %102 = arith.mulf %101, %95 : vector<2x256xf32>
    %103 = arith.addf %84, %102 : vector<2x256xf32>
    %c73 = arith.constant 73 : index
    %104 = memref.load %arg3[%c73] : memref<144xf32, #tpu.memory_space<smem>>
    %105 = vector.broadcast %104 : f32 to vector<2x256xf32>
    %106 = arith.mulf %105, %95 : vector<2x256xf32>
    %107 = arith.addf %88, %106 : vector<2x256xf32>
    %c109 = arith.constant 109 : index
    %108 = memref.load %arg3[%c109] : memref<144xf32, #tpu.memory_space<smem>>
    %109 = vector.broadcast %108 : f32 to vector<2x256xf32>
    %110 = arith.mulf %109, %95 : vector<2x256xf32>
    %111 = arith.addf %92, %110 : vector<2x256xf32>
    %c16_i32_23 = arith.constant 16 : i32
    %112 = tpu.dynamic_rotate %16 by %c16_i32_23 dim 1 : vector<2x256xf32>, i32 -> vector<2x256xf32>
    %113 = vector.broadcast %2 : vector<1x256xf32> to vector<2x256xf32>
    %114 = arith.mulf %112, %113 : vector<2x256xf32>
    %c10 = arith.constant 10 : index
    %115 = memref.load %arg3[%c10] : memref<144xf32, #tpu.memory_space<smem>>
    %116 = vector.broadcast %115 : f32 to vector<2x256xf32>
    %117 = arith.mulf %116, %114 : vector<2x256xf32>
    %118 = arith.addf %99, %117 : vector<2x256xf32>
    %c46 = arith.constant 46 : index
    %119 = memref.load %arg3[%c46] : memref<144xf32, #tpu.memory_space<smem>>
    %120 = vector.broadcast %119 : f32 to vector<2x256xf32>
    %121 = arith.mulf %120, %114 : vector<2x256xf32>
    %122 = arith.addf %103, %121 : vector<2x256xf32>
    %c82 = arith.constant 82 : index
    %123 = memref.load %arg3[%c82] : memref<144xf32, #tpu.memory_space<smem>>
    %124 = vector.broadcast %123 : f32 to vector<2x256xf32>
    %125 = arith.mulf %124, %114 : vector<2x256xf32>
    %126 = arith.addf %107, %125 : vector<2x256xf32>
    %c118 = arith.constant 118 : index
    %127 = memref.load %arg3[%c118] : memref<144xf32, #tpu.memory_space<smem>>
    %128 = vector.broadcast %127 : f32 to vector<2x256xf32>
    %129 = arith.mulf %128, %114 : vector<2x256xf32>
    %130 = arith.addf %111, %129 : vector<2x256xf32>
    %c16_i32_24 = arith.constant 16 : i32
    %131 = tpu.dynamic_rotate %18 by %c16_i32_24 dim 1 : vector<2x256xf32>, i32 -> vector<2x256xf32>
    %132 = vector.broadcast %2 : vector<1x256xf32> to vector<2x256xf32>
    %133 = arith.mulf %131, %132 : vector<2x256xf32>
    %c19 = arith.constant 19 : index
    %134 = memref.load %arg3[%c19] : memref<144xf32, #tpu.memory_space<smem>>
    %135 = vector.broadcast %134 : f32 to vector<2x256xf32>
    %136 = arith.mulf %135, %133 : vector<2x256xf32>
    %137 = arith.addf %118, %136 : vector<2x256xf32>
    %c55 = arith.constant 55 : index
    %138 = memref.load %arg3[%c55] : memref<144xf32, #tpu.memory_space<smem>>
    %139 = vector.broadcast %138 : f32 to vector<2x256xf32>
    %140 = arith.mulf %139, %133 : vector<2x256xf32>
    %141 = arith.addf %122, %140 : vector<2x256xf32>
    %c91 = arith.constant 91 : index
    %142 = memref.load %arg3[%c91] : memref<144xf32, #tpu.memory_space<smem>>
    %143 = vector.broadcast %142 : f32 to vector<2x256xf32>
    %144 = arith.mulf %143, %133 : vector<2x256xf32>
    %145 = arith.addf %126, %144 : vector<2x256xf32>
    %c127 = arith.constant 127 : index
    %146 = memref.load %arg3[%c127] : memref<144xf32, #tpu.memory_space<smem>>
    %147 = vector.broadcast %146 : f32 to vector<2x256xf32>
    %148 = arith.mulf %147, %133 : vector<2x256xf32>
    %149 = arith.addf %130, %148 : vector<2x256xf32>
    %c16_i32_25 = arith.constant 16 : i32
    %150 = tpu.dynamic_rotate %20 by %c16_i32_25 dim 1 : vector<2x256xf32>, i32 -> vector<2x256xf32>
    %151 = vector.broadcast %2 : vector<1x256xf32> to vector<2x256xf32>
    %152 = arith.mulf %150, %151 : vector<2x256xf32>
    %c28 = arith.constant 28 : index
    %153 = memref.load %arg3[%c28] : memref<144xf32, #tpu.memory_space<smem>>
    %154 = vector.broadcast %153 : f32 to vector<2x256xf32>
    %155 = arith.mulf %154, %152 : vector<2x256xf32>
    %156 = arith.addf %137, %155 : vector<2x256xf32>
    %c64 = arith.constant 64 : index
    %157 = memref.load %arg3[%c64] : memref<144xf32, #tpu.memory_space<smem>>
    %158 = vector.broadcast %157 : f32 to vector<2x256xf32>
    %159 = arith.mulf %158, %152 : vector<2x256xf32>
    %160 = arith.addf %141, %159 : vector<2x256xf32>
    %c100 = arith.constant 100 : index
    %161 = memref.load %arg3[%c100] : memref<144xf32, #tpu.memory_space<smem>>
    %162 = vector.broadcast %161 : f32 to vector<2x256xf32>
    %163 = arith.mulf %162, %152 : vector<2x256xf32>
    %164 = arith.addf %145, %163 : vector<2x256xf32>
    %c136 = arith.constant 136 : index
    %165 = memref.load %arg3[%c136] : memref<144xf32, #tpu.memory_space<smem>>
    %166 = vector.broadcast %165 : f32 to vector<2x256xf32>
    %167 = arith.mulf %166, %152 : vector<2x256xf32>
    %168 = arith.addf %149, %167 : vector<2x256xf32>
    %c15_i32 = arith.constant 15 : i32
    %169 = tpu.dynamic_rotate %14 by %c15_i32 dim 1 : vector<2x256xf32>, i32 -> vector<2x256xf32>
    %170 = vector.broadcast %3 : vector<1x256xf32> to vector<2x256xf32>
    %171 = arith.mulf %169, %170 : vector<2x256xf32>
    %c2_26 = arith.constant 2 : index
    %172 = memref.load %arg3[%c2_26] : memref<144xf32, #tpu.memory_space<smem>>
    %173 = vector.broadcast %172 : f32 to vector<2x256xf32>
    %174 = arith.mulf %173, %171 : vector<2x256xf32>
    %175 = arith.addf %156, %174 : vector<2x256xf32>
    %c38 = arith.constant 38 : index
    %176 = memref.load %arg3[%c38] : memref<144xf32, #tpu.memory_space<smem>>
    %177 = vector.broadcast %176 : f32 to vector<2x256xf32>
    %178 = arith.mulf %177, %171 : vector<2x256xf32>
    %179 = arith.addf %160, %178 : vector<2x256xf32>
    %c74 = arith.constant 74 : index
    %180 = memref.load %arg3[%c74] : memref<144xf32, #tpu.memory_space<smem>>
    %181 = vector.broadcast %180 : f32 to vector<2x256xf32>
    %182 = arith.mulf %181, %171 : vector<2x256xf32>
    %183 = arith.addf %164, %182 : vector<2x256xf32>
    %c110 = arith.constant 110 : index
    %184 = memref.load %arg3[%c110] : memref<144xf32, #tpu.memory_space<smem>>
    %185 = vector.broadcast %184 : f32 to vector<2x256xf32>
    %186 = arith.mulf %185, %171 : vector<2x256xf32>
    %187 = arith.addf %168, %186 : vector<2x256xf32>
    %c15_i32_27 = arith.constant 15 : i32
    %188 = tpu.dynamic_rotate %16 by %c15_i32_27 dim 1 : vector<2x256xf32>, i32 -> vector<2x256xf32>
    %189 = vector.broadcast %3 : vector<1x256xf32> to vector<2x256xf32>
    %190 = arith.mulf %188, %189 : vector<2x256xf32>
    %c11 = arith.constant 11 : index
    %191 = memref.load %arg3[%c11] : memref<144xf32, #tpu.memory_space<smem>>
    %192 = vector.broadcast %191 : f32 to vector<2x256xf32>
    %193 = arith.mulf %192, %190 : vector<2x256xf32>
    %194 = arith.addf %175, %193 : vector<2x256xf32>
    %c47 = arith.constant 47 : index
    %195 = memref.load %arg3[%c47] : memref<144xf32, #tpu.memory_space<smem>>
    %196 = vector.broadcast %195 : f32 to vector<2x256xf32>
    %197 = arith.mulf %196, %190 : vector<2x256xf32>
    %198 = arith.addf %179, %197 : vector<2x256xf32>
    %c83 = arith.constant 83 : index
    %199 = memref.load %arg3[%c83] : memref<144xf32, #tpu.memory_space<smem>>
    %200 = vector.broadcast %199 : f32 to vector<2x256xf32>
    %201 = arith.mulf %200, %190 : vector<2x256xf32>
    %202 = arith.addf %183, %201 : vector<2x256xf32>
    %c119 = arith.constant 119 : index
    %203 = memref.load %arg3[%c119] : memref<144xf32, #tpu.memory_space<smem>>
    %204 = vector.broadcast %203 : f32 to vector<2x256xf32>
    %205 = arith.mulf %204, %190 : vector<2x256xf32>
    %206 = arith.addf %187, %205 : vector<2x256xf32>
    %c15_i32_28 = arith.constant 15 : i32
    %207 = tpu.dynamic_rotate %18 by %c15_i32_28 dim 1 : vector<2x256xf32>, i32 -> vector<2x256xf32>
    %208 = vector.broadcast %3 : vector<1x256xf32> to vector<2x256xf32>
    %209 = arith.mulf %207, %208 : vector<2x256xf32>
    %c20 = arith.constant 20 : index
    %210 = memref.load %arg3[%c20] : memref<144xf32, #tpu.memory_space<smem>>
    %211 = vector.broadcast %210 : f32 to vector<2x256xf32>
    %212 = arith.mulf %211, %209 : vector<2x256xf32>
    %213 = arith.addf %194, %212 : vector<2x256xf32>
    %c56 = arith.constant 56 : index
    %214 = memref.load %arg3[%c56] : memref<144xf32, #tpu.memory_space<smem>>
    %215 = vector.broadcast %214 : f32 to vector<2x256xf32>
    %216 = arith.mulf %215, %209 : vector<2x256xf32>
    %217 = arith.addf %198, %216 : vector<2x256xf32>
    %c92 = arith.constant 92 : index
    %218 = memref.load %arg3[%c92] : memref<144xf32, #tpu.memory_space<smem>>
    %219 = vector.broadcast %218 : f32 to vector<2x256xf32>
    %220 = arith.mulf %219, %209 : vector<2x256xf32>
    %221 = arith.addf %202, %220 : vector<2x256xf32>
    %c128 = arith.constant 128 : index
    %222 = memref.load %arg3[%c128] : memref<144xf32, #tpu.memory_space<smem>>
    %223 = vector.broadcast %222 : f32 to vector<2x256xf32>
    %224 = arith.mulf %223, %209 : vector<2x256xf32>
    %225 = arith.addf %206, %224 : vector<2x256xf32>
    %c15_i32_29 = arith.constant 15 : i32
    %226 = tpu.dynamic_rotate %20 by %c15_i32_29 dim 1 : vector<2x256xf32>, i32 -> vector<2x256xf32>
    %227 = vector.broadcast %3 : vector<1x256xf32> to vector<2x256xf32>
    %228 = arith.mulf %226, %227 : vector<2x256xf32>
    %c29 = arith.constant 29 : index
    %229 = memref.load %arg3[%c29] : memref<144xf32, #tpu.memory_space<smem>>
    %230 = vector.broadcast %229 : f32 to vector<2x256xf32>
    %231 = arith.mulf %230, %228 : vector<2x256xf32>
    %232 = arith.addf %213, %231 : vector<2x256xf32>
    %c65 = arith.constant 65 : index
    %233 = memref.load %arg3[%c65] : memref<144xf32, #tpu.memory_space<smem>>
    %234 = vector.broadcast %233 : f32 to vector<2x256xf32>
    %235 = arith.mulf %234, %228 : vector<2x256xf32>
    %236 = arith.addf %217, %235 : vector<2x256xf32>
    %c101 = arith.constant 101 : index
    %237 = memref.load %arg3[%c101] : memref<144xf32, #tpu.memory_space<smem>>
    %238 = vector.broadcast %237 : f32 to vector<2x256xf32>
    %239 = arith.mulf %238, %228 : vector<2x256xf32>
    %240 = arith.addf %221, %239 : vector<2x256xf32>
    %c137 = arith.constant 137 : index
    %241 = memref.load %arg3[%c137] : memref<144xf32, #tpu.memory_space<smem>>
    %242 = vector.broadcast %241 : f32 to vector<2x256xf32>
    %243 = arith.mulf %242, %228 : vector<2x256xf32>
    %244 = arith.addf %225, %243 : vector<2x256xf32>
    %c1_i32 = arith.constant 1 : i32
    %245 = tpu.dynamic_rotate %14 by %c1_i32 dim 1 : vector<2x256xf32>, i32 -> vector<2x256xf32>
    %246 = vector.broadcast %4 : vector<1x256xf32> to vector<2x256xf32>
    %247 = arith.mulf %245, %246 : vector<2x256xf32>
    %c3_30 = arith.constant 3 : index
    %248 = memref.load %arg3[%c3_30] : memref<144xf32, #tpu.memory_space<smem>>
    %249 = vector.broadcast %248 : f32 to vector<2x256xf32>
    %250 = arith.mulf %249, %247 : vector<2x256xf32>
    %251 = arith.addf %232, %250 : vector<2x256xf32>
    %c39 = arith.constant 39 : index
    %252 = memref.load %arg3[%c39] : memref<144xf32, #tpu.memory_space<smem>>
    %253 = vector.broadcast %252 : f32 to vector<2x256xf32>
    %254 = arith.mulf %253, %247 : vector<2x256xf32>
    %255 = arith.addf %236, %254 : vector<2x256xf32>
    %c75 = arith.constant 75 : index
    %256 = memref.load %arg3[%c75] : memref<144xf32, #tpu.memory_space<smem>>
    %257 = vector.broadcast %256 : f32 to vector<2x256xf32>
    %258 = arith.mulf %257, %247 : vector<2x256xf32>
    %259 = arith.addf %240, %258 : vector<2x256xf32>
    %c111 = arith.constant 111 : index
    %260 = memref.load %arg3[%c111] : memref<144xf32, #tpu.memory_space<smem>>
    %261 = vector.broadcast %260 : f32 to vector<2x256xf32>
    %262 = arith.mulf %261, %247 : vector<2x256xf32>
    %263 = arith.addf %244, %262 : vector<2x256xf32>
    %c1_i32_31 = arith.constant 1 : i32
    %264 = tpu.dynamic_rotate %16 by %c1_i32_31 dim 1 : vector<2x256xf32>, i32 -> vector<2x256xf32>
    %265 = vector.broadcast %4 : vector<1x256xf32> to vector<2x256xf32>
    %266 = arith.mulf %264, %265 : vector<2x256xf32>
    %c12 = arith.constant 12 : index
    %267 = memref.load %arg3[%c12] : memref<144xf32, #tpu.memory_space<smem>>
    %268 = vector.broadcast %267 : f32 to vector<2x256xf32>
    %269 = arith.mulf %268, %266 : vector<2x256xf32>
    %270 = arith.addf %251, %269 : vector<2x256xf32>
    %c48 = arith.constant 48 : index
    %271 = memref.load %arg3[%c48] : memref<144xf32, #tpu.memory_space<smem>>
    %272 = vector.broadcast %271 : f32 to vector<2x256xf32>
    %273 = arith.mulf %272, %266 : vector<2x256xf32>
    %274 = arith.addf %255, %273 : vector<2x256xf32>
    %c84 = arith.constant 84 : index
    %275 = memref.load %arg3[%c84] : memref<144xf32, #tpu.memory_space<smem>>
    %276 = vector.broadcast %275 : f32 to vector<2x256xf32>
    %277 = arith.mulf %276, %266 : vector<2x256xf32>
    %278 = arith.addf %259, %277 : vector<2x256xf32>
    %c120 = arith.constant 120 : index
    %279 = memref.load %arg3[%c120] : memref<144xf32, #tpu.memory_space<smem>>
    %280 = vector.broadcast %279 : f32 to vector<2x256xf32>
    %281 = arith.mulf %280, %266 : vector<2x256xf32>
    %282 = arith.addf %263, %281 : vector<2x256xf32>
    %c1_i32_32 = arith.constant 1 : i32
    %283 = tpu.dynamic_rotate %18 by %c1_i32_32 dim 1 : vector<2x256xf32>, i32 -> vector<2x256xf32>
    %284 = vector.broadcast %4 : vector<1x256xf32> to vector<2x256xf32>
    %285 = arith.mulf %283, %284 : vector<2x256xf32>
    %c21 = arith.constant 21 : index
    %286 = memref.load %arg3[%c21] : memref<144xf32, #tpu.memory_space<smem>>
    %287 = vector.broadcast %286 : f32 to vector<2x256xf32>
    %288 = arith.mulf %287, %285 : vector<2x256xf32>
    %289 = arith.addf %270, %288 : vector<2x256xf32>
    %c57 = arith.constant 57 : index
    %290 = memref.load %arg3[%c57] : memref<144xf32, #tpu.memory_space<smem>>
    %291 = vector.broadcast %290 : f32 to vector<2x256xf32>
    %292 = arith.mulf %291, %285 : vector<2x256xf32>
    %293 = arith.addf %274, %292 : vector<2x256xf32>
    %c93 = arith.constant 93 : index
    %294 = memref.load %arg3[%c93] : memref<144xf32, #tpu.memory_space<smem>>
    %295 = vector.broadcast %294 : f32 to vector<2x256xf32>
    %296 = arith.mulf %295, %285 : vector<2x256xf32>
    %297 = arith.addf %278, %296 : vector<2x256xf32>
    %c129 = arith.constant 129 : index
    %298 = memref.load %arg3[%c129] : memref<144xf32, #tpu.memory_space<smem>>
    %299 = vector.broadcast %298 : f32 to vector<2x256xf32>
    %300 = arith.mulf %299, %285 : vector<2x256xf32>
    %301 = arith.addf %282, %300 : vector<2x256xf32>
    %c1_i32_33 = arith.constant 1 : i32
    %302 = tpu.dynamic_rotate %20 by %c1_i32_33 dim 1 : vector<2x256xf32>, i32 -> vector<2x256xf32>
    %303 = vector.broadcast %4 : vector<1x256xf32> to vector<2x256xf32>
    %304 = arith.mulf %302, %303 : vector<2x256xf32>
    %c30 = arith.constant 30 : index
    %305 = memref.load %arg3[%c30] : memref<144xf32, #tpu.memory_space<smem>>
    %306 = vector.broadcast %305 : f32 to vector<2x256xf32>
    %307 = arith.mulf %306, %304 : vector<2x256xf32>
    %308 = arith.addf %289, %307 : vector<2x256xf32>
    %c66 = arith.constant 66 : index
    %309 = memref.load %arg3[%c66] : memref<144xf32, #tpu.memory_space<smem>>
    %310 = vector.broadcast %309 : f32 to vector<2x256xf32>
    %311 = arith.mulf %310, %304 : vector<2x256xf32>
    %312 = arith.addf %293, %311 : vector<2x256xf32>
    %c102 = arith.constant 102 : index
    %313 = memref.load %arg3[%c102] : memref<144xf32, #tpu.memory_space<smem>>
    %314 = vector.broadcast %313 : f32 to vector<2x256xf32>
    %315 = arith.mulf %314, %304 : vector<2x256xf32>
    %316 = arith.addf %297, %315 : vector<2x256xf32>
    %c138 = arith.constant 138 : index
    %317 = memref.load %arg3[%c138] : memref<144xf32, #tpu.memory_space<smem>>
    %318 = vector.broadcast %317 : f32 to vector<2x256xf32>
    %319 = arith.mulf %318, %304 : vector<2x256xf32>
    %320 = arith.addf %301, %319 : vector<2x256xf32>
    %c4 = arith.constant 4 : index
    %321 = memref.load %arg3[%c4] : memref<144xf32, #tpu.memory_space<smem>>
    %322 = vector.broadcast %321 : f32 to vector<2x256xf32>
    %323 = arith.mulf %322, %14 : vector<2x256xf32>
    %324 = arith.addf %308, %323 : vector<2x256xf32>
    %c40 = arith.constant 40 : index
    %325 = memref.load %arg3[%c40] : memref<144xf32, #tpu.memory_space<smem>>
    %326 = vector.broadcast %325 : f32 to vector<2x256xf32>
    %327 = arith.mulf %326, %14 : vector<2x256xf32>
    %328 = arith.addf %312, %327 : vector<2x256xf32>
    %c76 = arith.constant 76 : index
    %329 = memref.load %arg3[%c76] : memref<144xf32, #tpu.memory_space<smem>>
    %330 = vector.broadcast %329 : f32 to vector<2x256xf32>
    %331 = arith.mulf %330, %14 : vector<2x256xf32>
    %332 = arith.addf %316, %331 : vector<2x256xf32>
    %c112 = arith.constant 112 : index
    %333 = memref.load %arg3[%c112] : memref<144xf32, #tpu.memory_space<smem>>
    %334 = vector.broadcast %333 : f32 to vector<2x256xf32>
    %335 = arith.mulf %334, %14 : vector<2x256xf32>
    %336 = arith.addf %320, %335 : vector<2x256xf32>
    %c13 = arith.constant 13 : index
    %337 = memref.load %arg3[%c13] : memref<144xf32, #tpu.memory_space<smem>>
    %338 = vector.broadcast %337 : f32 to vector<2x256xf32>
    %339 = arith.mulf %338, %16 : vector<2x256xf32>
    %340 = arith.addf %324, %339 : vector<2x256xf32>
    %c49 = arith.constant 49 : index
    %341 = memref.load %arg3[%c49] : memref<144xf32, #tpu.memory_space<smem>>
    %342 = vector.broadcast %341 : f32 to vector<2x256xf32>
    %343 = arith.mulf %342, %16 : vector<2x256xf32>
    %344 = arith.addf %328, %343 : vector<2x256xf32>
    %c85 = arith.constant 85 : index
    %345 = memref.load %arg3[%c85] : memref<144xf32, #tpu.memory_space<smem>>
    %346 = vector.broadcast %345 : f32 to vector<2x256xf32>
    %347 = arith.mulf %346, %16 : vector<2x256xf32>
    %348 = arith.addf %332, %347 : vector<2x256xf32>
    %c121 = arith.constant 121 : index
    %349 = memref.load %arg3[%c121] : memref<144xf32, #tpu.memory_space<smem>>
    %350 = vector.broadcast %349 : f32 to vector<2x256xf32>
    %351 = arith.mulf %350, %16 : vector<2x256xf32>
    %352 = arith.addf %336, %351 : vector<2x256xf32>
    %c22 = arith.constant 22 : index
    %353 = memref.load %arg3[%c22] : memref<144xf32, #tpu.memory_space<smem>>
    %354 = vector.broadcast %353 : f32 to vector<2x256xf32>
    %355 = arith.mulf %354, %18 : vector<2x256xf32>
    %356 = arith.addf %340, %355 : vector<2x256xf32>
    %c58 = arith.constant 58 : index
    %357 = memref.load %arg3[%c58] : memref<144xf32, #tpu.memory_space<smem>>
    %358 = vector.broadcast %357 : f32 to vector<2x256xf32>
    %359 = arith.mulf %358, %18 : vector<2x256xf32>
    %360 = arith.addf %344, %359 : vector<2x256xf32>
    %c94 = arith.constant 94 : index
    %361 = memref.load %arg3[%c94] : memref<144xf32, #tpu.memory_space<smem>>
    %362 = vector.broadcast %361 : f32 to vector<2x256xf32>
    %363 = arith.mulf %362, %18 : vector<2x256xf32>
    %364 = arith.addf %348, %363 : vector<2x256xf32>
    %c130 = arith.constant 130 : index
    %365 = memref.load %arg3[%c130] : memref<144xf32, #tpu.memory_space<smem>>
    %366 = vector.broadcast %365 : f32 to vector<2x256xf32>
    %367 = arith.mulf %366, %18 : vector<2x256xf32>
    %368 = arith.addf %352, %367 : vector<2x256xf32>
    %c31 = arith.constant 31 : index
    %369 = memref.load %arg3[%c31] : memref<144xf32, #tpu.memory_space<smem>>
    %370 = vector.broadcast %369 : f32 to vector<2x256xf32>
    %371 = arith.mulf %370, %20 : vector<2x256xf32>
    %372 = arith.addf %356, %371 : vector<2x256xf32>
    %c67 = arith.constant 67 : index
    %373 = memref.load %arg3[%c67] : memref<144xf32, #tpu.memory_space<smem>>
    %374 = vector.broadcast %373 : f32 to vector<2x256xf32>
    %375 = arith.mulf %374, %20 : vector<2x256xf32>
    %376 = arith.addf %360, %375 : vector<2x256xf32>
    %c103 = arith.constant 103 : index
    %377 = memref.load %arg3[%c103] : memref<144xf32, #tpu.memory_space<smem>>
    %378 = vector.broadcast %377 : f32 to vector<2x256xf32>
    %379 = arith.mulf %378, %20 : vector<2x256xf32>
    %380 = arith.addf %364, %379 : vector<2x256xf32>
    %c139 = arith.constant 139 : index
    %381 = memref.load %arg3[%c139] : memref<144xf32, #tpu.memory_space<smem>>
    %382 = vector.broadcast %381 : f32 to vector<2x256xf32>
    %383 = arith.mulf %382, %20 : vector<2x256xf32>
    %384 = arith.addf %368, %383 : vector<2x256xf32>
    %c255_i32 = arith.constant 255 : i32
    %385 = tpu.dynamic_rotate %14 by %c255_i32 dim 1 : vector<2x256xf32>, i32 -> vector<2x256xf32>
    %386 = vector.broadcast %5 : vector<1x256xf32> to vector<2x256xf32>
    %387 = arith.mulf %385, %386 : vector<2x256xf32>
    %c5 = arith.constant 5 : index
    %388 = memref.load %arg3[%c5] : memref<144xf32, #tpu.memory_space<smem>>
    %389 = vector.broadcast %388 : f32 to vector<2x256xf32>
    %390 = arith.mulf %389, %387 : vector<2x256xf32>
    %391 = arith.addf %372, %390 : vector<2x256xf32>
    %c41 = arith.constant 41 : index
    %392 = memref.load %arg3[%c41] : memref<144xf32, #tpu.memory_space<smem>>
    %393 = vector.broadcast %392 : f32 to vector<2x256xf32>
    %394 = arith.mulf %393, %387 : vector<2x256xf32>
    %395 = arith.addf %376, %394 : vector<2x256xf32>
    %c77 = arith.constant 77 : index
    %396 = memref.load %arg3[%c77] : memref<144xf32, #tpu.memory_space<smem>>
    %397 = vector.broadcast %396 : f32 to vector<2x256xf32>
    %398 = arith.mulf %397, %387 : vector<2x256xf32>
    %399 = arith.addf %380, %398 : vector<2x256xf32>
    %c113 = arith.constant 113 : index
    %400 = memref.load %arg3[%c113] : memref<144xf32, #tpu.memory_space<smem>>
    %401 = vector.broadcast %400 : f32 to vector<2x256xf32>
    %402 = arith.mulf %401, %387 : vector<2x256xf32>
    %403 = arith.addf %384, %402 : vector<2x256xf32>
    %c255_i32_34 = arith.constant 255 : i32
    %404 = tpu.dynamic_rotate %16 by %c255_i32_34 dim 1 : vector<2x256xf32>, i32 -> vector<2x256xf32>
    %405 = vector.broadcast %5 : vector<1x256xf32> to vector<2x256xf32>
    %406 = arith.mulf %404, %405 : vector<2x256xf32>
    %c14 = arith.constant 14 : index
    %407 = memref.load %arg3[%c14] : memref<144xf32, #tpu.memory_space<smem>>
    %408 = vector.broadcast %407 : f32 to vector<2x256xf32>
    %409 = arith.mulf %408, %406 : vector<2x256xf32>
    %410 = arith.addf %391, %409 : vector<2x256xf32>
    %c50 = arith.constant 50 : index
    %411 = memref.load %arg3[%c50] : memref<144xf32, #tpu.memory_space<smem>>
    %412 = vector.broadcast %411 : f32 to vector<2x256xf32>
    %413 = arith.mulf %412, %406 : vector<2x256xf32>
    %414 = arith.addf %395, %413 : vector<2x256xf32>
    %c86 = arith.constant 86 : index
    %415 = memref.load %arg3[%c86] : memref<144xf32, #tpu.memory_space<smem>>
    %416 = vector.broadcast %415 : f32 to vector<2x256xf32>
    %417 = arith.mulf %416, %406 : vector<2x256xf32>
    %418 = arith.addf %399, %417 : vector<2x256xf32>
    %c122 = arith.constant 122 : index
    %419 = memref.load %arg3[%c122] : memref<144xf32, #tpu.memory_space<smem>>
    %420 = vector.broadcast %419 : f32 to vector<2x256xf32>
    %421 = arith.mulf %420, %406 : vector<2x256xf32>
    %422 = arith.addf %403, %421 : vector<2x256xf32>
    %c255_i32_35 = arith.constant 255 : i32
    %423 = tpu.dynamic_rotate %18 by %c255_i32_35 dim 1 : vector<2x256xf32>, i32 -> vector<2x256xf32>
    %424 = vector.broadcast %5 : vector<1x256xf32> to vector<2x256xf32>
    %425 = arith.mulf %423, %424 : vector<2x256xf32>
    %c23 = arith.constant 23 : index
    %426 = memref.load %arg3[%c23] : memref<144xf32, #tpu.memory_space<smem>>
    %427 = vector.broadcast %426 : f32 to vector<2x256xf32>
    %428 = arith.mulf %427, %425 : vector<2x256xf32>
    %429 = arith.addf %410, %428 : vector<2x256xf32>
    %c59 = arith.constant 59 : index
    %430 = memref.load %arg3[%c59] : memref<144xf32, #tpu.memory_space<smem>>
    %431 = vector.broadcast %430 : f32 to vector<2x256xf32>
    %432 = arith.mulf %431, %425 : vector<2x256xf32>
    %433 = arith.addf %414, %432 : vector<2x256xf32>
    %c95 = arith.constant 95 : index
    %434 = memref.load %arg3[%c95] : memref<144xf32, #tpu.memory_space<smem>>
    %435 = vector.broadcast %434 : f32 to vector<2x256xf32>
    %436 = arith.mulf %435, %425 : vector<2x256xf32>
    %437 = arith.addf %418, %436 : vector<2x256xf32>
    %c131 = arith.constant 131 : index
    %438 = memref.load %arg3[%c131] : memref<144xf32, #tpu.memory_space<smem>>
    %439 = vector.broadcast %438 : f32 to vector<2x256xf32>
    %440 = arith.mulf %439, %425 : vector<2x256xf32>
    %441 = arith.addf %422, %440 : vector<2x256xf32>
    %c255_i32_36 = arith.constant 255 : i32
    %442 = tpu.dynamic_rotate %20 by %c255_i32_36 dim 1 : vector<2x256xf32>, i32 -> vector<2x256xf32>
    %443 = vector.broadcast %5 : vector<1x256xf32> to vector<2x256xf32>
    %444 = arith.mulf %442, %443 : vector<2x256xf32>
    %c32 = arith.constant 32 : index
    %445 = memref.load %arg3[%c32] : memref<144xf32, #tpu.memory_space<smem>>
    %446 = vector.broadcast %445 : f32 to vector<2x256xf32>
    %447 = arith.mulf %446, %444 : vector<2x256xf32>
    %448 = arith.addf %429, %447 : vector<2x256xf32>
    %c68 = arith.constant 68 : index
    %449 = memref.load %arg3[%c68] : memref<144xf32, #tpu.memory_space<smem>>
    %450 = vector.broadcast %449 : f32 to vector<2x256xf32>
    %451 = arith.mulf %450, %444 : vector<2x256xf32>
    %452 = arith.addf %433, %451 : vector<2x256xf32>
    %c104 = arith.constant 104 : index
    %453 = memref.load %arg3[%c104] : memref<144xf32, #tpu.memory_space<smem>>
    %454 = vector.broadcast %453 : f32 to vector<2x256xf32>
    %455 = arith.mulf %454, %444 : vector<2x256xf32>
    %456 = arith.addf %437, %455 : vector<2x256xf32>
    %c140 = arith.constant 140 : index
    %457 = memref.load %arg3[%c140] : memref<144xf32, #tpu.memory_space<smem>>
    %458 = vector.broadcast %457 : f32 to vector<2x256xf32>
    %459 = arith.mulf %458, %444 : vector<2x256xf32>
    %460 = arith.addf %441, %459 : vector<2x256xf32>
    %c241_i32 = arith.constant 241 : i32
    %461 = tpu.dynamic_rotate %14 by %c241_i32 dim 1 : vector<2x256xf32>, i32 -> vector<2x256xf32>
    %462 = vector.broadcast %6 : vector<1x256xf32> to vector<2x256xf32>
    %463 = arith.mulf %461, %462 : vector<2x256xf32>
    %c6 = arith.constant 6 : index
    %464 = memref.load %arg3[%c6] : memref<144xf32, #tpu.memory_space<smem>>
    %465 = vector.broadcast %464 : f32 to vector<2x256xf32>
    %466 = arith.mulf %465, %463 : vector<2x256xf32>
    %467 = arith.addf %448, %466 : vector<2x256xf32>
    %c42 = arith.constant 42 : index
    %468 = memref.load %arg3[%c42] : memref<144xf32, #tpu.memory_space<smem>>
    %469 = vector.broadcast %468 : f32 to vector<2x256xf32>
    %470 = arith.mulf %469, %463 : vector<2x256xf32>
    %471 = arith.addf %452, %470 : vector<2x256xf32>
    %c78 = arith.constant 78 : index
    %472 = memref.load %arg3[%c78] : memref<144xf32, #tpu.memory_space<smem>>
    %473 = vector.broadcast %472 : f32 to vector<2x256xf32>
    %474 = arith.mulf %473, %463 : vector<2x256xf32>
    %475 = arith.addf %456, %474 : vector<2x256xf32>
    %c114 = arith.constant 114 : index
    %476 = memref.load %arg3[%c114] : memref<144xf32, #tpu.memory_space<smem>>
    %477 = vector.broadcast %476 : f32 to vector<2x256xf32>
    %478 = arith.mulf %477, %463 : vector<2x256xf32>
    %479 = arith.addf %460, %478 : vector<2x256xf32>
    %c241_i32_37 = arith.constant 241 : i32
    %480 = tpu.dynamic_rotate %16 by %c241_i32_37 dim 1 : vector<2x256xf32>, i32 -> vector<2x256xf32>
    %481 = vector.broadcast %6 : vector<1x256xf32> to vector<2x256xf32>
    %482 = arith.mulf %480, %481 : vector<2x256xf32>
    %c15 = arith.constant 15 : index
    %483 = memref.load %arg3[%c15] : memref<144xf32, #tpu.memory_space<smem>>
    %484 = vector.broadcast %483 : f32 to vector<2x256xf32>
    %485 = arith.mulf %484, %482 : vector<2x256xf32>
    %486 = arith.addf %467, %485 : vector<2x256xf32>
    %c51 = arith.constant 51 : index
    %487 = memref.load %arg3[%c51] : memref<144xf32, #tpu.memory_space<smem>>
    %488 = vector.broadcast %487 : f32 to vector<2x256xf32>
    %489 = arith.mulf %488, %482 : vector<2x256xf32>
    %490 = arith.addf %471, %489 : vector<2x256xf32>
    %c87 = arith.constant 87 : index
    %491 = memref.load %arg3[%c87] : memref<144xf32, #tpu.memory_space<smem>>
    %492 = vector.broadcast %491 : f32 to vector<2x256xf32>
    %493 = arith.mulf %492, %482 : vector<2x256xf32>
    %494 = arith.addf %475, %493 : vector<2x256xf32>
    %c123 = arith.constant 123 : index
    %495 = memref.load %arg3[%c123] : memref<144xf32, #tpu.memory_space<smem>>
    %496 = vector.broadcast %495 : f32 to vector<2x256xf32>
    %497 = arith.mulf %496, %482 : vector<2x256xf32>
    %498 = arith.addf %479, %497 : vector<2x256xf32>
    %c241_i32_38 = arith.constant 241 : i32
    %499 = tpu.dynamic_rotate %18 by %c241_i32_38 dim 1 : vector<2x256xf32>, i32 -> vector<2x256xf32>
    %500 = vector.broadcast %6 : vector<1x256xf32> to vector<2x256xf32>
    %501 = arith.mulf %499, %500 : vector<2x256xf32>
    %c24 = arith.constant 24 : index
    %502 = memref.load %arg3[%c24] : memref<144xf32, #tpu.memory_space<smem>>
    %503 = vector.broadcast %502 : f32 to vector<2x256xf32>
    %504 = arith.mulf %503, %501 : vector<2x256xf32>
    %505 = arith.addf %486, %504 : vector<2x256xf32>
    %c60 = arith.constant 60 : index
    %506 = memref.load %arg3[%c60] : memref<144xf32, #tpu.memory_space<smem>>
    %507 = vector.broadcast %506 : f32 to vector<2x256xf32>
    %508 = arith.mulf %507, %501 : vector<2x256xf32>
    %509 = arith.addf %490, %508 : vector<2x256xf32>
    %c96 = arith.constant 96 : index
    %510 = memref.load %arg3[%c96] : memref<144xf32, #tpu.memory_space<smem>>
    %511 = vector.broadcast %510 : f32 to vector<2x256xf32>
    %512 = arith.mulf %511, %501 : vector<2x256xf32>
    %513 = arith.addf %494, %512 : vector<2x256xf32>
    %c132 = arith.constant 132 : index
    %514 = memref.load %arg3[%c132] : memref<144xf32, #tpu.memory_space<smem>>
    %515 = vector.broadcast %514 : f32 to vector<2x256xf32>
    %516 = arith.mulf %515, %501 : vector<2x256xf32>
    %517 = arith.addf %498, %516 : vector<2x256xf32>
    %c241_i32_39 = arith.constant 241 : i32
    %518 = tpu.dynamic_rotate %20 by %c241_i32_39 dim 1 : vector<2x256xf32>, i32 -> vector<2x256xf32>
    %519 = vector.broadcast %6 : vector<1x256xf32> to vector<2x256xf32>
    %520 = arith.mulf %518, %519 : vector<2x256xf32>
    %c33 = arith.constant 33 : index
    %521 = memref.load %arg3[%c33] : memref<144xf32, #tpu.memory_space<smem>>
    %522 = vector.broadcast %521 : f32 to vector<2x256xf32>
    %523 = arith.mulf %522, %520 : vector<2x256xf32>
    %524 = arith.addf %505, %523 : vector<2x256xf32>
    %c69 = arith.constant 69 : index
    %525 = memref.load %arg3[%c69] : memref<144xf32, #tpu.memory_space<smem>>
    %526 = vector.broadcast %525 : f32 to vector<2x256xf32>
    %527 = arith.mulf %526, %520 : vector<2x256xf32>
    %528 = arith.addf %509, %527 : vector<2x256xf32>
    %c105 = arith.constant 105 : index
    %529 = memref.load %arg3[%c105] : memref<144xf32, #tpu.memory_space<smem>>
    %530 = vector.broadcast %529 : f32 to vector<2x256xf32>
    %531 = arith.mulf %530, %520 : vector<2x256xf32>
    %532 = arith.addf %513, %531 : vector<2x256xf32>
    %c141 = arith.constant 141 : index
    %533 = memref.load %arg3[%c141] : memref<144xf32, #tpu.memory_space<smem>>
    %534 = vector.broadcast %533 : f32 to vector<2x256xf32>
    %535 = arith.mulf %534, %520 : vector<2x256xf32>
    %536 = arith.addf %517, %535 : vector<2x256xf32>
    %c240_i32 = arith.constant 240 : i32
    %537 = tpu.dynamic_rotate %14 by %c240_i32 dim 1 : vector<2x256xf32>, i32 -> vector<2x256xf32>
    %538 = vector.broadcast %7 : vector<1x256xf32> to vector<2x256xf32>
    %539 = arith.mulf %537, %538 : vector<2x256xf32>
    %c7 = arith.constant 7 : index
    %540 = memref.load %arg3[%c7] : memref<144xf32, #tpu.memory_space<smem>>
    %541 = vector.broadcast %540 : f32 to vector<2x256xf32>
    %542 = arith.mulf %541, %539 : vector<2x256xf32>
    %543 = arith.addf %524, %542 : vector<2x256xf32>
    %c43 = arith.constant 43 : index
    %544 = memref.load %arg3[%c43] : memref<144xf32, #tpu.memory_space<smem>>
    %545 = vector.broadcast %544 : f32 to vector<2x256xf32>
    %546 = arith.mulf %545, %539 : vector<2x256xf32>
    %547 = arith.addf %528, %546 : vector<2x256xf32>
    %c79 = arith.constant 79 : index
    %548 = memref.load %arg3[%c79] : memref<144xf32, #tpu.memory_space<smem>>
    %549 = vector.broadcast %548 : f32 to vector<2x256xf32>
    %550 = arith.mulf %549, %539 : vector<2x256xf32>
    %551 = arith.addf %532, %550 : vector<2x256xf32>
    %c115 = arith.constant 115 : index
    %552 = memref.load %arg3[%c115] : memref<144xf32, #tpu.memory_space<smem>>
    %553 = vector.broadcast %552 : f32 to vector<2x256xf32>
    %554 = arith.mulf %553, %539 : vector<2x256xf32>
    %555 = arith.addf %536, %554 : vector<2x256xf32>
    %c240_i32_40 = arith.constant 240 : i32
    %556 = tpu.dynamic_rotate %16 by %c240_i32_40 dim 1 : vector<2x256xf32>, i32 -> vector<2x256xf32>
    %557 = vector.broadcast %7 : vector<1x256xf32> to vector<2x256xf32>
    %558 = arith.mulf %556, %557 : vector<2x256xf32>
    %c16 = arith.constant 16 : index
    %559 = memref.load %arg3[%c16] : memref<144xf32, #tpu.memory_space<smem>>
    %560 = vector.broadcast %559 : f32 to vector<2x256xf32>
    %561 = arith.mulf %560, %558 : vector<2x256xf32>
    %562 = arith.addf %543, %561 : vector<2x256xf32>
    %c52 = arith.constant 52 : index
    %563 = memref.load %arg3[%c52] : memref<144xf32, #tpu.memory_space<smem>>
    %564 = vector.broadcast %563 : f32 to vector<2x256xf32>
    %565 = arith.mulf %564, %558 : vector<2x256xf32>
    %566 = arith.addf %547, %565 : vector<2x256xf32>
    %c88 = arith.constant 88 : index
    %567 = memref.load %arg3[%c88] : memref<144xf32, #tpu.memory_space<smem>>
    %568 = vector.broadcast %567 : f32 to vector<2x256xf32>
    %569 = arith.mulf %568, %558 : vector<2x256xf32>
    %570 = arith.addf %551, %569 : vector<2x256xf32>
    %c124 = arith.constant 124 : index
    %571 = memref.load %arg3[%c124] : memref<144xf32, #tpu.memory_space<smem>>
    %572 = vector.broadcast %571 : f32 to vector<2x256xf32>
    %573 = arith.mulf %572, %558 : vector<2x256xf32>
    %574 = arith.addf %555, %573 : vector<2x256xf32>
    %c240_i32_41 = arith.constant 240 : i32
    %575 = tpu.dynamic_rotate %18 by %c240_i32_41 dim 1 : vector<2x256xf32>, i32 -> vector<2x256xf32>
    %576 = vector.broadcast %7 : vector<1x256xf32> to vector<2x256xf32>
    %577 = arith.mulf %575, %576 : vector<2x256xf32>
    %c25 = arith.constant 25 : index
    %578 = memref.load %arg3[%c25] : memref<144xf32, #tpu.memory_space<smem>>
    %579 = vector.broadcast %578 : f32 to vector<2x256xf32>
    %580 = arith.mulf %579, %577 : vector<2x256xf32>
    %581 = arith.addf %562, %580 : vector<2x256xf32>
    %c61 = arith.constant 61 : index
    %582 = memref.load %arg3[%c61] : memref<144xf32, #tpu.memory_space<smem>>
    %583 = vector.broadcast %582 : f32 to vector<2x256xf32>
    %584 = arith.mulf %583, %577 : vector<2x256xf32>
    %585 = arith.addf %566, %584 : vector<2x256xf32>
    %c97 = arith.constant 97 : index
    %586 = memref.load %arg3[%c97] : memref<144xf32, #tpu.memory_space<smem>>
    %587 = vector.broadcast %586 : f32 to vector<2x256xf32>
    %588 = arith.mulf %587, %577 : vector<2x256xf32>
    %589 = arith.addf %570, %588 : vector<2x256xf32>
    %c133 = arith.constant 133 : index
    %590 = memref.load %arg3[%c133] : memref<144xf32, #tpu.memory_space<smem>>
    %591 = vector.broadcast %590 : f32 to vector<2x256xf32>
    %592 = arith.mulf %591, %577 : vector<2x256xf32>
    %593 = arith.addf %574, %592 : vector<2x256xf32>
    %c240_i32_42 = arith.constant 240 : i32
    %594 = tpu.dynamic_rotate %20 by %c240_i32_42 dim 1 : vector<2x256xf32>, i32 -> vector<2x256xf32>
    %595 = vector.broadcast %7 : vector<1x256xf32> to vector<2x256xf32>
    %596 = arith.mulf %594, %595 : vector<2x256xf32>
    %c34 = arith.constant 34 : index
    %597 = memref.load %arg3[%c34] : memref<144xf32, #tpu.memory_space<smem>>
    %598 = vector.broadcast %597 : f32 to vector<2x256xf32>
    %599 = arith.mulf %598, %596 : vector<2x256xf32>
    %600 = arith.addf %581, %599 : vector<2x256xf32>
    %c70 = arith.constant 70 : index
    %601 = memref.load %arg3[%c70] : memref<144xf32, #tpu.memory_space<smem>>
    %602 = vector.broadcast %601 : f32 to vector<2x256xf32>
    %603 = arith.mulf %602, %596 : vector<2x256xf32>
    %604 = arith.addf %585, %603 : vector<2x256xf32>
    %c106 = arith.constant 106 : index
    %605 = memref.load %arg3[%c106] : memref<144xf32, #tpu.memory_space<smem>>
    %606 = vector.broadcast %605 : f32 to vector<2x256xf32>
    %607 = arith.mulf %606, %596 : vector<2x256xf32>
    %608 = arith.addf %589, %607 : vector<2x256xf32>
    %c142 = arith.constant 142 : index
    %609 = memref.load %arg3[%c142] : memref<144xf32, #tpu.memory_space<smem>>
    %610 = vector.broadcast %609 : f32 to vector<2x256xf32>
    %611 = arith.mulf %610, %596 : vector<2x256xf32>
    %612 = arith.addf %593, %611 : vector<2x256xf32>
    %c239_i32 = arith.constant 239 : i32
    %613 = tpu.dynamic_rotate %14 by %c239_i32 dim 1 : vector<2x256xf32>, i32 -> vector<2x256xf32>
    %614 = vector.broadcast %8 : vector<1x256xf32> to vector<2x256xf32>
    %615 = arith.mulf %613, %614 : vector<2x256xf32>
    %c8 = arith.constant 8 : index
    %616 = memref.load %arg3[%c8] : memref<144xf32, #tpu.memory_space<smem>>
    %617 = vector.broadcast %616 : f32 to vector<2x256xf32>
    %618 = arith.mulf %617, %615 : vector<2x256xf32>
    %619 = arith.addf %600, %618 : vector<2x256xf32>
    %c44 = arith.constant 44 : index
    %620 = memref.load %arg3[%c44] : memref<144xf32, #tpu.memory_space<smem>>
    %621 = vector.broadcast %620 : f32 to vector<2x256xf32>
    %622 = arith.mulf %621, %615 : vector<2x256xf32>
    %623 = arith.addf %604, %622 : vector<2x256xf32>
    %c80 = arith.constant 80 : index
    %624 = memref.load %arg3[%c80] : memref<144xf32, #tpu.memory_space<smem>>
    %625 = vector.broadcast %624 : f32 to vector<2x256xf32>
    %626 = arith.mulf %625, %615 : vector<2x256xf32>
    %627 = arith.addf %608, %626 : vector<2x256xf32>
    %c116 = arith.constant 116 : index
    %628 = memref.load %arg3[%c116] : memref<144xf32, #tpu.memory_space<smem>>
    %629 = vector.broadcast %628 : f32 to vector<2x256xf32>
    %630 = arith.mulf %629, %615 : vector<2x256xf32>
    %631 = arith.addf %612, %630 : vector<2x256xf32>
    %c239_i32_43 = arith.constant 239 : i32
    %632 = tpu.dynamic_rotate %16 by %c239_i32_43 dim 1 : vector<2x256xf32>, i32 -> vector<2x256xf32>
    %633 = vector.broadcast %8 : vector<1x256xf32> to vector<2x256xf32>
    %634 = arith.mulf %632, %633 : vector<2x256xf32>
    %c17 = arith.constant 17 : index
    %635 = memref.load %arg3[%c17] : memref<144xf32, #tpu.memory_space<smem>>
    %636 = vector.broadcast %635 : f32 to vector<2x256xf32>
    %637 = arith.mulf %636, %634 : vector<2x256xf32>
    %638 = arith.addf %619, %637 : vector<2x256xf32>
    %c53 = arith.constant 53 : index
    %639 = memref.load %arg3[%c53] : memref<144xf32, #tpu.memory_space<smem>>
    %640 = vector.broadcast %639 : f32 to vector<2x256xf32>
    %641 = arith.mulf %640, %634 : vector<2x256xf32>
    %642 = arith.addf %623, %641 : vector<2x256xf32>
    %c89 = arith.constant 89 : index
    %643 = memref.load %arg3[%c89] : memref<144xf32, #tpu.memory_space<smem>>
    %644 = vector.broadcast %643 : f32 to vector<2x256xf32>
    %645 = arith.mulf %644, %634 : vector<2x256xf32>
    %646 = arith.addf %627, %645 : vector<2x256xf32>
    %c125 = arith.constant 125 : index
    %647 = memref.load %arg3[%c125] : memref<144xf32, #tpu.memory_space<smem>>
    %648 = vector.broadcast %647 : f32 to vector<2x256xf32>
    %649 = arith.mulf %648, %634 : vector<2x256xf32>
    %650 = arith.addf %631, %649 : vector<2x256xf32>
    %c239_i32_44 = arith.constant 239 : i32
    %651 = tpu.dynamic_rotate %18 by %c239_i32_44 dim 1 : vector<2x256xf32>, i32 -> vector<2x256xf32>
    %652 = vector.broadcast %8 : vector<1x256xf32> to vector<2x256xf32>
    %653 = arith.mulf %651, %652 : vector<2x256xf32>
    %c26 = arith.constant 26 : index
    %654 = memref.load %arg3[%c26] : memref<144xf32, #tpu.memory_space<smem>>
    %655 = vector.broadcast %654 : f32 to vector<2x256xf32>
    %656 = arith.mulf %655, %653 : vector<2x256xf32>
    %657 = arith.addf %638, %656 : vector<2x256xf32>
    %c62 = arith.constant 62 : index
    %658 = memref.load %arg3[%c62] : memref<144xf32, #tpu.memory_space<smem>>
    %659 = vector.broadcast %658 : f32 to vector<2x256xf32>
    %660 = arith.mulf %659, %653 : vector<2x256xf32>
    %661 = arith.addf %642, %660 : vector<2x256xf32>
    %c98 = arith.constant 98 : index
    %662 = memref.load %arg3[%c98] : memref<144xf32, #tpu.memory_space<smem>>
    %663 = vector.broadcast %662 : f32 to vector<2x256xf32>
    %664 = arith.mulf %663, %653 : vector<2x256xf32>
    %665 = arith.addf %646, %664 : vector<2x256xf32>
    %c134 = arith.constant 134 : index
    %666 = memref.load %arg3[%c134] : memref<144xf32, #tpu.memory_space<smem>>
    %667 = vector.broadcast %666 : f32 to vector<2x256xf32>
    %668 = arith.mulf %667, %653 : vector<2x256xf32>
    %669 = arith.addf %650, %668 : vector<2x256xf32>
    %c239_i32_45 = arith.constant 239 : i32
    %670 = tpu.dynamic_rotate %20 by %c239_i32_45 dim 1 : vector<2x256xf32>, i32 -> vector<2x256xf32>
    %671 = vector.broadcast %8 : vector<1x256xf32> to vector<2x256xf32>
    %672 = arith.mulf %670, %671 : vector<2x256xf32>
    %c35 = arith.constant 35 : index
    %673 = memref.load %arg3[%c35] : memref<144xf32, #tpu.memory_space<smem>>
    %674 = vector.broadcast %673 : f32 to vector<2x256xf32>
    %675 = arith.mulf %674, %672 : vector<2x256xf32>
    %676 = arith.addf %657, %675 : vector<2x256xf32>
    %c71 = arith.constant 71 : index
    %677 = memref.load %arg3[%c71] : memref<144xf32, #tpu.memory_space<smem>>
    %678 = vector.broadcast %677 : f32 to vector<2x256xf32>
    %679 = arith.mulf %678, %672 : vector<2x256xf32>
    %680 = arith.addf %661, %679 : vector<2x256xf32>
    %c107 = arith.constant 107 : index
    %681 = memref.load %arg3[%c107] : memref<144xf32, #tpu.memory_space<smem>>
    %682 = vector.broadcast %681 : f32 to vector<2x256xf32>
    %683 = arith.mulf %682, %672 : vector<2x256xf32>
    %684 = arith.addf %665, %683 : vector<2x256xf32>
    %c143 = arith.constant 143 : index
    %685 = memref.load %arg3[%c143] : memref<144xf32, #tpu.memory_space<smem>>
    %686 = vector.broadcast %685 : f32 to vector<2x256xf32>
    %687 = arith.mulf %686, %672 : vector<2x256xf32>
    %688 = arith.addf %669, %687 : vector<2x256xf32>
    %cst = arith.constant dense<0.000000e+00> : vector<2xf32>
    %689 = vector.multi_reduction <add>, %676, %cst [1] : vector<2x256xf32> to vector<2xf32>
    %690 = vector.shape_cast %689 : vector<2xf32> to vector<2x1xf32>
    %cst_46 = arith.constant 2.560000e+02 : f32
    %691 = vector.broadcast %cst_46 : f32 to vector<2x1xf32>
    %692 = arith.divf %690, %691 : vector<2x1xf32>
    %693 = vector.broadcast %692 : vector<2x1xf32> to vector<2x256xf32>
    %694 = arith.subf %676, %693 : vector<2x256xf32>
    %695 = arith.mulf %694, %694 : vector<2x256xf32>
    %cst_47 = arith.constant dense<0.000000e+00> : vector<2xf32>
    %696 = vector.multi_reduction <add>, %695, %cst_47 [1] : vector<2x256xf32> to vector<2xf32>
    %697 = vector.shape_cast %696 : vector<2xf32> to vector<2x1xf32>
    %cst_48 = arith.constant 2.560000e+02 : f32
    %698 = vector.broadcast %cst_48 : f32 to vector<2x1xf32>
    %699 = arith.divf %697, %698 : vector<2x1xf32>
    %cst_49 = arith.constant 9.99999974E-6 : f32
    %700 = vector.broadcast %cst_49 : f32 to vector<2x1xf32>
    %701 = arith.addf %699, %700 : vector<2x1xf32>
    %702 = math.rsqrt %701 : vector<2x1xf32>
    %703 = vector.broadcast %702 : vector<2x1xf32> to vector<2x256xf32>
    %704 = arith.mulf %694, %703 : vector<2x256xf32>
    %705 = vector.broadcast %9 : vector<1x256xf32> to vector<2x256xf32>
    %706 = arith.mulf %704, %705 : vector<2x256xf32>
    %707 = vector.broadcast %10 : vector<1x256xf32> to vector<2x256xf32>
    %708 = arith.addf %706, %707 : vector<2x256xf32>
    %cst_50 = arith.constant 5.000000e-01 : f32
    %709 = vector.broadcast %cst_50 : f32 to vector<2x256xf32>
    %710 = arith.mulf %709, %708 : vector<2x256xf32>
    %cst_51 = arith.constant 0.707106769 : f32
    %711 = vector.broadcast %cst_51 : f32 to vector<2x256xf32>
    %712 = arith.mulf %708, %711 : vector<2x256xf32>
    %713 = math.absf %712 : vector<2x256xf32>
    %cst_52 = arith.constant 0.327591091 : f32
    %714 = vector.broadcast %cst_52 : f32 to vector<2x256xf32>
    %715 = arith.mulf %714, %713 : vector<2x256xf32>
    %cst_53 = arith.constant 1.000000e+00 : f32
    %716 = vector.broadcast %cst_53 : f32 to vector<2x256xf32>
    %717 = arith.addf %716, %715 : vector<2x256xf32>
    %cst_54 = arith.constant 1.000000e+00 : f32
    %718 = vector.broadcast %cst_54 : f32 to vector<2x256xf32>
    %719 = arith.divf %718, %717 : vector<2x256xf32>
    %cst_55 = arith.constant 1.06140542 : f32
    %720 = vector.broadcast %cst_55 : f32 to vector<2x256xf32>
    %721 = arith.mulf %720, %719 : vector<2x256xf32>
    %cst_56 = arith.constant -1.45315206 : f32
    %722 = vector.broadcast %cst_56 : f32 to vector<2x256xf32>
    %723 = arith.addf %721, %722 : vector<2x256xf32>
    %724 = arith.mulf %723, %719 : vector<2x256xf32>
    %cst_57 = arith.constant 1.42141378 : f32
    %725 = vector.broadcast %cst_57 : f32 to vector<2x256xf32>
    %726 = arith.addf %724, %725 : vector<2x256xf32>
    %727 = arith.mulf %726, %719 : vector<2x256xf32>
    %cst_58 = arith.constant -0.284496725 : f32
    %728 = vector.broadcast %cst_58 : f32 to vector<2x256xf32>
    %729 = arith.addf %727, %728 : vector<2x256xf32>
    %730 = arith.mulf %729, %719 : vector<2x256xf32>
    %cst_59 = arith.constant 0.254829586 : f32
    %731 = vector.broadcast %cst_59 : f32 to vector<2x256xf32>
    %732 = arith.addf %730, %731 : vector<2x256xf32>
    %733 = arith.mulf %732, %719 : vector<2x256xf32>
    %cst_60 = arith.constant 0.000000e+00 : f32
    %734 = vector.broadcast %cst_60 : f32 to vector<2x256xf32>
    %735 = arith.subf %734, %713 : vector<2x256xf32>
    %736 = arith.mulf %735, %713 : vector<2x256xf32>
    %737 = math.exp %736 : vector<2x256xf32>
    %738 = arith.mulf %733, %737 : vector<2x256xf32>
    %cst_61 = arith.constant 1.000000e+00 : f32
    %739 = vector.broadcast %cst_61 : f32 to vector<2x256xf32>
    %740 = arith.subf %739, %738 : vector<2x256xf32>
    %cst_62 = arith.constant 0.000000e+00 : f32
    %741 = vector.broadcast %cst_62 : f32 to vector<2x256xf32>
    %742 = arith.cmpf oge, %712, %741 : vector<2x256xf32>
    %cst_63 = arith.constant 0.000000e+00 : f32
    %743 = vector.broadcast %cst_63 : f32 to vector<2x256xf32>
    %744 = arith.subf %743, %740 : vector<2x256xf32>
    %745 = arith.select %742, %740, %744 : vector<2x256xi1>, vector<2x256xf32>
    %cst_64 = arith.constant 1.000000e+00 : f32
    %746 = vector.broadcast %cst_64 : f32 to vector<2x256xf32>
    %747 = arith.addf %746, %745 : vector<2x256xf32>
    %748 = arith.mulf %710, %747 : vector<2x256xf32>
    %cst_65 = arith.constant dense<0.000000e+00> : vector<2xf32>
    %749 = vector.multi_reduction <add>, %680, %cst_65 [1] : vector<2x256xf32> to vector<2xf32>
    %750 = vector.shape_cast %749 : vector<2xf32> to vector<2x1xf32>
    %cst_66 = arith.constant 2.560000e+02 : f32
    %751 = vector.broadcast %cst_66 : f32 to vector<2x1xf32>
    %752 = arith.divf %750, %751 : vector<2x1xf32>
    %753 = vector.broadcast %752 : vector<2x1xf32> to vector<2x256xf32>
    %754 = arith.subf %680, %753 : vector<2x256xf32>
    %755 = arith.mulf %754, %754 : vector<2x256xf32>
    %cst_67 = arith.constant dense<0.000000e+00> : vector<2xf32>
    %756 = vector.multi_reduction <add>, %755, %cst_67 [1] : vector<2x256xf32> to vector<2xf32>
    %757 = vector.shape_cast %756 : vector<2xf32> to vector<2x1xf32>
    %cst_68 = arith.constant 2.560000e+02 : f32
    %758 = vector.broadcast %cst_68 : f32 to vector<2x1xf32>
    %759 = arith.divf %757, %758 : vector<2x1xf32>
    %cst_69 = arith.constant 9.99999974E-6 : f32
    %760 = vector.broadcast %cst_69 : f32 to vector<2x1xf32>
    %761 = arith.addf %759, %760 : vector<2x1xf32>
    %762 = math.rsqrt %761 : vector<2x1xf32>
    %763 = vector.broadcast %762 : vector<2x1xf32> to vector<2x256xf32>
    %764 = arith.mulf %754, %763 : vector<2x256xf32>
    %765 = vector.broadcast %9 : vector<1x256xf32> to vector<2x256xf32>
    %766 = arith.mulf %764, %765 : vector<2x256xf32>
    %767 = vector.broadcast %10 : vector<1x256xf32> to vector<2x256xf32>
    %768 = arith.addf %766, %767 : vector<2x256xf32>
    %cst_70 = arith.constant 5.000000e-01 : f32
    %769 = vector.broadcast %cst_70 : f32 to vector<2x256xf32>
    %770 = arith.mulf %769, %768 : vector<2x256xf32>
    %cst_71 = arith.constant 0.707106769 : f32
    %771 = vector.broadcast %cst_71 : f32 to vector<2x256xf32>
    %772 = arith.mulf %768, %771 : vector<2x256xf32>
    %773 = math.absf %772 : vector<2x256xf32>
    %cst_72 = arith.constant 0.327591091 : f32
    %774 = vector.broadcast %cst_72 : f32 to vector<2x256xf32>
    %775 = arith.mulf %774, %773 : vector<2x256xf32>
    %cst_73 = arith.constant 1.000000e+00 : f32
    %776 = vector.broadcast %cst_73 : f32 to vector<2x256xf32>
    %777 = arith.addf %776, %775 : vector<2x256xf32>
    %cst_74 = arith.constant 1.000000e+00 : f32
    %778 = vector.broadcast %cst_74 : f32 to vector<2x256xf32>
    %779 = arith.divf %778, %777 : vector<2x256xf32>
    %cst_75 = arith.constant 1.06140542 : f32
    %780 = vector.broadcast %cst_75 : f32 to vector<2x256xf32>
    %781 = arith.mulf %780, %779 : vector<2x256xf32>
    %cst_76 = arith.constant -1.45315206 : f32
    %782 = vector.broadcast %cst_76 : f32 to vector<2x256xf32>
    %783 = arith.addf %781, %782 : vector<2x256xf32>
    %784 = arith.mulf %783, %779 : vector<2x256xf32>
    %cst_77 = arith.constant 1.42141378 : f32
    %785 = vector.broadcast %cst_77 : f32 to vector<2x256xf32>
    %786 = arith.addf %784, %785 : vector<2x256xf32>
    %787 = arith.mulf %786, %779 : vector<2x256xf32>
    %cst_78 = arith.constant -0.284496725 : f32
    %788 = vector.broadcast %cst_78 : f32 to vector<2x256xf32>
    %789 = arith.addf %787, %788 : vector<2x256xf32>
    %790 = arith.mulf %789, %779 : vector<2x256xf32>
    %cst_79 = arith.constant 0.254829586 : f32
    %791 = vector.broadcast %cst_79 : f32 to vector<2x256xf32>
    %792 = arith.addf %790, %791 : vector<2x256xf32>
    %793 = arith.mulf %792, %779 : vector<2x256xf32>
    %cst_80 = arith.constant 0.000000e+00 : f32
    %794 = vector.broadcast %cst_80 : f32 to vector<2x256xf32>
    %795 = arith.subf %794, %773 : vector<2x256xf32>
    %796 = arith.mulf %795, %773 : vector<2x256xf32>
    %797 = math.exp %796 : vector<2x256xf32>
    %798 = arith.mulf %793, %797 : vector<2x256xf32>
    %cst_81 = arith.constant 1.000000e+00 : f32
    %799 = vector.broadcast %cst_81 : f32 to vector<2x256xf32>
    %800 = arith.subf %799, %798 : vector<2x256xf32>
    %cst_82 = arith.constant 0.000000e+00 : f32
    %801 = vector.broadcast %cst_82 : f32 to vector<2x256xf32>
    %802 = arith.cmpf oge, %772, %801 : vector<2x256xf32>
    %cst_83 = arith.constant 0.000000e+00 : f32
    %803 = vector.broadcast %cst_83 : f32 to vector<2x256xf32>
    %804 = arith.subf %803, %800 : vector<2x256xf32>
    %805 = arith.select %802, %800, %804 : vector<2x256xi1>, vector<2x256xf32>
    %cst_84 = arith.constant 1.000000e+00 : f32
    %806 = vector.broadcast %cst_84 : f32 to vector<2x256xf32>
    %807 = arith.addf %806, %805 : vector<2x256xf32>
    %808 = arith.mulf %770, %807 : vector<2x256xf32>
    %cst_85 = arith.constant dense<0.000000e+00> : vector<2xf32>
    %809 = vector.multi_reduction <add>, %684, %cst_85 [1] : vector<2x256xf32> to vector<2xf32>
    %810 = vector.shape_cast %809 : vector<2xf32> to vector<2x1xf32>
    %cst_86 = arith.constant 2.560000e+02 : f32
    %811 = vector.broadcast %cst_86 : f32 to vector<2x1xf32>
    %812 = arith.divf %810, %811 : vector<2x1xf32>
    %813 = vector.broadcast %812 : vector<2x1xf32> to vector<2x256xf32>
    %814 = arith.subf %684, %813 : vector<2x256xf32>
    %815 = arith.mulf %814, %814 : vector<2x256xf32>
    %cst_87 = arith.constant dense<0.000000e+00> : vector<2xf32>
    %816 = vector.multi_reduction <add>, %815, %cst_87 [1] : vector<2x256xf32> to vector<2xf32>
    %817 = vector.shape_cast %816 : vector<2xf32> to vector<2x1xf32>
    %cst_88 = arith.constant 2.560000e+02 : f32
    %818 = vector.broadcast %cst_88 : f32 to vector<2x1xf32>
    %819 = arith.divf %817, %818 : vector<2x1xf32>
    %cst_89 = arith.constant 9.99999974E-6 : f32
    %820 = vector.broadcast %cst_89 : f32 to vector<2x1xf32>
    %821 = arith.addf %819, %820 : vector<2x1xf32>
    %822 = math.rsqrt %821 : vector<2x1xf32>
    %823 = vector.broadcast %822 : vector<2x1xf32> to vector<2x256xf32>
    %824 = arith.mulf %814, %823 : vector<2x256xf32>
    %825 = vector.broadcast %9 : vector<1x256xf32> to vector<2x256xf32>
    %826 = arith.mulf %824, %825 : vector<2x256xf32>
    %827 = vector.broadcast %10 : vector<1x256xf32> to vector<2x256xf32>
    %828 = arith.addf %826, %827 : vector<2x256xf32>
    %cst_90 = arith.constant 5.000000e-01 : f32
    %829 = vector.broadcast %cst_90 : f32 to vector<2x256xf32>
    %830 = arith.mulf %829, %828 : vector<2x256xf32>
    %cst_91 = arith.constant 0.707106769 : f32
    %831 = vector.broadcast %cst_91 : f32 to vector<2x256xf32>
    %832 = arith.mulf %828, %831 : vector<2x256xf32>
    %833 = math.absf %832 : vector<2x256xf32>
    %cst_92 = arith.constant 0.327591091 : f32
    %834 = vector.broadcast %cst_92 : f32 to vector<2x256xf32>
    %835 = arith.mulf %834, %833 : vector<2x256xf32>
    %cst_93 = arith.constant 1.000000e+00 : f32
    %836 = vector.broadcast %cst_93 : f32 to vector<2x256xf32>
    %837 = arith.addf %836, %835 : vector<2x256xf32>
    %cst_94 = arith.constant 1.000000e+00 : f32
    %838 = vector.broadcast %cst_94 : f32 to vector<2x256xf32>
    %839 = arith.divf %838, %837 : vector<2x256xf32>
    %cst_95 = arith.constant 1.06140542 : f32
    %840 = vector.broadcast %cst_95 : f32 to vector<2x256xf32>
    %841 = arith.mulf %840, %839 : vector<2x256xf32>
    %cst_96 = arith.constant -1.45315206 : f32
    %842 = vector.broadcast %cst_96 : f32 to vector<2x256xf32>
    %843 = arith.addf %841, %842 : vector<2x256xf32>
    %844 = arith.mulf %843, %839 : vector<2x256xf32>
    %cst_97 = arith.constant 1.42141378 : f32
    %845 = vector.broadcast %cst_97 : f32 to vector<2x256xf32>
    %846 = arith.addf %844, %845 : vector<2x256xf32>
    %847 = arith.mulf %846, %839 : vector<2x256xf32>
    %cst_98 = arith.constant -0.284496725 : f32
    %848 = vector.broadcast %cst_98 : f32 to vector<2x256xf32>
    %849 = arith.addf %847, %848 : vector<2x256xf32>
    %850 = arith.mulf %849, %839 : vector<2x256xf32>
    %cst_99 = arith.constant 0.254829586 : f32
    %851 = vector.broadcast %cst_99 : f32 to vector<2x256xf32>
    %852 = arith.addf %850, %851 : vector<2x256xf32>
    %853 = arith.mulf %852, %839 : vector<2x256xf32>
    %cst_100 = arith.constant 0.000000e+00 : f32
    %854 = vector.broadcast %cst_100 : f32 to vector<2x256xf32>
    %855 = arith.subf %854, %833 : vector<2x256xf32>
    %856 = arith.mulf %855, %833 : vector<2x256xf32>
    %857 = math.exp %856 : vector<2x256xf32>
    %858 = arith.mulf %853, %857 : vector<2x256xf32>
    %cst_101 = arith.constant 1.000000e+00 : f32
    %859 = vector.broadcast %cst_101 : f32 to vector<2x256xf32>
    %860 = arith.subf %859, %858 : vector<2x256xf32>
    %cst_102 = arith.constant 0.000000e+00 : f32
    %861 = vector.broadcast %cst_102 : f32 to vector<2x256xf32>
    %862 = arith.cmpf oge, %832, %861 : vector<2x256xf32>
    %cst_103 = arith.constant 0.000000e+00 : f32
    %863 = vector.broadcast %cst_103 : f32 to vector<2x256xf32>
    %864 = arith.subf %863, %860 : vector<2x256xf32>
    %865 = arith.select %862, %860, %864 : vector<2x256xi1>, vector<2x256xf32>
    %cst_104 = arith.constant 1.000000e+00 : f32
    %866 = vector.broadcast %cst_104 : f32 to vector<2x256xf32>
    %867 = arith.addf %866, %865 : vector<2x256xf32>
    %868 = arith.mulf %830, %867 : vector<2x256xf32>
    %cst_105 = arith.constant dense<0.000000e+00> : vector<2xf32>
    %869 = vector.multi_reduction <add>, %688, %cst_105 [1] : vector<2x256xf32> to vector<2xf32>
    %870 = vector.shape_cast %869 : vector<2xf32> to vector<2x1xf32>
    %cst_106 = arith.constant 2.560000e+02 : f32
    %871 = vector.broadcast %cst_106 : f32 to vector<2x1xf32>
    %872 = arith.divf %870, %871 : vector<2x1xf32>
    %873 = vector.broadcast %872 : vector<2x1xf32> to vector<2x256xf32>
    %874 = arith.subf %688, %873 : vector<2x256xf32>
    %875 = arith.mulf %874, %874 : vector<2x256xf32>
    %cst_107 = arith.constant dense<0.000000e+00> : vector<2xf32>
    %876 = vector.multi_reduction <add>, %875, %cst_107 [1] : vector<2x256xf32> to vector<2xf32>
    %877 = vector.shape_cast %876 : vector<2xf32> to vector<2x1xf32>
    %cst_108 = arith.constant 2.560000e+02 : f32
    %878 = vector.broadcast %cst_108 : f32 to vector<2x1xf32>
    %879 = arith.divf %877, %878 : vector<2x1xf32>
    %cst_109 = arith.constant 9.99999974E-6 : f32
    %880 = vector.broadcast %cst_109 : f32 to vector<2x1xf32>
    %881 = arith.addf %879, %880 : vector<2x1xf32>
    %882 = math.rsqrt %881 : vector<2x1xf32>
    %883 = vector.broadcast %882 : vector<2x1xf32> to vector<2x256xf32>
    %884 = arith.mulf %874, %883 : vector<2x256xf32>
    %885 = vector.broadcast %9 : vector<1x256xf32> to vector<2x256xf32>
    %886 = arith.mulf %884, %885 : vector<2x256xf32>
    %887 = vector.broadcast %10 : vector<1x256xf32> to vector<2x256xf32>
    %888 = arith.addf %886, %887 : vector<2x256xf32>
    %cst_110 = arith.constant 5.000000e-01 : f32
    %889 = vector.broadcast %cst_110 : f32 to vector<2x256xf32>
    %890 = arith.mulf %889, %888 : vector<2x256xf32>
    %cst_111 = arith.constant 0.707106769 : f32
    %891 = vector.broadcast %cst_111 : f32 to vector<2x256xf32>
    %892 = arith.mulf %888, %891 : vector<2x256xf32>
    %893 = math.absf %892 : vector<2x256xf32>
    %cst_112 = arith.constant 0.327591091 : f32
    %894 = vector.broadcast %cst_112 : f32 to vector<2x256xf32>
    %895 = arith.mulf %894, %893 : vector<2x256xf32>
    %cst_113 = arith.constant 1.000000e+00 : f32
    %896 = vector.broadcast %cst_113 : f32 to vector<2x256xf32>
    %897 = arith.addf %896, %895 : vector<2x256xf32>
    %cst_114 = arith.constant 1.000000e+00 : f32
    %898 = vector.broadcast %cst_114 : f32 to vector<2x256xf32>
    %899 = arith.divf %898, %897 : vector<2x256xf32>
    %cst_115 = arith.constant 1.06140542 : f32
    %900 = vector.broadcast %cst_115 : f32 to vector<2x256xf32>
    %901 = arith.mulf %900, %899 : vector<2x256xf32>
    %cst_116 = arith.constant -1.45315206 : f32
    %902 = vector.broadcast %cst_116 : f32 to vector<2x256xf32>
    %903 = arith.addf %901, %902 : vector<2x256xf32>
    %904 = arith.mulf %903, %899 : vector<2x256xf32>
    %cst_117 = arith.constant 1.42141378 : f32
    %905 = vector.broadcast %cst_117 : f32 to vector<2x256xf32>
    %906 = arith.addf %904, %905 : vector<2x256xf32>
    %907 = arith.mulf %906, %899 : vector<2x256xf32>
    %cst_118 = arith.constant -0.284496725 : f32
    %908 = vector.broadcast %cst_118 : f32 to vector<2x256xf32>
    %909 = arith.addf %907, %908 : vector<2x256xf32>
    %910 = arith.mulf %909, %899 : vector<2x256xf32>
    %cst_119 = arith.constant 0.254829586 : f32
    %911 = vector.broadcast %cst_119 : f32 to vector<2x256xf32>
    %912 = arith.addf %910, %911 : vector<2x256xf32>
    %913 = arith.mulf %912, %899 : vector<2x256xf32>
    %cst_120 = arith.constant 0.000000e+00 : f32
    %914 = vector.broadcast %cst_120 : f32 to vector<2x256xf32>
    %915 = arith.subf %914, %893 : vector<2x256xf32>
    %916 = arith.mulf %915, %893 : vector<2x256xf32>
    %917 = math.exp %916 : vector<2x256xf32>
    %918 = arith.mulf %913, %917 : vector<2x256xf32>
    %cst_121 = arith.constant 1.000000e+00 : f32
    %919 = vector.broadcast %cst_121 : f32 to vector<2x256xf32>
    %920 = arith.subf %919, %918 : vector<2x256xf32>
    %cst_122 = arith.constant 0.000000e+00 : f32
    %921 = vector.broadcast %cst_122 : f32 to vector<2x256xf32>
    %922 = arith.cmpf oge, %892, %921 : vector<2x256xf32>
    %cst_123 = arith.constant 0.000000e+00 : f32
    %923 = vector.broadcast %cst_123 : f32 to vector<2x256xf32>
    %924 = arith.subf %923, %920 : vector<2x256xf32>
    %925 = arith.select %922, %920, %924 : vector<2x256xi1>, vector<2x256xf32>
    %cst_124 = arith.constant 1.000000e+00 : f32
    %926 = vector.broadcast %cst_124 : f32 to vector<2x256xf32>
    %927 = arith.addf %926, %925 : vector<2x256xf32>
    %928 = arith.mulf %890, %927 : vector<2x256xf32>
    %c17_i32_125 = arith.constant 17 : i32
    %929 = tpu.dynamic_rotate %748 by %c17_i32_125 dim 1 : vector<2x256xf32>, i32 -> vector<2x256xf32>
    %930 = vector.broadcast %1 : vector<1x256xf32> to vector<2x256xf32>
    %931 = arith.mulf %929, %930 : vector<2x256xf32>
    %c0_126 = arith.constant 0 : index
    %932 = memref.load %arg6[%c0_126] : memref<144xf32, #tpu.memory_space<smem>>
    %933 = vector.broadcast %932 : f32 to vector<2x256xf32>
    %934 = arith.mulf %933, %931 : vector<2x256xf32>
    %c36_127 = arith.constant 36 : index
    %935 = memref.load %arg6[%c36_127] : memref<144xf32, #tpu.memory_space<smem>>
    %936 = vector.broadcast %935 : f32 to vector<2x256xf32>
    %937 = arith.mulf %936, %931 : vector<2x256xf32>
    %c72_128 = arith.constant 72 : index
    %938 = memref.load %arg6[%c72_128] : memref<144xf32, #tpu.memory_space<smem>>
    %939 = vector.broadcast %938 : f32 to vector<2x256xf32>
    %940 = arith.mulf %939, %931 : vector<2x256xf32>
    %c108_129 = arith.constant 108 : index
    %941 = memref.load %arg6[%c108_129] : memref<144xf32, #tpu.memory_space<smem>>
    %942 = vector.broadcast %941 : f32 to vector<2x256xf32>
    %943 = arith.mulf %942, %931 : vector<2x256xf32>
    %c17_i32_130 = arith.constant 17 : i32
    %944 = tpu.dynamic_rotate %808 by %c17_i32_130 dim 1 : vector<2x256xf32>, i32 -> vector<2x256xf32>
    %945 = vector.broadcast %1 : vector<1x256xf32> to vector<2x256xf32>
    %946 = arith.mulf %944, %945 : vector<2x256xf32>
    %c9_131 = arith.constant 9 : index
    %947 = memref.load %arg6[%c9_131] : memref<144xf32, #tpu.memory_space<smem>>
    %948 = vector.broadcast %947 : f32 to vector<2x256xf32>
    %949 = arith.mulf %948, %946 : vector<2x256xf32>
    %950 = arith.addf %934, %949 : vector<2x256xf32>
    %c45_132 = arith.constant 45 : index
    %951 = memref.load %arg6[%c45_132] : memref<144xf32, #tpu.memory_space<smem>>
    %952 = vector.broadcast %951 : f32 to vector<2x256xf32>
    %953 = arith.mulf %952, %946 : vector<2x256xf32>
    %954 = arith.addf %937, %953 : vector<2x256xf32>
    %c81_133 = arith.constant 81 : index
    %955 = memref.load %arg6[%c81_133] : memref<144xf32, #tpu.memory_space<smem>>
    %956 = vector.broadcast %955 : f32 to vector<2x256xf32>
    %957 = arith.mulf %956, %946 : vector<2x256xf32>
    %958 = arith.addf %940, %957 : vector<2x256xf32>
    %c117_134 = arith.constant 117 : index
    %959 = memref.load %arg6[%c117_134] : memref<144xf32, #tpu.memory_space<smem>>
    %960 = vector.broadcast %959 : f32 to vector<2x256xf32>
    %961 = arith.mulf %960, %946 : vector<2x256xf32>
    %962 = arith.addf %943, %961 : vector<2x256xf32>
    %c17_i32_135 = arith.constant 17 : i32
    %963 = tpu.dynamic_rotate %868 by %c17_i32_135 dim 1 : vector<2x256xf32>, i32 -> vector<2x256xf32>
    %964 = vector.broadcast %1 : vector<1x256xf32> to vector<2x256xf32>
    %965 = arith.mulf %963, %964 : vector<2x256xf32>
    %c18_136 = arith.constant 18 : index
    %966 = memref.load %arg6[%c18_136] : memref<144xf32, #tpu.memory_space<smem>>
    %967 = vector.broadcast %966 : f32 to vector<2x256xf32>
    %968 = arith.mulf %967, %965 : vector<2x256xf32>
    %969 = arith.addf %950, %968 : vector<2x256xf32>
    %c54_137 = arith.constant 54 : index
    %970 = memref.load %arg6[%c54_137] : memref<144xf32, #tpu.memory_space<smem>>
    %971 = vector.broadcast %970 : f32 to vector<2x256xf32>
    %972 = arith.mulf %971, %965 : vector<2x256xf32>
    %973 = arith.addf %954, %972 : vector<2x256xf32>
    %c90_138 = arith.constant 90 : index
    %974 = memref.load %arg6[%c90_138] : memref<144xf32, #tpu.memory_space<smem>>
    %975 = vector.broadcast %974 : f32 to vector<2x256xf32>
    %976 = arith.mulf %975, %965 : vector<2x256xf32>
    %977 = arith.addf %958, %976 : vector<2x256xf32>
    %c126_139 = arith.constant 126 : index
    %978 = memref.load %arg6[%c126_139] : memref<144xf32, #tpu.memory_space<smem>>
    %979 = vector.broadcast %978 : f32 to vector<2x256xf32>
    %980 = arith.mulf %979, %965 : vector<2x256xf32>
    %981 = arith.addf %962, %980 : vector<2x256xf32>
    %c17_i32_140 = arith.constant 17 : i32
    %982 = tpu.dynamic_rotate %928 by %c17_i32_140 dim 1 : vector<2x256xf32>, i32 -> vector<2x256xf32>
    %983 = vector.broadcast %1 : vector<1x256xf32> to vector<2x256xf32>
    %984 = arith.mulf %982, %983 : vector<2x256xf32>
    %c27_141 = arith.constant 27 : index
    %985 = memref.load %arg6[%c27_141] : memref<144xf32, #tpu.memory_space<smem>>
    %986 = vector.broadcast %985 : f32 to vector<2x256xf32>
    %987 = arith.mulf %986, %984 : vector<2x256xf32>
    %988 = arith.addf %969, %987 : vector<2x256xf32>
    %c63_142 = arith.constant 63 : index
    %989 = memref.load %arg6[%c63_142] : memref<144xf32, #tpu.memory_space<smem>>
    %990 = vector.broadcast %989 : f32 to vector<2x256xf32>
    %991 = arith.mulf %990, %984 : vector<2x256xf32>
    %992 = arith.addf %973, %991 : vector<2x256xf32>
    %c99_143 = arith.constant 99 : index
    %993 = memref.load %arg6[%c99_143] : memref<144xf32, #tpu.memory_space<smem>>
    %994 = vector.broadcast %993 : f32 to vector<2x256xf32>
    %995 = arith.mulf %994, %984 : vector<2x256xf32>
    %996 = arith.addf %977, %995 : vector<2x256xf32>
    %c135_144 = arith.constant 135 : index
    %997 = memref.load %arg6[%c135_144] : memref<144xf32, #tpu.memory_space<smem>>
    %998 = vector.broadcast %997 : f32 to vector<2x256xf32>
    %999 = arith.mulf %998, %984 : vector<2x256xf32>
    %1000 = arith.addf %981, %999 : vector<2x256xf32>
    %c16_i32_145 = arith.constant 16 : i32
    %1001 = tpu.dynamic_rotate %748 by %c16_i32_145 dim 1 : vector<2x256xf32>, i32 -> vector<2x256xf32>
    %1002 = vector.broadcast %2 : vector<1x256xf32> to vector<2x256xf32>
    %1003 = arith.mulf %1001, %1002 : vector<2x256xf32>
    %c1_146 = arith.constant 1 : index
    %1004 = memref.load %arg6[%c1_146] : memref<144xf32, #tpu.memory_space<smem>>
    %1005 = vector.broadcast %1004 : f32 to vector<2x256xf32>
    %1006 = arith.mulf %1005, %1003 : vector<2x256xf32>
    %1007 = arith.addf %988, %1006 : vector<2x256xf32>
    %c37_147 = arith.constant 37 : index
    %1008 = memref.load %arg6[%c37_147] : memref<144xf32, #tpu.memory_space<smem>>
    %1009 = vector.broadcast %1008 : f32 to vector<2x256xf32>
    %1010 = arith.mulf %1009, %1003 : vector<2x256xf32>
    %1011 = arith.addf %992, %1010 : vector<2x256xf32>
    %c73_148 = arith.constant 73 : index
    %1012 = memref.load %arg6[%c73_148] : memref<144xf32, #tpu.memory_space<smem>>
    %1013 = vector.broadcast %1012 : f32 to vector<2x256xf32>
    %1014 = arith.mulf %1013, %1003 : vector<2x256xf32>
    %1015 = arith.addf %996, %1014 : vector<2x256xf32>
    %c109_149 = arith.constant 109 : index
    %1016 = memref.load %arg6[%c109_149] : memref<144xf32, #tpu.memory_space<smem>>
    %1017 = vector.broadcast %1016 : f32 to vector<2x256xf32>
    %1018 = arith.mulf %1017, %1003 : vector<2x256xf32>
    %1019 = arith.addf %1000, %1018 : vector<2x256xf32>
    %c16_i32_150 = arith.constant 16 : i32
    %1020 = tpu.dynamic_rotate %808 by %c16_i32_150 dim 1 : vector<2x256xf32>, i32 -> vector<2x256xf32>
    %1021 = vector.broadcast %2 : vector<1x256xf32> to vector<2x256xf32>
    %1022 = arith.mulf %1020, %1021 : vector<2x256xf32>
    %c10_151 = arith.constant 10 : index
    %1023 = memref.load %arg6[%c10_151] : memref<144xf32, #tpu.memory_space<smem>>
    %1024 = vector.broadcast %1023 : f32 to vector<2x256xf32>
    %1025 = arith.mulf %1024, %1022 : vector<2x256xf32>
    %1026 = arith.addf %1007, %1025 : vector<2x256xf32>
    %c46_152 = arith.constant 46 : index
    %1027 = memref.load %arg6[%c46_152] : memref<144xf32, #tpu.memory_space<smem>>
    %1028 = vector.broadcast %1027 : f32 to vector<2x256xf32>
    %1029 = arith.mulf %1028, %1022 : vector<2x256xf32>
    %1030 = arith.addf %1011, %1029 : vector<2x256xf32>
    %c82_153 = arith.constant 82 : index
    %1031 = memref.load %arg6[%c82_153] : memref<144xf32, #tpu.memory_space<smem>>
    %1032 = vector.broadcast %1031 : f32 to vector<2x256xf32>
    %1033 = arith.mulf %1032, %1022 : vector<2x256xf32>
    %1034 = arith.addf %1015, %1033 : vector<2x256xf32>
    %c118_154 = arith.constant 118 : index
    %1035 = memref.load %arg6[%c118_154] : memref<144xf32, #tpu.memory_space<smem>>
    %1036 = vector.broadcast %1035 : f32 to vector<2x256xf32>
    %1037 = arith.mulf %1036, %1022 : vector<2x256xf32>
    %1038 = arith.addf %1019, %1037 : vector<2x256xf32>
    %c16_i32_155 = arith.constant 16 : i32
    %1039 = tpu.dynamic_rotate %868 by %c16_i32_155 dim 1 : vector<2x256xf32>, i32 -> vector<2x256xf32>
    %1040 = vector.broadcast %2 : vector<1x256xf32> to vector<2x256xf32>
    %1041 = arith.mulf %1039, %1040 : vector<2x256xf32>
    %c19_156 = arith.constant 19 : index
    %1042 = memref.load %arg6[%c19_156] : memref<144xf32, #tpu.memory_space<smem>>
    %1043 = vector.broadcast %1042 : f32 to vector<2x256xf32>
    %1044 = arith.mulf %1043, %1041 : vector<2x256xf32>
    %1045 = arith.addf %1026, %1044 : vector<2x256xf32>
    %c55_157 = arith.constant 55 : index
    %1046 = memref.load %arg6[%c55_157] : memref<144xf32, #tpu.memory_space<smem>>
    %1047 = vector.broadcast %1046 : f32 to vector<2x256xf32>
    %1048 = arith.mulf %1047, %1041 : vector<2x256xf32>
    %1049 = arith.addf %1030, %1048 : vector<2x256xf32>
    %c91_158 = arith.constant 91 : index
    %1050 = memref.load %arg6[%c91_158] : memref<144xf32, #tpu.memory_space<smem>>
    %1051 = vector.broadcast %1050 : f32 to vector<2x256xf32>
    %1052 = arith.mulf %1051, %1041 : vector<2x256xf32>
    %1053 = arith.addf %1034, %1052 : vector<2x256xf32>
    %c127_159 = arith.constant 127 : index
    %1054 = memref.load %arg6[%c127_159] : memref<144xf32, #tpu.memory_space<smem>>
    %1055 = vector.broadcast %1054 : f32 to vector<2x256xf32>
    %1056 = arith.mulf %1055, %1041 : vector<2x256xf32>
    %1057 = arith.addf %1038, %1056 : vector<2x256xf32>
    %c16_i32_160 = arith.constant 16 : i32
    %1058 = tpu.dynamic_rotate %928 by %c16_i32_160 dim 1 : vector<2x256xf32>, i32 -> vector<2x256xf32>
    %1059 = vector.broadcast %2 : vector<1x256xf32> to vector<2x256xf32>
    %1060 = arith.mulf %1058, %1059 : vector<2x256xf32>
    %c28_161 = arith.constant 28 : index
    %1061 = memref.load %arg6[%c28_161] : memref<144xf32, #tpu.memory_space<smem>>
    %1062 = vector.broadcast %1061 : f32 to vector<2x256xf32>
    %1063 = arith.mulf %1062, %1060 : vector<2x256xf32>
    %1064 = arith.addf %1045, %1063 : vector<2x256xf32>
    %c64_162 = arith.constant 64 : index
    %1065 = memref.load %arg6[%c64_162] : memref<144xf32, #tpu.memory_space<smem>>
    %1066 = vector.broadcast %1065 : f32 to vector<2x256xf32>
    %1067 = arith.mulf %1066, %1060 : vector<2x256xf32>
    %1068 = arith.addf %1049, %1067 : vector<2x256xf32>
    %c100_163 = arith.constant 100 : index
    %1069 = memref.load %arg6[%c100_163] : memref<144xf32, #tpu.memory_space<smem>>
    %1070 = vector.broadcast %1069 : f32 to vector<2x256xf32>
    %1071 = arith.mulf %1070, %1060 : vector<2x256xf32>
    %1072 = arith.addf %1053, %1071 : vector<2x256xf32>
    %c136_164 = arith.constant 136 : index
    %1073 = memref.load %arg6[%c136_164] : memref<144xf32, #tpu.memory_space<smem>>
    %1074 = vector.broadcast %1073 : f32 to vector<2x256xf32>
    %1075 = arith.mulf %1074, %1060 : vector<2x256xf32>
    %1076 = arith.addf %1057, %1075 : vector<2x256xf32>
    %c15_i32_165 = arith.constant 15 : i32
    %1077 = tpu.dynamic_rotate %748 by %c15_i32_165 dim 1 : vector<2x256xf32>, i32 -> vector<2x256xf32>
    %1078 = vector.broadcast %3 : vector<1x256xf32> to vector<2x256xf32>
    %1079 = arith.mulf %1077, %1078 : vector<2x256xf32>
    %c2_166 = arith.constant 2 : index
    %1080 = memref.load %arg6[%c2_166] : memref<144xf32, #tpu.memory_space<smem>>
    %1081 = vector.broadcast %1080 : f32 to vector<2x256xf32>
    %1082 = arith.mulf %1081, %1079 : vector<2x256xf32>
    %1083 = arith.addf %1064, %1082 : vector<2x256xf32>
    %c38_167 = arith.constant 38 : index
    %1084 = memref.load %arg6[%c38_167] : memref<144xf32, #tpu.memory_space<smem>>
    %1085 = vector.broadcast %1084 : f32 to vector<2x256xf32>
    %1086 = arith.mulf %1085, %1079 : vector<2x256xf32>
    %1087 = arith.addf %1068, %1086 : vector<2x256xf32>
    %c74_168 = arith.constant 74 : index
    %1088 = memref.load %arg6[%c74_168] : memref<144xf32, #tpu.memory_space<smem>>
    %1089 = vector.broadcast %1088 : f32 to vector<2x256xf32>
    %1090 = arith.mulf %1089, %1079 : vector<2x256xf32>
    %1091 = arith.addf %1072, %1090 : vector<2x256xf32>
    %c110_169 = arith.constant 110 : index
    %1092 = memref.load %arg6[%c110_169] : memref<144xf32, #tpu.memory_space<smem>>
    %1093 = vector.broadcast %1092 : f32 to vector<2x256xf32>
    %1094 = arith.mulf %1093, %1079 : vector<2x256xf32>
    %1095 = arith.addf %1076, %1094 : vector<2x256xf32>
    %c15_i32_170 = arith.constant 15 : i32
    %1096 = tpu.dynamic_rotate %808 by %c15_i32_170 dim 1 : vector<2x256xf32>, i32 -> vector<2x256xf32>
    %1097 = vector.broadcast %3 : vector<1x256xf32> to vector<2x256xf32>
    %1098 = arith.mulf %1096, %1097 : vector<2x256xf32>
    %c11_171 = arith.constant 11 : index
    %1099 = memref.load %arg6[%c11_171] : memref<144xf32, #tpu.memory_space<smem>>
    %1100 = vector.broadcast %1099 : f32 to vector<2x256xf32>
    %1101 = arith.mulf %1100, %1098 : vector<2x256xf32>
    %1102 = arith.addf %1083, %1101 : vector<2x256xf32>
    %c47_172 = arith.constant 47 : index
    %1103 = memref.load %arg6[%c47_172] : memref<144xf32, #tpu.memory_space<smem>>
    %1104 = vector.broadcast %1103 : f32 to vector<2x256xf32>
    %1105 = arith.mulf %1104, %1098 : vector<2x256xf32>
    %1106 = arith.addf %1087, %1105 : vector<2x256xf32>
    %c83_173 = arith.constant 83 : index
    %1107 = memref.load %arg6[%c83_173] : memref<144xf32, #tpu.memory_space<smem>>
    %1108 = vector.broadcast %1107 : f32 to vector<2x256xf32>
    %1109 = arith.mulf %1108, %1098 : vector<2x256xf32>
    %1110 = arith.addf %1091, %1109 : vector<2x256xf32>
    %c119_174 = arith.constant 119 : index
    %1111 = memref.load %arg6[%c119_174] : memref<144xf32, #tpu.memory_space<smem>>
    %1112 = vector.broadcast %1111 : f32 to vector<2x256xf32>
    %1113 = arith.mulf %1112, %1098 : vector<2x256xf32>
    %1114 = arith.addf %1095, %1113 : vector<2x256xf32>
    %c15_i32_175 = arith.constant 15 : i32
    %1115 = tpu.dynamic_rotate %868 by %c15_i32_175 dim 1 : vector<2x256xf32>, i32 -> vector<2x256xf32>
    %1116 = vector.broadcast %3 : vector<1x256xf32> to vector<2x256xf32>
    %1117 = arith.mulf %1115, %1116 : vector<2x256xf32>
    %c20_176 = arith.constant 20 : index
    %1118 = memref.load %arg6[%c20_176] : memref<144xf32, #tpu.memory_space<smem>>
    %1119 = vector.broadcast %1118 : f32 to vector<2x256xf32>
    %1120 = arith.mulf %1119, %1117 : vector<2x256xf32>
    %1121 = arith.addf %1102, %1120 : vector<2x256xf32>
    %c56_177 = arith.constant 56 : index
    %1122 = memref.load %arg6[%c56_177] : memref<144xf32, #tpu.memory_space<smem>>
    %1123 = vector.broadcast %1122 : f32 to vector<2x256xf32>
    %1124 = arith.mulf %1123, %1117 : vector<2x256xf32>
    %1125 = arith.addf %1106, %1124 : vector<2x256xf32>
    %c92_178 = arith.constant 92 : index
    %1126 = memref.load %arg6[%c92_178] : memref<144xf32, #tpu.memory_space<smem>>
    %1127 = vector.broadcast %1126 : f32 to vector<2x256xf32>
    %1128 = arith.mulf %1127, %1117 : vector<2x256xf32>
    %1129 = arith.addf %1110, %1128 : vector<2x256xf32>
    %c128_179 = arith.constant 128 : index
    %1130 = memref.load %arg6[%c128_179] : memref<144xf32, #tpu.memory_space<smem>>
    %1131 = vector.broadcast %1130 : f32 to vector<2x256xf32>
    %1132 = arith.mulf %1131, %1117 : vector<2x256xf32>
    %1133 = arith.addf %1114, %1132 : vector<2x256xf32>
    %c15_i32_180 = arith.constant 15 : i32
    %1134 = tpu.dynamic_rotate %928 by %c15_i32_180 dim 1 : vector<2x256xf32>, i32 -> vector<2x256xf32>
    %1135 = vector.broadcast %3 : vector<1x256xf32> to vector<2x256xf32>
    %1136 = arith.mulf %1134, %1135 : vector<2x256xf32>
    %c29_181 = arith.constant 29 : index
    %1137 = memref.load %arg6[%c29_181] : memref<144xf32, #tpu.memory_space<smem>>
    %1138 = vector.broadcast %1137 : f32 to vector<2x256xf32>
    %1139 = arith.mulf %1138, %1136 : vector<2x256xf32>
    %1140 = arith.addf %1121, %1139 : vector<2x256xf32>
    %c65_182 = arith.constant 65 : index
    %1141 = memref.load %arg6[%c65_182] : memref<144xf32, #tpu.memory_space<smem>>
    %1142 = vector.broadcast %1141 : f32 to vector<2x256xf32>
    %1143 = arith.mulf %1142, %1136 : vector<2x256xf32>
    %1144 = arith.addf %1125, %1143 : vector<2x256xf32>
    %c101_183 = arith.constant 101 : index
    %1145 = memref.load %arg6[%c101_183] : memref<144xf32, #tpu.memory_space<smem>>
    %1146 = vector.broadcast %1145 : f32 to vector<2x256xf32>
    %1147 = arith.mulf %1146, %1136 : vector<2x256xf32>
    %1148 = arith.addf %1129, %1147 : vector<2x256xf32>
    %c137_184 = arith.constant 137 : index
    %1149 = memref.load %arg6[%c137_184] : memref<144xf32, #tpu.memory_space<smem>>
    %1150 = vector.broadcast %1149 : f32 to vector<2x256xf32>
    %1151 = arith.mulf %1150, %1136 : vector<2x256xf32>
    %1152 = arith.addf %1133, %1151 : vector<2x256xf32>
    %c1_i32_185 = arith.constant 1 : i32
    %1153 = tpu.dynamic_rotate %748 by %c1_i32_185 dim 1 : vector<2x256xf32>, i32 -> vector<2x256xf32>
    %1154 = vector.broadcast %4 : vector<1x256xf32> to vector<2x256xf32>
    %1155 = arith.mulf %1153, %1154 : vector<2x256xf32>
    %c3_186 = arith.constant 3 : index
    %1156 = memref.load %arg6[%c3_186] : memref<144xf32, #tpu.memory_space<smem>>
    %1157 = vector.broadcast %1156 : f32 to vector<2x256xf32>
    %1158 = arith.mulf %1157, %1155 : vector<2x256xf32>
    %1159 = arith.addf %1140, %1158 : vector<2x256xf32>
    %c39_187 = arith.constant 39 : index
    %1160 = memref.load %arg6[%c39_187] : memref<144xf32, #tpu.memory_space<smem>>
    %1161 = vector.broadcast %1160 : f32 to vector<2x256xf32>
    %1162 = arith.mulf %1161, %1155 : vector<2x256xf32>
    %1163 = arith.addf %1144, %1162 : vector<2x256xf32>
    %c75_188 = arith.constant 75 : index
    %1164 = memref.load %arg6[%c75_188] : memref<144xf32, #tpu.memory_space<smem>>
    %1165 = vector.broadcast %1164 : f32 to vector<2x256xf32>
    %1166 = arith.mulf %1165, %1155 : vector<2x256xf32>
    %1167 = arith.addf %1148, %1166 : vector<2x256xf32>
    %c111_189 = arith.constant 111 : index
    %1168 = memref.load %arg6[%c111_189] : memref<144xf32, #tpu.memory_space<smem>>
    %1169 = vector.broadcast %1168 : f32 to vector<2x256xf32>
    %1170 = arith.mulf %1169, %1155 : vector<2x256xf32>
    %1171 = arith.addf %1152, %1170 : vector<2x256xf32>
    %c1_i32_190 = arith.constant 1 : i32
    %1172 = tpu.dynamic_rotate %808 by %c1_i32_190 dim 1 : vector<2x256xf32>, i32 -> vector<2x256xf32>
    %1173 = vector.broadcast %4 : vector<1x256xf32> to vector<2x256xf32>
    %1174 = arith.mulf %1172, %1173 : vector<2x256xf32>
    %c12_191 = arith.constant 12 : index
    %1175 = memref.load %arg6[%c12_191] : memref<144xf32, #tpu.memory_space<smem>>
    %1176 = vector.broadcast %1175 : f32 to vector<2x256xf32>
    %1177 = arith.mulf %1176, %1174 : vector<2x256xf32>
    %1178 = arith.addf %1159, %1177 : vector<2x256xf32>
    %c48_192 = arith.constant 48 : index
    %1179 = memref.load %arg6[%c48_192] : memref<144xf32, #tpu.memory_space<smem>>
    %1180 = vector.broadcast %1179 : f32 to vector<2x256xf32>
    %1181 = arith.mulf %1180, %1174 : vector<2x256xf32>
    %1182 = arith.addf %1163, %1181 : vector<2x256xf32>
    %c84_193 = arith.constant 84 : index
    %1183 = memref.load %arg6[%c84_193] : memref<144xf32, #tpu.memory_space<smem>>
    %1184 = vector.broadcast %1183 : f32 to vector<2x256xf32>
    %1185 = arith.mulf %1184, %1174 : vector<2x256xf32>
    %1186 = arith.addf %1167, %1185 : vector<2x256xf32>
    %c120_194 = arith.constant 120 : index
    %1187 = memref.load %arg6[%c120_194] : memref<144xf32, #tpu.memory_space<smem>>
    %1188 = vector.broadcast %1187 : f32 to vector<2x256xf32>
    %1189 = arith.mulf %1188, %1174 : vector<2x256xf32>
    %1190 = arith.addf %1171, %1189 : vector<2x256xf32>
    %c1_i32_195 = arith.constant 1 : i32
    %1191 = tpu.dynamic_rotate %868 by %c1_i32_195 dim 1 : vector<2x256xf32>, i32 -> vector<2x256xf32>
    %1192 = vector.broadcast %4 : vector<1x256xf32> to vector<2x256xf32>
    %1193 = arith.mulf %1191, %1192 : vector<2x256xf32>
    %c21_196 = arith.constant 21 : index
    %1194 = memref.load %arg6[%c21_196] : memref<144xf32, #tpu.memory_space<smem>>
    %1195 = vector.broadcast %1194 : f32 to vector<2x256xf32>
    %1196 = arith.mulf %1195, %1193 : vector<2x256xf32>
    %1197 = arith.addf %1178, %1196 : vector<2x256xf32>
    %c57_197 = arith.constant 57 : index
    %1198 = memref.load %arg6[%c57_197] : memref<144xf32, #tpu.memory_space<smem>>
    %1199 = vector.broadcast %1198 : f32 to vector<2x256xf32>
    %1200 = arith.mulf %1199, %1193 : vector<2x256xf32>
    %1201 = arith.addf %1182, %1200 : vector<2x256xf32>
    %c93_198 = arith.constant 93 : index
    %1202 = memref.load %arg6[%c93_198] : memref<144xf32, #tpu.memory_space<smem>>
    %1203 = vector.broadcast %1202 : f32 to vector<2x256xf32>
    %1204 = arith.mulf %1203, %1193 : vector<2x256xf32>
    %1205 = arith.addf %1186, %1204 : vector<2x256xf32>
    %c129_199 = arith.constant 129 : index
    %1206 = memref.load %arg6[%c129_199] : memref<144xf32, #tpu.memory_space<smem>>
    %1207 = vector.broadcast %1206 : f32 to vector<2x256xf32>
    %1208 = arith.mulf %1207, %1193 : vector<2x256xf32>
    %1209 = arith.addf %1190, %1208 : vector<2x256xf32>
    %c1_i32_200 = arith.constant 1 : i32
    %1210 = tpu.dynamic_rotate %928 by %c1_i32_200 dim 1 : vector<2x256xf32>, i32 -> vector<2x256xf32>
    %1211 = vector.broadcast %4 : vector<1x256xf32> to vector<2x256xf32>
    %1212 = arith.mulf %1210, %1211 : vector<2x256xf32>
    %c30_201 = arith.constant 30 : index
    %1213 = memref.load %arg6[%c30_201] : memref<144xf32, #tpu.memory_space<smem>>
    %1214 = vector.broadcast %1213 : f32 to vector<2x256xf32>
    %1215 = arith.mulf %1214, %1212 : vector<2x256xf32>
    %1216 = arith.addf %1197, %1215 : vector<2x256xf32>
    %c66_202 = arith.constant 66 : index
    %1217 = memref.load %arg6[%c66_202] : memref<144xf32, #tpu.memory_space<smem>>
    %1218 = vector.broadcast %1217 : f32 to vector<2x256xf32>
    %1219 = arith.mulf %1218, %1212 : vector<2x256xf32>
    %1220 = arith.addf %1201, %1219 : vector<2x256xf32>
    %c102_203 = arith.constant 102 : index
    %1221 = memref.load %arg6[%c102_203] : memref<144xf32, #tpu.memory_space<smem>>
    %1222 = vector.broadcast %1221 : f32 to vector<2x256xf32>
    %1223 = arith.mulf %1222, %1212 : vector<2x256xf32>
    %1224 = arith.addf %1205, %1223 : vector<2x256xf32>
    %c138_204 = arith.constant 138 : index
    %1225 = memref.load %arg6[%c138_204] : memref<144xf32, #tpu.memory_space<smem>>
    %1226 = vector.broadcast %1225 : f32 to vector<2x256xf32>
    %1227 = arith.mulf %1226, %1212 : vector<2x256xf32>
    %1228 = arith.addf %1209, %1227 : vector<2x256xf32>
    %c4_205 = arith.constant 4 : index
    %1229 = memref.load %arg6[%c4_205] : memref<144xf32, #tpu.memory_space<smem>>
    %1230 = vector.broadcast %1229 : f32 to vector<2x256xf32>
    %1231 = arith.mulf %1230, %748 : vector<2x256xf32>
    %1232 = arith.addf %1216, %1231 : vector<2x256xf32>
    %c40_206 = arith.constant 40 : index
    %1233 = memref.load %arg6[%c40_206] : memref<144xf32, #tpu.memory_space<smem>>
    %1234 = vector.broadcast %1233 : f32 to vector<2x256xf32>
    %1235 = arith.mulf %1234, %748 : vector<2x256xf32>
    %1236 = arith.addf %1220, %1235 : vector<2x256xf32>
    %c76_207 = arith.constant 76 : index
    %1237 = memref.load %arg6[%c76_207] : memref<144xf32, #tpu.memory_space<smem>>
    %1238 = vector.broadcast %1237 : f32 to vector<2x256xf32>
    %1239 = arith.mulf %1238, %748 : vector<2x256xf32>
    %1240 = arith.addf %1224, %1239 : vector<2x256xf32>
    %c112_208 = arith.constant 112 : index
    %1241 = memref.load %arg6[%c112_208] : memref<144xf32, #tpu.memory_space<smem>>
    %1242 = vector.broadcast %1241 : f32 to vector<2x256xf32>
    %1243 = arith.mulf %1242, %748 : vector<2x256xf32>
    %1244 = arith.addf %1228, %1243 : vector<2x256xf32>
    %c13_209 = arith.constant 13 : index
    %1245 = memref.load %arg6[%c13_209] : memref<144xf32, #tpu.memory_space<smem>>
    %1246 = vector.broadcast %1245 : f32 to vector<2x256xf32>
    %1247 = arith.mulf %1246, %808 : vector<2x256xf32>
    %1248 = arith.addf %1232, %1247 : vector<2x256xf32>
    %c49_210 = arith.constant 49 : index
    %1249 = memref.load %arg6[%c49_210] : memref<144xf32, #tpu.memory_space<smem>>
    %1250 = vector.broadcast %1249 : f32 to vector<2x256xf32>
    %1251 = arith.mulf %1250, %808 : vector<2x256xf32>
    %1252 = arith.addf %1236, %1251 : vector<2x256xf32>
    %c85_211 = arith.constant 85 : index
    %1253 = memref.load %arg6[%c85_211] : memref<144xf32, #tpu.memory_space<smem>>
    %1254 = vector.broadcast %1253 : f32 to vector<2x256xf32>
    %1255 = arith.mulf %1254, %808 : vector<2x256xf32>
    %1256 = arith.addf %1240, %1255 : vector<2x256xf32>
    %c121_212 = arith.constant 121 : index
    %1257 = memref.load %arg6[%c121_212] : memref<144xf32, #tpu.memory_space<smem>>
    %1258 = vector.broadcast %1257 : f32 to vector<2x256xf32>
    %1259 = arith.mulf %1258, %808 : vector<2x256xf32>
    %1260 = arith.addf %1244, %1259 : vector<2x256xf32>
    %c22_213 = arith.constant 22 : index
    %1261 = memref.load %arg6[%c22_213] : memref<144xf32, #tpu.memory_space<smem>>
    %1262 = vector.broadcast %1261 : f32 to vector<2x256xf32>
    %1263 = arith.mulf %1262, %868 : vector<2x256xf32>
    %1264 = arith.addf %1248, %1263 : vector<2x256xf32>
    %c58_214 = arith.constant 58 : index
    %1265 = memref.load %arg6[%c58_214] : memref<144xf32, #tpu.memory_space<smem>>
    %1266 = vector.broadcast %1265 : f32 to vector<2x256xf32>
    %1267 = arith.mulf %1266, %868 : vector<2x256xf32>
    %1268 = arith.addf %1252, %1267 : vector<2x256xf32>
    %c94_215 = arith.constant 94 : index
    %1269 = memref.load %arg6[%c94_215] : memref<144xf32, #tpu.memory_space<smem>>
    %1270 = vector.broadcast %1269 : f32 to vector<2x256xf32>
    %1271 = arith.mulf %1270, %868 : vector<2x256xf32>
    %1272 = arith.addf %1256, %1271 : vector<2x256xf32>
    %c130_216 = arith.constant 130 : index
    %1273 = memref.load %arg6[%c130_216] : memref<144xf32, #tpu.memory_space<smem>>
    %1274 = vector.broadcast %1273 : f32 to vector<2x256xf32>
    %1275 = arith.mulf %1274, %868 : vector<2x256xf32>
    %1276 = arith.addf %1260, %1275 : vector<2x256xf32>
    %c31_217 = arith.constant 31 : index
    %1277 = memref.load %arg6[%c31_217] : memref<144xf32, #tpu.memory_space<smem>>
    %1278 = vector.broadcast %1277 : f32 to vector<2x256xf32>
    %1279 = arith.mulf %1278, %928 : vector<2x256xf32>
    %1280 = arith.addf %1264, %1279 : vector<2x256xf32>
    %c67_218 = arith.constant 67 : index
    %1281 = memref.load %arg6[%c67_218] : memref<144xf32, #tpu.memory_space<smem>>
    %1282 = vector.broadcast %1281 : f32 to vector<2x256xf32>
    %1283 = arith.mulf %1282, %928 : vector<2x256xf32>
    %1284 = arith.addf %1268, %1283 : vector<2x256xf32>
    %c103_219 = arith.constant 103 : index
    %1285 = memref.load %arg6[%c103_219] : memref<144xf32, #tpu.memory_space<smem>>
    %1286 = vector.broadcast %1285 : f32 to vector<2x256xf32>
    %1287 = arith.mulf %1286, %928 : vector<2x256xf32>
    %1288 = arith.addf %1272, %1287 : vector<2x256xf32>
    %c139_220 = arith.constant 139 : index
    %1289 = memref.load %arg6[%c139_220] : memref<144xf32, #tpu.memory_space<smem>>
    %1290 = vector.broadcast %1289 : f32 to vector<2x256xf32>
    %1291 = arith.mulf %1290, %928 : vector<2x256xf32>
    %1292 = arith.addf %1276, %1291 : vector<2x256xf32>
    %c255_i32_221 = arith.constant 255 : i32
    %1293 = tpu.dynamic_rotate %748 by %c255_i32_221 dim 1 : vector<2x256xf32>, i32 -> vector<2x256xf32>
    %1294 = vector.broadcast %5 : vector<1x256xf32> to vector<2x256xf32>
    %1295 = arith.mulf %1293, %1294 : vector<2x256xf32>
    %c5_222 = arith.constant 5 : index
    %1296 = memref.load %arg6[%c5_222] : memref<144xf32, #tpu.memory_space<smem>>
    %1297 = vector.broadcast %1296 : f32 to vector<2x256xf32>
    %1298 = arith.mulf %1297, %1295 : vector<2x256xf32>
    %1299 = arith.addf %1280, %1298 : vector<2x256xf32>
    %c41_223 = arith.constant 41 : index
    %1300 = memref.load %arg6[%c41_223] : memref<144xf32, #tpu.memory_space<smem>>
    %1301 = vector.broadcast %1300 : f32 to vector<2x256xf32>
    %1302 = arith.mulf %1301, %1295 : vector<2x256xf32>
    %1303 = arith.addf %1284, %1302 : vector<2x256xf32>
    %c77_224 = arith.constant 77 : index
    %1304 = memref.load %arg6[%c77_224] : memref<144xf32, #tpu.memory_space<smem>>
    %1305 = vector.broadcast %1304 : f32 to vector<2x256xf32>
    %1306 = arith.mulf %1305, %1295 : vector<2x256xf32>
    %1307 = arith.addf %1288, %1306 : vector<2x256xf32>
    %c113_225 = arith.constant 113 : index
    %1308 = memref.load %arg6[%c113_225] : memref<144xf32, #tpu.memory_space<smem>>
    %1309 = vector.broadcast %1308 : f32 to vector<2x256xf32>
    %1310 = arith.mulf %1309, %1295 : vector<2x256xf32>
    %1311 = arith.addf %1292, %1310 : vector<2x256xf32>
    %c255_i32_226 = arith.constant 255 : i32
    %1312 = tpu.dynamic_rotate %808 by %c255_i32_226 dim 1 : vector<2x256xf32>, i32 -> vector<2x256xf32>
    %1313 = vector.broadcast %5 : vector<1x256xf32> to vector<2x256xf32>
    %1314 = arith.mulf %1312, %1313 : vector<2x256xf32>
    %c14_227 = arith.constant 14 : index
    %1315 = memref.load %arg6[%c14_227] : memref<144xf32, #tpu.memory_space<smem>>
    %1316 = vector.broadcast %1315 : f32 to vector<2x256xf32>
    %1317 = arith.mulf %1316, %1314 : vector<2x256xf32>
    %1318 = arith.addf %1299, %1317 : vector<2x256xf32>
    %c50_228 = arith.constant 50 : index
    %1319 = memref.load %arg6[%c50_228] : memref<144xf32, #tpu.memory_space<smem>>
    %1320 = vector.broadcast %1319 : f32 to vector<2x256xf32>
    %1321 = arith.mulf %1320, %1314 : vector<2x256xf32>
    %1322 = arith.addf %1303, %1321 : vector<2x256xf32>
    %c86_229 = arith.constant 86 : index
    %1323 = memref.load %arg6[%c86_229] : memref<144xf32, #tpu.memory_space<smem>>
    %1324 = vector.broadcast %1323 : f32 to vector<2x256xf32>
    %1325 = arith.mulf %1324, %1314 : vector<2x256xf32>
    %1326 = arith.addf %1307, %1325 : vector<2x256xf32>
    %c122_230 = arith.constant 122 : index
    %1327 = memref.load %arg6[%c122_230] : memref<144xf32, #tpu.memory_space<smem>>
    %1328 = vector.broadcast %1327 : f32 to vector<2x256xf32>
    %1329 = arith.mulf %1328, %1314 : vector<2x256xf32>
    %1330 = arith.addf %1311, %1329 : vector<2x256xf32>
    %c255_i32_231 = arith.constant 255 : i32
    %1331 = tpu.dynamic_rotate %868 by %c255_i32_231 dim 1 : vector<2x256xf32>, i32 -> vector<2x256xf32>
    %1332 = vector.broadcast %5 : vector<1x256xf32> to vector<2x256xf32>
    %1333 = arith.mulf %1331, %1332 : vector<2x256xf32>
    %c23_232 = arith.constant 23 : index
    %1334 = memref.load %arg6[%c23_232] : memref<144xf32, #tpu.memory_space<smem>>
    %1335 = vector.broadcast %1334 : f32 to vector<2x256xf32>
    %1336 = arith.mulf %1335, %1333 : vector<2x256xf32>
    %1337 = arith.addf %1318, %1336 : vector<2x256xf32>
    %c59_233 = arith.constant 59 : index
    %1338 = memref.load %arg6[%c59_233] : memref<144xf32, #tpu.memory_space<smem>>
    %1339 = vector.broadcast %1338 : f32 to vector<2x256xf32>
    %1340 = arith.mulf %1339, %1333 : vector<2x256xf32>
    %1341 = arith.addf %1322, %1340 : vector<2x256xf32>
    %c95_234 = arith.constant 95 : index
    %1342 = memref.load %arg6[%c95_234] : memref<144xf32, #tpu.memory_space<smem>>
    %1343 = vector.broadcast %1342 : f32 to vector<2x256xf32>
    %1344 = arith.mulf %1343, %1333 : vector<2x256xf32>
    %1345 = arith.addf %1326, %1344 : vector<2x256xf32>
    %c131_235 = arith.constant 131 : index
    %1346 = memref.load %arg6[%c131_235] : memref<144xf32, #tpu.memory_space<smem>>
    %1347 = vector.broadcast %1346 : f32 to vector<2x256xf32>
    %1348 = arith.mulf %1347, %1333 : vector<2x256xf32>
    %1349 = arith.addf %1330, %1348 : vector<2x256xf32>
    %c255_i32_236 = arith.constant 255 : i32
    %1350 = tpu.dynamic_rotate %928 by %c255_i32_236 dim 1 : vector<2x256xf32>, i32 -> vector<2x256xf32>
    %1351 = vector.broadcast %5 : vector<1x256xf32> to vector<2x256xf32>
    %1352 = arith.mulf %1350, %1351 : vector<2x256xf32>
    %c32_237 = arith.constant 32 : index
    %1353 = memref.load %arg6[%c32_237] : memref<144xf32, #tpu.memory_space<smem>>
    %1354 = vector.broadcast %1353 : f32 to vector<2x256xf32>
    %1355 = arith.mulf %1354, %1352 : vector<2x256xf32>
    %1356 = arith.addf %1337, %1355 : vector<2x256xf32>
    %c68_238 = arith.constant 68 : index
    %1357 = memref.load %arg6[%c68_238] : memref<144xf32, #tpu.memory_space<smem>>
    %1358 = vector.broadcast %1357 : f32 to vector<2x256xf32>
    %1359 = arith.mulf %1358, %1352 : vector<2x256xf32>
    %1360 = arith.addf %1341, %1359 : vector<2x256xf32>
    %c104_239 = arith.constant 104 : index
    %1361 = memref.load %arg6[%c104_239] : memref<144xf32, #tpu.memory_space<smem>>
    %1362 = vector.broadcast %1361 : f32 to vector<2x256xf32>
    %1363 = arith.mulf %1362, %1352 : vector<2x256xf32>
    %1364 = arith.addf %1345, %1363 : vector<2x256xf32>
    %c140_240 = arith.constant 140 : index
    %1365 = memref.load %arg6[%c140_240] : memref<144xf32, #tpu.memory_space<smem>>
    %1366 = vector.broadcast %1365 : f32 to vector<2x256xf32>
    %1367 = arith.mulf %1366, %1352 : vector<2x256xf32>
    %1368 = arith.addf %1349, %1367 : vector<2x256xf32>
    %c241_i32_241 = arith.constant 241 : i32
    %1369 = tpu.dynamic_rotate %748 by %c241_i32_241 dim 1 : vector<2x256xf32>, i32 -> vector<2x256xf32>
    %1370 = vector.broadcast %6 : vector<1x256xf32> to vector<2x256xf32>
    %1371 = arith.mulf %1369, %1370 : vector<2x256xf32>
    %c6_242 = arith.constant 6 : index
    %1372 = memref.load %arg6[%c6_242] : memref<144xf32, #tpu.memory_space<smem>>
    %1373 = vector.broadcast %1372 : f32 to vector<2x256xf32>
    %1374 = arith.mulf %1373, %1371 : vector<2x256xf32>
    %1375 = arith.addf %1356, %1374 : vector<2x256xf32>
    %c42_243 = arith.constant 42 : index
    %1376 = memref.load %arg6[%c42_243] : memref<144xf32, #tpu.memory_space<smem>>
    %1377 = vector.broadcast %1376 : f32 to vector<2x256xf32>
    %1378 = arith.mulf %1377, %1371 : vector<2x256xf32>
    %1379 = arith.addf %1360, %1378 : vector<2x256xf32>
    %c78_244 = arith.constant 78 : index
    %1380 = memref.load %arg6[%c78_244] : memref<144xf32, #tpu.memory_space<smem>>
    %1381 = vector.broadcast %1380 : f32 to vector<2x256xf32>
    %1382 = arith.mulf %1381, %1371 : vector<2x256xf32>
    %1383 = arith.addf %1364, %1382 : vector<2x256xf32>
    %c114_245 = arith.constant 114 : index
    %1384 = memref.load %arg6[%c114_245] : memref<144xf32, #tpu.memory_space<smem>>
    %1385 = vector.broadcast %1384 : f32 to vector<2x256xf32>
    %1386 = arith.mulf %1385, %1371 : vector<2x256xf32>
    %1387 = arith.addf %1368, %1386 : vector<2x256xf32>
    %c241_i32_246 = arith.constant 241 : i32
    %1388 = tpu.dynamic_rotate %808 by %c241_i32_246 dim 1 : vector<2x256xf32>, i32 -> vector<2x256xf32>
    %1389 = vector.broadcast %6 : vector<1x256xf32> to vector<2x256xf32>
    %1390 = arith.mulf %1388, %1389 : vector<2x256xf32>
    %c15_247 = arith.constant 15 : index
    %1391 = memref.load %arg6[%c15_247] : memref<144xf32, #tpu.memory_space<smem>>
    %1392 = vector.broadcast %1391 : f32 to vector<2x256xf32>
    %1393 = arith.mulf %1392, %1390 : vector<2x256xf32>
    %1394 = arith.addf %1375, %1393 : vector<2x256xf32>
    %c51_248 = arith.constant 51 : index
    %1395 = memref.load %arg6[%c51_248] : memref<144xf32, #tpu.memory_space<smem>>
    %1396 = vector.broadcast %1395 : f32 to vector<2x256xf32>
    %1397 = arith.mulf %1396, %1390 : vector<2x256xf32>
    %1398 = arith.addf %1379, %1397 : vector<2x256xf32>
    %c87_249 = arith.constant 87 : index
    %1399 = memref.load %arg6[%c87_249] : memref<144xf32, #tpu.memory_space<smem>>
    %1400 = vector.broadcast %1399 : f32 to vector<2x256xf32>
    %1401 = arith.mulf %1400, %1390 : vector<2x256xf32>
    %1402 = arith.addf %1383, %1401 : vector<2x256xf32>
    %c123_250 = arith.constant 123 : index
    %1403 = memref.load %arg6[%c123_250] : memref<144xf32, #tpu.memory_space<smem>>
    %1404 = vector.broadcast %1403 : f32 to vector<2x256xf32>
    %1405 = arith.mulf %1404, %1390 : vector<2x256xf32>
    %1406 = arith.addf %1387, %1405 : vector<2x256xf32>
    %c241_i32_251 = arith.constant 241 : i32
    %1407 = tpu.dynamic_rotate %868 by %c241_i32_251 dim 1 : vector<2x256xf32>, i32 -> vector<2x256xf32>
    %1408 = vector.broadcast %6 : vector<1x256xf32> to vector<2x256xf32>
    %1409 = arith.mulf %1407, %1408 : vector<2x256xf32>
    %c24_252 = arith.constant 24 : index
    %1410 = memref.load %arg6[%c24_252] : memref<144xf32, #tpu.memory_space<smem>>
    %1411 = vector.broadcast %1410 : f32 to vector<2x256xf32>
    %1412 = arith.mulf %1411, %1409 : vector<2x256xf32>
    %1413 = arith.addf %1394, %1412 : vector<2x256xf32>
    %c60_253 = arith.constant 60 : index
    %1414 = memref.load %arg6[%c60_253] : memref<144xf32, #tpu.memory_space<smem>>
    %1415 = vector.broadcast %1414 : f32 to vector<2x256xf32>
    %1416 = arith.mulf %1415, %1409 : vector<2x256xf32>
    %1417 = arith.addf %1398, %1416 : vector<2x256xf32>
    %c96_254 = arith.constant 96 : index
    %1418 = memref.load %arg6[%c96_254] : memref<144xf32, #tpu.memory_space<smem>>
    %1419 = vector.broadcast %1418 : f32 to vector<2x256xf32>
    %1420 = arith.mulf %1419, %1409 : vector<2x256xf32>
    %1421 = arith.addf %1402, %1420 : vector<2x256xf32>
    %c132_255 = arith.constant 132 : index
    %1422 = memref.load %arg6[%c132_255] : memref<144xf32, #tpu.memory_space<smem>>
    %1423 = vector.broadcast %1422 : f32 to vector<2x256xf32>
    %1424 = arith.mulf %1423, %1409 : vector<2x256xf32>
    %1425 = arith.addf %1406, %1424 : vector<2x256xf32>
    %c241_i32_256 = arith.constant 241 : i32
    %1426 = tpu.dynamic_rotate %928 by %c241_i32_256 dim 1 : vector<2x256xf32>, i32 -> vector<2x256xf32>
    %1427 = vector.broadcast %6 : vector<1x256xf32> to vector<2x256xf32>
    %1428 = arith.mulf %1426, %1427 : vector<2x256xf32>
    %c33_257 = arith.constant 33 : index
    %1429 = memref.load %arg6[%c33_257] : memref<144xf32, #tpu.memory_space<smem>>
    %1430 = vector.broadcast %1429 : f32 to vector<2x256xf32>
    %1431 = arith.mulf %1430, %1428 : vector<2x256xf32>
    %1432 = arith.addf %1413, %1431 : vector<2x256xf32>
    %c69_258 = arith.constant 69 : index
    %1433 = memref.load %arg6[%c69_258] : memref<144xf32, #tpu.memory_space<smem>>
    %1434 = vector.broadcast %1433 : f32 to vector<2x256xf32>
    %1435 = arith.mulf %1434, %1428 : vector<2x256xf32>
    %1436 = arith.addf %1417, %1435 : vector<2x256xf32>
    %c105_259 = arith.constant 105 : index
    %1437 = memref.load %arg6[%c105_259] : memref<144xf32, #tpu.memory_space<smem>>
    %1438 = vector.broadcast %1437 : f32 to vector<2x256xf32>
    %1439 = arith.mulf %1438, %1428 : vector<2x256xf32>
    %1440 = arith.addf %1421, %1439 : vector<2x256xf32>
    %c141_260 = arith.constant 141 : index
    %1441 = memref.load %arg6[%c141_260] : memref<144xf32, #tpu.memory_space<smem>>
    %1442 = vector.broadcast %1441 : f32 to vector<2x256xf32>
    %1443 = arith.mulf %1442, %1428 : vector<2x256xf32>
    %1444 = arith.addf %1425, %1443 : vector<2x256xf32>
    %c240_i32_261 = arith.constant 240 : i32
    %1445 = tpu.dynamic_rotate %748 by %c240_i32_261 dim 1 : vector<2x256xf32>, i32 -> vector<2x256xf32>
    %1446 = vector.broadcast %7 : vector<1x256xf32> to vector<2x256xf32>
    %1447 = arith.mulf %1445, %1446 : vector<2x256xf32>
    %c7_262 = arith.constant 7 : index
    %1448 = memref.load %arg6[%c7_262] : memref<144xf32, #tpu.memory_space<smem>>
    %1449 = vector.broadcast %1448 : f32 to vector<2x256xf32>
    %1450 = arith.mulf %1449, %1447 : vector<2x256xf32>
    %1451 = arith.addf %1432, %1450 : vector<2x256xf32>
    %c43_263 = arith.constant 43 : index
    %1452 = memref.load %arg6[%c43_263] : memref<144xf32, #tpu.memory_space<smem>>
    %1453 = vector.broadcast %1452 : f32 to vector<2x256xf32>
    %1454 = arith.mulf %1453, %1447 : vector<2x256xf32>
    %1455 = arith.addf %1436, %1454 : vector<2x256xf32>
    %c79_264 = arith.constant 79 : index
    %1456 = memref.load %arg6[%c79_264] : memref<144xf32, #tpu.memory_space<smem>>
    %1457 = vector.broadcast %1456 : f32 to vector<2x256xf32>
    %1458 = arith.mulf %1457, %1447 : vector<2x256xf32>
    %1459 = arith.addf %1440, %1458 : vector<2x256xf32>
    %c115_265 = arith.constant 115 : index
    %1460 = memref.load %arg6[%c115_265] : memref<144xf32, #tpu.memory_space<smem>>
    %1461 = vector.broadcast %1460 : f32 to vector<2x256xf32>
    %1462 = arith.mulf %1461, %1447 : vector<2x256xf32>
    %1463 = arith.addf %1444, %1462 : vector<2x256xf32>
    %c240_i32_266 = arith.constant 240 : i32
    %1464 = tpu.dynamic_rotate %808 by %c240_i32_266 dim 1 : vector<2x256xf32>, i32 -> vector<2x256xf32>
    %1465 = vector.broadcast %7 : vector<1x256xf32> to vector<2x256xf32>
    %1466 = arith.mulf %1464, %1465 : vector<2x256xf32>
    %c16_267 = arith.constant 16 : index
    %1467 = memref.load %arg6[%c16_267] : memref<144xf32, #tpu.memory_space<smem>>
    %1468 = vector.broadcast %1467 : f32 to vector<2x256xf32>
    %1469 = arith.mulf %1468, %1466 : vector<2x256xf32>
    %1470 = arith.addf %1451, %1469 : vector<2x256xf32>
    %c52_268 = arith.constant 52 : index
    %1471 = memref.load %arg6[%c52_268] : memref<144xf32, #tpu.memory_space<smem>>
    %1472 = vector.broadcast %1471 : f32 to vector<2x256xf32>
    %1473 = arith.mulf %1472, %1466 : vector<2x256xf32>
    %1474 = arith.addf %1455, %1473 : vector<2x256xf32>
    %c88_269 = arith.constant 88 : index
    %1475 = memref.load %arg6[%c88_269] : memref<144xf32, #tpu.memory_space<smem>>
    %1476 = vector.broadcast %1475 : f32 to vector<2x256xf32>
    %1477 = arith.mulf %1476, %1466 : vector<2x256xf32>
    %1478 = arith.addf %1459, %1477 : vector<2x256xf32>
    %c124_270 = arith.constant 124 : index
    %1479 = memref.load %arg6[%c124_270] : memref<144xf32, #tpu.memory_space<smem>>
    %1480 = vector.broadcast %1479 : f32 to vector<2x256xf32>
    %1481 = arith.mulf %1480, %1466 : vector<2x256xf32>
    %1482 = arith.addf %1463, %1481 : vector<2x256xf32>
    %c240_i32_271 = arith.constant 240 : i32
    %1483 = tpu.dynamic_rotate %868 by %c240_i32_271 dim 1 : vector<2x256xf32>, i32 -> vector<2x256xf32>
    %1484 = vector.broadcast %7 : vector<1x256xf32> to vector<2x256xf32>
    %1485 = arith.mulf %1483, %1484 : vector<2x256xf32>
    %c25_272 = arith.constant 25 : index
    %1486 = memref.load %arg6[%c25_272] : memref<144xf32, #tpu.memory_space<smem>>
    %1487 = vector.broadcast %1486 : f32 to vector<2x256xf32>
    %1488 = arith.mulf %1487, %1485 : vector<2x256xf32>
    %1489 = arith.addf %1470, %1488 : vector<2x256xf32>
    %c61_273 = arith.constant 61 : index
    %1490 = memref.load %arg6[%c61_273] : memref<144xf32, #tpu.memory_space<smem>>
    %1491 = vector.broadcast %1490 : f32 to vector<2x256xf32>
    %1492 = arith.mulf %1491, %1485 : vector<2x256xf32>
    %1493 = arith.addf %1474, %1492 : vector<2x256xf32>
    %c97_274 = arith.constant 97 : index
    %1494 = memref.load %arg6[%c97_274] : memref<144xf32, #tpu.memory_space<smem>>
    %1495 = vector.broadcast %1494 : f32 to vector<2x256xf32>
    %1496 = arith.mulf %1495, %1485 : vector<2x256xf32>
    %1497 = arith.addf %1478, %1496 : vector<2x256xf32>
    %c133_275 = arith.constant 133 : index
    %1498 = memref.load %arg6[%c133_275] : memref<144xf32, #tpu.memory_space<smem>>
    %1499 = vector.broadcast %1498 : f32 to vector<2x256xf32>
    %1500 = arith.mulf %1499, %1485 : vector<2x256xf32>
    %1501 = arith.addf %1482, %1500 : vector<2x256xf32>
    %c240_i32_276 = arith.constant 240 : i32
    %1502 = tpu.dynamic_rotate %928 by %c240_i32_276 dim 1 : vector<2x256xf32>, i32 -> vector<2x256xf32>
    %1503 = vector.broadcast %7 : vector<1x256xf32> to vector<2x256xf32>
    %1504 = arith.mulf %1502, %1503 : vector<2x256xf32>
    %c34_277 = arith.constant 34 : index
    %1505 = memref.load %arg6[%c34_277] : memref<144xf32, #tpu.memory_space<smem>>
    %1506 = vector.broadcast %1505 : f32 to vector<2x256xf32>
    %1507 = arith.mulf %1506, %1504 : vector<2x256xf32>
    %1508 = arith.addf %1489, %1507 : vector<2x256xf32>
    %c70_278 = arith.constant 70 : index
    %1509 = memref.load %arg6[%c70_278] : memref<144xf32, #tpu.memory_space<smem>>
    %1510 = vector.broadcast %1509 : f32 to vector<2x256xf32>
    %1511 = arith.mulf %1510, %1504 : vector<2x256xf32>
    %1512 = arith.addf %1493, %1511 : vector<2x256xf32>
    %c106_279 = arith.constant 106 : index
    %1513 = memref.load %arg6[%c106_279] : memref<144xf32, #tpu.memory_space<smem>>
    %1514 = vector.broadcast %1513 : f32 to vector<2x256xf32>
    %1515 = arith.mulf %1514, %1504 : vector<2x256xf32>
    %1516 = arith.addf %1497, %1515 : vector<2x256xf32>
    %c142_280 = arith.constant 142 : index
    %1517 = memref.load %arg6[%c142_280] : memref<144xf32, #tpu.memory_space<smem>>
    %1518 = vector.broadcast %1517 : f32 to vector<2x256xf32>
    %1519 = arith.mulf %1518, %1504 : vector<2x256xf32>
    %1520 = arith.addf %1501, %1519 : vector<2x256xf32>
    %c239_i32_281 = arith.constant 239 : i32
    %1521 = tpu.dynamic_rotate %748 by %c239_i32_281 dim 1 : vector<2x256xf32>, i32 -> vector<2x256xf32>
    %1522 = vector.broadcast %8 : vector<1x256xf32> to vector<2x256xf32>
    %1523 = arith.mulf %1521, %1522 : vector<2x256xf32>
    %c8_282 = arith.constant 8 : index
    %1524 = memref.load %arg6[%c8_282] : memref<144xf32, #tpu.memory_space<smem>>
    %1525 = vector.broadcast %1524 : f32 to vector<2x256xf32>
    %1526 = arith.mulf %1525, %1523 : vector<2x256xf32>
    %1527 = arith.addf %1508, %1526 : vector<2x256xf32>
    %c44_283 = arith.constant 44 : index
    %1528 = memref.load %arg6[%c44_283] : memref<144xf32, #tpu.memory_space<smem>>
    %1529 = vector.broadcast %1528 : f32 to vector<2x256xf32>
    %1530 = arith.mulf %1529, %1523 : vector<2x256xf32>
    %1531 = arith.addf %1512, %1530 : vector<2x256xf32>
    %c80_284 = arith.constant 80 : index
    %1532 = memref.load %arg6[%c80_284] : memref<144xf32, #tpu.memory_space<smem>>
    %1533 = vector.broadcast %1532 : f32 to vector<2x256xf32>
    %1534 = arith.mulf %1533, %1523 : vector<2x256xf32>
    %1535 = arith.addf %1516, %1534 : vector<2x256xf32>
    %c116_285 = arith.constant 116 : index
    %1536 = memref.load %arg6[%c116_285] : memref<144xf32, #tpu.memory_space<smem>>
    %1537 = vector.broadcast %1536 : f32 to vector<2x256xf32>
    %1538 = arith.mulf %1537, %1523 : vector<2x256xf32>
    %1539 = arith.addf %1520, %1538 : vector<2x256xf32>
    %c239_i32_286 = arith.constant 239 : i32
    %1540 = tpu.dynamic_rotate %808 by %c239_i32_286 dim 1 : vector<2x256xf32>, i32 -> vector<2x256xf32>
    %1541 = vector.broadcast %8 : vector<1x256xf32> to vector<2x256xf32>
    %1542 = arith.mulf %1540, %1541 : vector<2x256xf32>
    %c17_287 = arith.constant 17 : index
    %1543 = memref.load %arg6[%c17_287] : memref<144xf32, #tpu.memory_space<smem>>
    %1544 = vector.broadcast %1543 : f32 to vector<2x256xf32>
    %1545 = arith.mulf %1544, %1542 : vector<2x256xf32>
    %1546 = arith.addf %1527, %1545 : vector<2x256xf32>
    %c53_288 = arith.constant 53 : index
    %1547 = memref.load %arg6[%c53_288] : memref<144xf32, #tpu.memory_space<smem>>
    %1548 = vector.broadcast %1547 : f32 to vector<2x256xf32>
    %1549 = arith.mulf %1548, %1542 : vector<2x256xf32>
    %1550 = arith.addf %1531, %1549 : vector<2x256xf32>
    %c89_289 = arith.constant 89 : index
    %1551 = memref.load %arg6[%c89_289] : memref<144xf32, #tpu.memory_space<smem>>
    %1552 = vector.broadcast %1551 : f32 to vector<2x256xf32>
    %1553 = arith.mulf %1552, %1542 : vector<2x256xf32>
    %1554 = arith.addf %1535, %1553 : vector<2x256xf32>
    %c125_290 = arith.constant 125 : index
    %1555 = memref.load %arg6[%c125_290] : memref<144xf32, #tpu.memory_space<smem>>
    %1556 = vector.broadcast %1555 : f32 to vector<2x256xf32>
    %1557 = arith.mulf %1556, %1542 : vector<2x256xf32>
    %1558 = arith.addf %1539, %1557 : vector<2x256xf32>
    %c239_i32_291 = arith.constant 239 : i32
    %1559 = tpu.dynamic_rotate %868 by %c239_i32_291 dim 1 : vector<2x256xf32>, i32 -> vector<2x256xf32>
    %1560 = vector.broadcast %8 : vector<1x256xf32> to vector<2x256xf32>
    %1561 = arith.mulf %1559, %1560 : vector<2x256xf32>
    %c26_292 = arith.constant 26 : index
    %1562 = memref.load %arg6[%c26_292] : memref<144xf32, #tpu.memory_space<smem>>
    %1563 = vector.broadcast %1562 : f32 to vector<2x256xf32>
    %1564 = arith.mulf %1563, %1561 : vector<2x256xf32>
    %1565 = arith.addf %1546, %1564 : vector<2x256xf32>
    %c62_293 = arith.constant 62 : index
    %1566 = memref.load %arg6[%c62_293] : memref<144xf32, #tpu.memory_space<smem>>
    %1567 = vector.broadcast %1566 : f32 to vector<2x256xf32>
    %1568 = arith.mulf %1567, %1561 : vector<2x256xf32>
    %1569 = arith.addf %1550, %1568 : vector<2x256xf32>
    %c98_294 = arith.constant 98 : index
    %1570 = memref.load %arg6[%c98_294] : memref<144xf32, #tpu.memory_space<smem>>
    %1571 = vector.broadcast %1570 : f32 to vector<2x256xf32>
    %1572 = arith.mulf %1571, %1561 : vector<2x256xf32>
    %1573 = arith.addf %1554, %1572 : vector<2x256xf32>
    %c134_295 = arith.constant 134 : index
    %1574 = memref.load %arg6[%c134_295] : memref<144xf32, #tpu.memory_space<smem>>
    %1575 = vector.broadcast %1574 : f32 to vector<2x256xf32>
    %1576 = arith.mulf %1575, %1561 : vector<2x256xf32>
    %1577 = arith.addf %1558, %1576 : vector<2x256xf32>
    %c239_i32_296 = arith.constant 239 : i32
    %1578 = tpu.dynamic_rotate %928 by %c239_i32_296 dim 1 : vector<2x256xf32>, i32 -> vector<2x256xf32>
    %1579 = vector.broadcast %8 : vector<1x256xf32> to vector<2x256xf32>
    %1580 = arith.mulf %1578, %1579 : vector<2x256xf32>
    %c35_297 = arith.constant 35 : index
    %1581 = memref.load %arg6[%c35_297] : memref<144xf32, #tpu.memory_space<smem>>
    %1582 = vector.broadcast %1581 : f32 to vector<2x256xf32>
    %1583 = arith.mulf %1582, %1580 : vector<2x256xf32>
    %1584 = arith.addf %1565, %1583 : vector<2x256xf32>
    %c71_298 = arith.constant 71 : index
    %1585 = memref.load %arg6[%c71_298] : memref<144xf32, #tpu.memory_space<smem>>
    %1586 = vector.broadcast %1585 : f32 to vector<2x256xf32>
    %1587 = arith.mulf %1586, %1580 : vector<2x256xf32>
    %1588 = arith.addf %1569, %1587 : vector<2x256xf32>
    %c107_299 = arith.constant 107 : index
    %1589 = memref.load %arg6[%c107_299] : memref<144xf32, #tpu.memory_space<smem>>
    %1590 = vector.broadcast %1589 : f32 to vector<2x256xf32>
    %1591 = arith.mulf %1590, %1580 : vector<2x256xf32>
    %1592 = arith.addf %1573, %1591 : vector<2x256xf32>
    %c143_300 = arith.constant 143 : index
    %1593 = memref.load %arg6[%c143_300] : memref<144xf32, #tpu.memory_space<smem>>
    %1594 = vector.broadcast %1593 : f32 to vector<2x256xf32>
    %1595 = arith.mulf %1594, %1580 : vector<2x256xf32>
    %1596 = arith.addf %1577, %1595 : vector<2x256xf32>
    %cst_301 = arith.constant dense<0.000000e+00> : vector<2xf32>
    %1597 = vector.multi_reduction <add>, %1584, %cst_301 [1] : vector<2x256xf32> to vector<2xf32>
    %1598 = vector.shape_cast %1597 : vector<2xf32> to vector<2x1xf32>
    %cst_302 = arith.constant 2.560000e+02 : f32
    %1599 = vector.broadcast %cst_302 : f32 to vector<2x1xf32>
    %1600 = arith.divf %1598, %1599 : vector<2x1xf32>
    %1601 = vector.broadcast %1600 : vector<2x1xf32> to vector<2x256xf32>
    %1602 = arith.subf %1584, %1601 : vector<2x256xf32>
    %1603 = arith.mulf %1602, %1602 : vector<2x256xf32>
    %cst_303 = arith.constant dense<0.000000e+00> : vector<2xf32>
    %1604 = vector.multi_reduction <add>, %1603, %cst_303 [1] : vector<2x256xf32> to vector<2xf32>
    %1605 = vector.shape_cast %1604 : vector<2xf32> to vector<2x1xf32>
    %cst_304 = arith.constant 2.560000e+02 : f32
    %1606 = vector.broadcast %cst_304 : f32 to vector<2x1xf32>
    %1607 = arith.divf %1605, %1606 : vector<2x1xf32>
    %cst_305 = arith.constant 9.99999974E-6 : f32
    %1608 = vector.broadcast %cst_305 : f32 to vector<2x1xf32>
    %1609 = arith.addf %1607, %1608 : vector<2x1xf32>
    %1610 = math.rsqrt %1609 : vector<2x1xf32>
    %1611 = vector.broadcast %1610 : vector<2x1xf32> to vector<2x256xf32>
    %1612 = arith.mulf %1602, %1611 : vector<2x256xf32>
    %1613 = vector.broadcast %11 : vector<1x256xf32> to vector<2x256xf32>
    %1614 = arith.mulf %1612, %1613 : vector<2x256xf32>
    %1615 = vector.broadcast %12 : vector<1x256xf32> to vector<2x256xf32>
    %1616 = arith.addf %1614, %1615 : vector<2x256xf32>
    %1617 = arith.addf %1616, %14 : vector<2x256xf32>
    %cst_306 = arith.constant 5.000000e-01 : f32
    %1618 = vector.broadcast %cst_306 : f32 to vector<2x256xf32>
    %1619 = arith.mulf %1618, %1617 : vector<2x256xf32>
    %cst_307 = arith.constant 0.707106769 : f32
    %1620 = vector.broadcast %cst_307 : f32 to vector<2x256xf32>
    %1621 = arith.mulf %1617, %1620 : vector<2x256xf32>
    %1622 = math.absf %1621 : vector<2x256xf32>
    %cst_308 = arith.constant 0.327591091 : f32
    %1623 = vector.broadcast %cst_308 : f32 to vector<2x256xf32>
    %1624 = arith.mulf %1623, %1622 : vector<2x256xf32>
    %cst_309 = arith.constant 1.000000e+00 : f32
    %1625 = vector.broadcast %cst_309 : f32 to vector<2x256xf32>
    %1626 = arith.addf %1625, %1624 : vector<2x256xf32>
    %cst_310 = arith.constant 1.000000e+00 : f32
    %1627 = vector.broadcast %cst_310 : f32 to vector<2x256xf32>
    %1628 = arith.divf %1627, %1626 : vector<2x256xf32>
    %cst_311 = arith.constant 1.06140542 : f32
    %1629 = vector.broadcast %cst_311 : f32 to vector<2x256xf32>
    %1630 = arith.mulf %1629, %1628 : vector<2x256xf32>
    %cst_312 = arith.constant -1.45315206 : f32
    %1631 = vector.broadcast %cst_312 : f32 to vector<2x256xf32>
    %1632 = arith.addf %1630, %1631 : vector<2x256xf32>
    %1633 = arith.mulf %1632, %1628 : vector<2x256xf32>
    %cst_313 = arith.constant 1.42141378 : f32
    %1634 = vector.broadcast %cst_313 : f32 to vector<2x256xf32>
    %1635 = arith.addf %1633, %1634 : vector<2x256xf32>
    %1636 = arith.mulf %1635, %1628 : vector<2x256xf32>
    %cst_314 = arith.constant -0.284496725 : f32
    %1637 = vector.broadcast %cst_314 : f32 to vector<2x256xf32>
    %1638 = arith.addf %1636, %1637 : vector<2x256xf32>
    %1639 = arith.mulf %1638, %1628 : vector<2x256xf32>
    %cst_315 = arith.constant 0.254829586 : f32
    %1640 = vector.broadcast %cst_315 : f32 to vector<2x256xf32>
    %1641 = arith.addf %1639, %1640 : vector<2x256xf32>
    %1642 = arith.mulf %1641, %1628 : vector<2x256xf32>
    %cst_316 = arith.constant 0.000000e+00 : f32
    %1643 = vector.broadcast %cst_316 : f32 to vector<2x256xf32>
    %1644 = arith.subf %1643, %1622 : vector<2x256xf32>
    %1645 = arith.mulf %1644, %1622 : vector<2x256xf32>
    %1646 = math.exp %1645 : vector<2x256xf32>
    %1647 = arith.mulf %1642, %1646 : vector<2x256xf32>
    %cst_317 = arith.constant 1.000000e+00 : f32
    %1648 = vector.broadcast %cst_317 : f32 to vector<2x256xf32>
    %1649 = arith.subf %1648, %1647 : vector<2x256xf32>
    %cst_318 = arith.constant 0.000000e+00 : f32
    %1650 = vector.broadcast %cst_318 : f32 to vector<2x256xf32>
    %1651 = arith.cmpf oge, %1621, %1650 : vector<2x256xf32>
    %cst_319 = arith.constant 0.000000e+00 : f32
    %1652 = vector.broadcast %cst_319 : f32 to vector<2x256xf32>
    %1653 = arith.subf %1652, %1649 : vector<2x256xf32>
    %1654 = arith.select %1651, %1649, %1653 : vector<2x256xi1>, vector<2x256xf32>
    %cst_320 = arith.constant 1.000000e+00 : f32
    %1655 = vector.broadcast %cst_320 : f32 to vector<2x256xf32>
    %1656 = arith.addf %1655, %1654 : vector<2x256xf32>
    %1657 = arith.mulf %1619, %1656 : vector<2x256xf32>
    %c0_321 = arith.constant 0 : index
    %c0_322 = arith.constant 0 : index
    %c0_323 = arith.constant 0 : index
    %1658 = vector.load %arg9[%c0_321, %c0_322, %c0_323] : memref<4x2x256xf32, #tpu.memory_space<vmem>>, vector<1x2x256xf32>
    %1659 = vector.shape_cast %1658 : vector<1x2x256xf32> to vector<2x256xf32>
    %1660 = vector.shape_cast %1657 : vector<2x256xf32> to vector<1x2x256xf32>
    tpu.vector_store %arg9[%c0_321, %c0_322, %c0_323], %1660 {strides = array<i32>} : memref<4x2x256xf32, #tpu.memory_space<vmem>>, vector<1x2x256xf32>,
    %cst_324 = arith.constant dense<0.000000e+00> : vector<2xf32>
    %1661 = vector.multi_reduction <add>, %1588, %cst_324 [1] : vector<2x256xf32> to vector<2xf32>
    %1662 = vector.shape_cast %1661 : vector<2xf32> to vector<2x1xf32>
    %cst_325 = arith.constant 2.560000e+02 : f32
    %1663 = vector.broadcast %cst_325 : f32 to vector<2x1xf32>
    %1664 = arith.divf %1662, %1663 : vector<2x1xf32>
    %1665 = vector.broadcast %1664 : vector<2x1xf32> to vector<2x256xf32>
    %1666 = arith.subf %1588, %1665 : vector<2x256xf32>
    %1667 = arith.mulf %1666, %1666 : vector<2x256xf32>
    %cst_326 = arith.constant dense<0.000000e+00> : vector<2xf32>
    %1668 = vector.multi_reduction <add>, %1667, %cst_326 [1] : vector<2x256xf32> to vector<2xf32>
    %1669 = vector.shape_cast %1668 : vector<2xf32> to vector<2x1xf32>
    %cst_327 = arith.constant 2.560000e+02 : f32
    %1670 = vector.broadcast %cst_327 : f32 to vector<2x1xf32>
    %1671 = arith.divf %1669, %1670 : vector<2x1xf32>
    %cst_328 = arith.constant 9.99999974E-6 : f32
    %1672 = vector.broadcast %cst_328 : f32 to vector<2x1xf32>
    %1673 = arith.addf %1671, %1672 : vector<2x1xf32>
    %1674 = math.rsqrt %1673 : vector<2x1xf32>
    %1675 = vector.broadcast %1674 : vector<2x1xf32> to vector<2x256xf32>
    %1676 = arith.mulf %1666, %1675 : vector<2x256xf32>
    %1677 = vector.broadcast %11 : vector<1x256xf32> to vector<2x256xf32>
    %1678 = arith.mulf %1676, %1677 : vector<2x256xf32>
    %1679 = vector.broadcast %12 : vector<1x256xf32> to vector<2x256xf32>
    %1680 = arith.addf %1678, %1679 : vector<2x256xf32>
    %1681 = arith.addf %1680, %16 : vector<2x256xf32>
    %cst_329 = arith.constant 5.000000e-01 : f32
    %1682 = vector.broadcast %cst_329 : f32 to vector<2x256xf32>
    %1683 = arith.mulf %1682, %1681 : vector<2x256xf32>
    %cst_330 = arith.constant 0.707106769 : f32
    %1684 = vector.broadcast %cst_330 : f32 to vector<2x256xf32>
    %1685 = arith.mulf %1681, %1684 : vector<2x256xf32>
    %1686 = math.absf %1685 : vector<2x256xf32>
    %cst_331 = arith.constant 0.327591091 : f32
    %1687 = vector.broadcast %cst_331 : f32 to vector<2x256xf32>
    %1688 = arith.mulf %1687, %1686 : vector<2x256xf32>
    %cst_332 = arith.constant 1.000000e+00 : f32
    %1689 = vector.broadcast %cst_332 : f32 to vector<2x256xf32>
    %1690 = arith.addf %1689, %1688 : vector<2x256xf32>
    %cst_333 = arith.constant 1.000000e+00 : f32
    %1691 = vector.broadcast %cst_333 : f32 to vector<2x256xf32>
    %1692 = arith.divf %1691, %1690 : vector<2x256xf32>
    %cst_334 = arith.constant 1.06140542 : f32
    %1693 = vector.broadcast %cst_334 : f32 to vector<2x256xf32>
    %1694 = arith.mulf %1693, %1692 : vector<2x256xf32>
    %cst_335 = arith.constant -1.45315206 : f32
    %1695 = vector.broadcast %cst_335 : f32 to vector<2x256xf32>
    %1696 = arith.addf %1694, %1695 : vector<2x256xf32>
    %1697 = arith.mulf %1696, %1692 : vector<2x256xf32>
    %cst_336 = arith.constant 1.42141378 : f32
    %1698 = vector.broadcast %cst_336 : f32 to vector<2x256xf32>
    %1699 = arith.addf %1697, %1698 : vector<2x256xf32>
    %1700 = arith.mulf %1699, %1692 : vector<2x256xf32>
    %cst_337 = arith.constant -0.284496725 : f32
    %1701 = vector.broadcast %cst_337 : f32 to vector<2x256xf32>
    %1702 = arith.addf %1700, %1701 : vector<2x256xf32>
    %1703 = arith.mulf %1702, %1692 : vector<2x256xf32>
    %cst_338 = arith.constant 0.254829586 : f32
    %1704 = vector.broadcast %cst_338 : f32 to vector<2x256xf32>
    %1705 = arith.addf %1703, %1704 : vector<2x256xf32>
    %1706 = arith.mulf %1705, %1692 : vector<2x256xf32>
    %cst_339 = arith.constant 0.000000e+00 : f32
    %1707 = vector.broadcast %cst_339 : f32 to vector<2x256xf32>
    %1708 = arith.subf %1707, %1686 : vector<2x256xf32>
    %1709 = arith.mulf %1708, %1686 : vector<2x256xf32>
    %1710 = math.exp %1709 : vector<2x256xf32>
    %1711 = arith.mulf %1706, %1710 : vector<2x256xf32>
    %cst_340 = arith.constant 1.000000e+00 : f32
    %1712 = vector.broadcast %cst_340 : f32 to vector<2x256xf32>
    %1713 = arith.subf %1712, %1711 : vector<2x256xf32>
    %cst_341 = arith.constant 0.000000e+00 : f32
    %1714 = vector.broadcast %cst_341 : f32 to vector<2x256xf32>
    %1715 = arith.cmpf oge, %1685, %1714 : vector<2x256xf32>
    %cst_342 = arith.constant 0.000000e+00 : f32
    %1716 = vector.broadcast %cst_342 : f32 to vector<2x256xf32>
    %1717 = arith.subf %1716, %1713 : vector<2x256xf32>
    %1718 = arith.select %1715, %1713, %1717 : vector<2x256xi1>, vector<2x256xf32>
    %cst_343 = arith.constant 1.000000e+00 : f32
    %1719 = vector.broadcast %cst_343 : f32 to vector<2x256xf32>
    %1720 = arith.addf %1719, %1718 : vector<2x256xf32>
    %1721 = arith.mulf %1683, %1720 : vector<2x256xf32>
    %c1_344 = arith.constant 1 : index
    %c0_345 = arith.constant 0 : index
    %c0_346 = arith.constant 0 : index
    %1722 = vector.load %arg9[%c1_344, %c0_345, %c0_346] : memref<4x2x256xf32, #tpu.memory_space<vmem>>, vector<1x2x256xf32>
    %1723 = vector.shape_cast %1722 : vector<1x2x256xf32> to vector<2x256xf32>
    %1724 = vector.shape_cast %1721 : vector<2x256xf32> to vector<1x2x256xf32>
    tpu.vector_store %arg9[%c1_344, %c0_345, %c0_346], %1724 {strides = array<i32>} : memref<4x2x256xf32, #tpu.memory_space<vmem>>, vector<1x2x256xf32>,
    %cst_347 = arith.constant dense<0.000000e+00> : vector<2xf32>
    %1725 = vector.multi_reduction <add>, %1592, %cst_347 [1] : vector<2x256xf32> to vector<2xf32>
    %1726 = vector.shape_cast %1725 : vector<2xf32> to vector<2x1xf32>
    %cst_348 = arith.constant 2.560000e+02 : f32
    %1727 = vector.broadcast %cst_348 : f32 to vector<2x1xf32>
    %1728 = arith.divf %1726, %1727 : vector<2x1xf32>
    %1729 = vector.broadcast %1728 : vector<2x1xf32> to vector<2x256xf32>
    %1730 = arith.subf %1592, %1729 : vector<2x256xf32>
    %1731 = arith.mulf %1730, %1730 : vector<2x256xf32>
    %cst_349 = arith.constant dense<0.000000e+00> : vector<2xf32>
    %1732 = vector.multi_reduction <add>, %1731, %cst_349 [1] : vector<2x256xf32> to vector<2xf32>
    %1733 = vector.shape_cast %1732 : vector<2xf32> to vector<2x1xf32>
    %cst_350 = arith.constant 2.560000e+02 : f32
    %1734 = vector.broadcast %cst_350 : f32 to vector<2x1xf32>
    %1735 = arith.divf %1733, %1734 : vector<2x1xf32>
    %cst_351 = arith.constant 9.99999974E-6 : f32
    %1736 = vector.broadcast %cst_351 : f32 to vector<2x1xf32>
    %1737 = arith.addf %1735, %1736 : vector<2x1xf32>
    %1738 = math.rsqrt %1737 : vector<2x1xf32>
    %1739 = vector.broadcast %1738 : vector<2x1xf32> to vector<2x256xf32>
    %1740 = arith.mulf %1730, %1739 : vector<2x256xf32>
    %1741 = vector.broadcast %11 : vector<1x256xf32> to vector<2x256xf32>
    %1742 = arith.mulf %1740, %1741 : vector<2x256xf32>
    %1743 = vector.broadcast %12 : vector<1x256xf32> to vector<2x256xf32>
    %1744 = arith.addf %1742, %1743 : vector<2x256xf32>
    %1745 = arith.addf %1744, %18 : vector<2x256xf32>
    %cst_352 = arith.constant 5.000000e-01 : f32
    %1746 = vector.broadcast %cst_352 : f32 to vector<2x256xf32>
    %1747 = arith.mulf %1746, %1745 : vector<2x256xf32>
    %cst_353 = arith.constant 0.707106769 : f32
    %1748 = vector.broadcast %cst_353 : f32 to vector<2x256xf32>
    %1749 = arith.mulf %1745, %1748 : vector<2x256xf32>
    %1750 = math.absf %1749 : vector<2x256xf32>
    %cst_354 = arith.constant 0.327591091 : f32
    %1751 = vector.broadcast %cst_354 : f32 to vector<2x256xf32>
    %1752 = arith.mulf %1751, %1750 : vector<2x256xf32>
    %cst_355 = arith.constant 1.000000e+00 : f32
    %1753 = vector.broadcast %cst_355 : f32 to vector<2x256xf32>
    %1754 = arith.addf %1753, %1752 : vector<2x256xf32>
    %cst_356 = arith.constant 1.000000e+00 : f32
    %1755 = vector.broadcast %cst_356 : f32 to vector<2x256xf32>
    %1756 = arith.divf %1755, %1754 : vector<2x256xf32>
    %cst_357 = arith.constant 1.06140542 : f32
    %1757 = vector.broadcast %cst_357 : f32 to vector<2x256xf32>
    %1758 = arith.mulf %1757, %1756 : vector<2x256xf32>
    %cst_358 = arith.constant -1.45315206 : f32
    %1759 = vector.broadcast %cst_358 : f32 to vector<2x256xf32>
    %1760 = arith.addf %1758, %1759 : vector<2x256xf32>
    %1761 = arith.mulf %1760, %1756 : vector<2x256xf32>
    %cst_359 = arith.constant 1.42141378 : f32
    %1762 = vector.broadcast %cst_359 : f32 to vector<2x256xf32>
    %1763 = arith.addf %1761, %1762 : vector<2x256xf32>
    %1764 = arith.mulf %1763, %1756 : vector<2x256xf32>
    %cst_360 = arith.constant -0.284496725 : f32
    %1765 = vector.broadcast %cst_360 : f32 to vector<2x256xf32>
    %1766 = arith.addf %1764, %1765 : vector<2x256xf32>
    %1767 = arith.mulf %1766, %1756 : vector<2x256xf32>
    %cst_361 = arith.constant 0.254829586 : f32
    %1768 = vector.broadcast %cst_361 : f32 to vector<2x256xf32>
    %1769 = arith.addf %1767, %1768 : vector<2x256xf32>
    %1770 = arith.mulf %1769, %1756 : vector<2x256xf32>
    %cst_362 = arith.constant 0.000000e+00 : f32
    %1771 = vector.broadcast %cst_362 : f32 to vector<2x256xf32>
    %1772 = arith.subf %1771, %1750 : vector<2x256xf32>
    %1773 = arith.mulf %1772, %1750 : vector<2x256xf32>
    %1774 = math.exp %1773 : vector<2x256xf32>
    %1775 = arith.mulf %1770, %1774 : vector<2x256xf32>
    %cst_363 = arith.constant 1.000000e+00 : f32
    %1776 = vector.broadcast %cst_363 : f32 to vector<2x256xf32>
    %1777 = arith.subf %1776, %1775 : vector<2x256xf32>
    %cst_364 = arith.constant 0.000000e+00 : f32
    %1778 = vector.broadcast %cst_364 : f32 to vector<2x256xf32>
    %1779 = arith.cmpf oge, %1749, %1778 : vector<2x256xf32>
    %cst_365 = arith.constant 0.000000e+00 : f32
    %1780 = vector.broadcast %cst_365 : f32 to vector<2x256xf32>
    %1781 = arith.subf %1780, %1777 : vector<2x256xf32>
    %1782 = arith.select %1779, %1777, %1781 : vector<2x256xi1>, vector<2x256xf32>
    %cst_366 = arith.constant 1.000000e+00 : f32
    %1783 = vector.broadcast %cst_366 : f32 to vector<2x256xf32>
    %1784 = arith.addf %1783, %1782 : vector<2x256xf32>
    %1785 = arith.mulf %1747, %1784 : vector<2x256xf32>
    %c2_367 = arith.constant 2 : index
    %c0_368 = arith.constant 0 : index
    %c0_369 = arith.constant 0 : index
    %1786 = vector.load %arg9[%c2_367, %c0_368, %c0_369] : memref<4x2x256xf32, #tpu.memory_space<vmem>>, vector<1x2x256xf32>
    %1787 = vector.shape_cast %1786 : vector<1x2x256xf32> to vector<2x256xf32>
    %1788 = vector.shape_cast %1785 : vector<2x256xf32> to vector<1x2x256xf32>
    tpu.vector_store %arg9[%c2_367, %c0_368, %c0_369], %1788 {strides = array<i32>} : memref<4x2x256xf32, #tpu.memory_space<vmem>>, vector<1x2x256xf32>,
    %cst_370 = arith.constant dense<0.000000e+00> : vector<2xf32>
    %1789 = vector.multi_reduction <add>, %1596, %cst_370 [1] : vector<2x256xf32> to vector<2xf32>
    %1790 = vector.shape_cast %1789 : vector<2xf32> to vector<2x1xf32>
    %cst_371 = arith.constant 2.560000e+02 : f32
    %1791 = vector.broadcast %cst_371 : f32 to vector<2x1xf32>
    %1792 = arith.divf %1790, %1791 : vector<2x1xf32>
    %1793 = vector.broadcast %1792 : vector<2x1xf32> to vector<2x256xf32>
    %1794 = arith.subf %1596, %1793 : vector<2x256xf32>
    %1795 = arith.mulf %1794, %1794 : vector<2x256xf32>
    %cst_372 = arith.constant dense<0.000000e+00> : vector<2xf32>
    %1796 = vector.multi_reduction <add>, %1795, %cst_372 [1] : vector<2x256xf32> to vector<2xf32>
    %1797 = vector.shape_cast %1796 : vector<2xf32> to vector<2x1xf32>
    %cst_373 = arith.constant 2.560000e+02 : f32
    %1798 = vector.broadcast %cst_373 : f32 to vector<2x1xf32>
    %1799 = arith.divf %1797, %1798 : vector<2x1xf32>
    %cst_374 = arith.constant 9.99999974E-6 : f32
    %1800 = vector.broadcast %cst_374 : f32 to vector<2x1xf32>
    %1801 = arith.addf %1799, %1800 : vector<2x1xf32>
    %1802 = math.rsqrt %1801 : vector<2x1xf32>
    %1803 = vector.broadcast %1802 : vector<2x1xf32> to vector<2x256xf32>
    %1804 = arith.mulf %1794, %1803 : vector<2x256xf32>
    %1805 = vector.broadcast %11 : vector<1x256xf32> to vector<2x256xf32>
    %1806 = arith.mulf %1804, %1805 : vector<2x256xf32>
    %1807 = vector.broadcast %12 : vector<1x256xf32> to vector<2x256xf32>
    %1808 = arith.addf %1806, %1807 : vector<2x256xf32>
    %1809 = arith.addf %1808, %20 : vector<2x256xf32>
    %cst_375 = arith.constant 5.000000e-01 : f32
    %1810 = vector.broadcast %cst_375 : f32 to vector<2x256xf32>
    %1811 = arith.mulf %1810, %1809 : vector<2x256xf32>
    %cst_376 = arith.constant 0.707106769 : f32
    %1812 = vector.broadcast %cst_376 : f32 to vector<2x256xf32>
    %1813 = arith.mulf %1809, %1812 : vector<2x256xf32>
    %1814 = math.absf %1813 : vector<2x256xf32>
    %cst_377 = arith.constant 0.327591091 : f32
    %1815 = vector.broadcast %cst_377 : f32 to vector<2x256xf32>
    %1816 = arith.mulf %1815, %1814 : vector<2x256xf32>
    %cst_378 = arith.constant 1.000000e+00 : f32
    %1817 = vector.broadcast %cst_378 : f32 to vector<2x256xf32>
    %1818 = arith.addf %1817, %1816 : vector<2x256xf32>
    %cst_379 = arith.constant 1.000000e+00 : f32
    %1819 = vector.broadcast %cst_379 : f32 to vector<2x256xf32>
    %1820 = arith.divf %1819, %1818 : vector<2x256xf32>
    %cst_380 = arith.constant 1.06140542 : f32
    %1821 = vector.broadcast %cst_380 : f32 to vector<2x256xf32>
    %1822 = arith.mulf %1821, %1820 : vector<2x256xf32>
    %cst_381 = arith.constant -1.45315206 : f32
    %1823 = vector.broadcast %cst_381 : f32 to vector<2x256xf32>
    %1824 = arith.addf %1822, %1823 : vector<2x256xf32>
    %1825 = arith.mulf %1824, %1820 : vector<2x256xf32>
    %cst_382 = arith.constant 1.42141378 : f32
    %1826 = vector.broadcast %cst_382 : f32 to vector<2x256xf32>
    %1827 = arith.addf %1825, %1826 : vector<2x256xf32>
    %1828 = arith.mulf %1827, %1820 : vector<2x256xf32>
    %cst_383 = arith.constant -0.284496725 : f32
    %1829 = vector.broadcast %cst_383 : f32 to vector<2x256xf32>
    %1830 = arith.addf %1828, %1829 : vector<2x256xf32>
    %1831 = arith.mulf %1830, %1820 : vector<2x256xf32>
    %cst_384 = arith.constant 0.254829586 : f32
    %1832 = vector.broadcast %cst_384 : f32 to vector<2x256xf32>
    %1833 = arith.addf %1831, %1832 : vector<2x256xf32>
    %1834 = arith.mulf %1833, %1820 : vector<2x256xf32>
    %cst_385 = arith.constant 0.000000e+00 : f32
    %1835 = vector.broadcast %cst_385 : f32 to vector<2x256xf32>
    %1836 = arith.subf %1835, %1814 : vector<2x256xf32>
    %1837 = arith.mulf %1836, %1814 : vector<2x256xf32>
    %1838 = math.exp %1837 : vector<2x256xf32>
    %1839 = arith.mulf %1834, %1838 : vector<2x256xf32>
    %cst_386 = arith.constant 1.000000e+00 : f32
    %1840 = vector.broadcast %cst_386 : f32 to vector<2x256xf32>
    %1841 = arith.subf %1840, %1839 : vector<2x256xf32>
    %cst_387 = arith.constant 0.000000e+00 : f32
    %1842 = vector.broadcast %cst_387 : f32 to vector<2x256xf32>
    %1843 = arith.cmpf oge, %1813, %1842 : vector<2x256xf32>
    %cst_388 = arith.constant 0.000000e+00 : f32
    %1844 = vector.broadcast %cst_388 : f32 to vector<2x256xf32>
    %1845 = arith.subf %1844, %1841 : vector<2x256xf32>
    %1846 = arith.select %1843, %1841, %1845 : vector<2x256xi1>, vector<2x256xf32>
    %cst_389 = arith.constant 1.000000e+00 : f32
    %1847 = vector.broadcast %cst_389 : f32 to vector<2x256xf32>
    %1848 = arith.addf %1847, %1846 : vector<2x256xf32>
    %1849 = arith.mulf %1811, %1848 : vector<2x256xf32>
    %c3_390 = arith.constant 3 : index
    %c0_391 = arith.constant 0 : index
    %c0_392 = arith.constant 0 : index
    %1850 = vector.load %arg9[%c3_390, %c0_391, %c0_392] : memref<4x2x256xf32, #tpu.memory_space<vmem>>, vector<1x2x256xf32>
    %1851 = vector.shape_cast %1850 : vector<1x2x256xf32> to vector<2x256xf32>
    %1852 = vector.shape_cast %1849 : vector<2x256xf32> to vector<1x2x256xf32>
    tpu.vector_store %arg9[%c3_390, %c0_391, %c0_392], %1852 {strides = array<i32>} : memref<4x2x256xf32, #tpu.memory_space<vmem>>, vector<1x2x256xf32>,
    return
  }
  func.func @transform_0(%arg0: i32) -> (i32, i32) {
    %c0_i32 = arith.constant 0 : i32
    %c0_i32_0 = arith.constant 0 : i32
    %c0_i32_1 = arith.constant 0 : i32
    return %c0_i32, %c0_i32_0 : i32, i32
  }
  func.func @transform_1(%arg0: i32) -> (i32, i32, i32) {
    %c0_i32 = arith.constant 0 : i32
    %c0_i32_0 = arith.constant 0 : i32
    %c0_i32_1 = arith.constant 0 : i32
    return %c0_i32, %arg0, %c0_i32_0 : i32, i32, i32
  }
  func.func @transform_2(%arg0: i32) -> i32 {
    %c0_i32 = arith.constant 0 : i32
    %c0_i32_0 = arith.constant 0 : i32
    return %c0_i32 : i32
  }
  func.func @transform_3(%arg0: i32) -> (i32, i32) {
    %c0_i32 = arith.constant 0 : i32
    %c0_i32_0 = arith.constant 0 : i32
    %c0_i32_1 = arith.constant 0 : i32
    return %c0_i32, %c0_i32_0 : i32, i32
  }
  func.func @transform_4(%arg0: i32) -> (i32, i32) {
    %c0_i32 = arith.constant 0 : i32
    %c0_i32_0 = arith.constant 0 : i32
    %c0_i32_1 = arith.constant 0 : i32
    return %c0_i32, %c0_i32_0 : i32, i32
  }
  func.func @transform_5(%arg0: i32) -> i32 {
    %c0_i32 = arith.constant 0 : i32
    %c0_i32_0 = arith.constant 0 : i32
    return %c0_i32 : i32
  }
  func.func @transform_6(%arg0: i32) -> (i32, i32) {
    %c0_i32 = arith.constant 0 : i32
    %c0_i32_0 = arith.constant 0 : i32
    %c0_i32_1 = arith.constant 0 : i32
    return %c0_i32, %c0_i32_0 : i32, i32
  }
  func.func @transform_7(%arg0: i32) -> (i32, i32) {
    %c0_i32 = arith.constant 0 : i32
    %c0_i32_0 = arith.constant 0 : i32
    %c0_i32_1 = arith.constant 0 : i32
    return %c0_i32, %c0_i32_0 : i32, i32
  }
  func.func @transform_8(%arg0: i32) -> (i32, i32, i32) {
    %c0_i32 = arith.constant 0 : i32
    %c0_i32_0 = arith.constant 0 : i32
    %c0_i32_1 = arith.constant 0 : i32
    return %c0_i32, %arg0, %c0_i32_0 : i32, i32, i32
  }
}

</mosaic_0001>

<llo_original>
// kernel: tpu_custom_call.1
$region0: #{tpu_custom_call.1}
  #allocation0 [shape = 'u32[]', space=smem, size = 0x4, offset = 0x4, fixed_abs, tag = 'smem constant byte address 0x4 - core index']
  #allocation1 [shape = 'u32[144,128]{1,0:T(1,128)}', space=vmem, size = 0x12000, scoped, tag = 'internal scratch']
  %s0 = inlined_call_operand.hbm [shape: f32[9,256], index: 0, kind: input, shape index: {}]
  %s1 = inlined_call_operand.hbm [shape: f32[4,2,256], index: 1, kind: input, shape index: {}]
  %s2 = inlined_call_operand.vmem [shape: f32[144], index: 2, kind: input, shape index: {}]
  %s3 = inlined_call_operand.vmem [shape: f32[1,256], index: 3, kind: input, shape index: {}]
  %s4 = inlined_call_operand.vmem [shape: f32[1,256], index: 4, kind: input, shape index: {}]
  %s5 = inlined_call_operand.vmem [shape: f32[144], index: 5, kind: input, shape index: {}]
  %s6 = inlined_call_operand.vmem [shape: f32[1,256], index: 6, kind: input, shape index: {}]
  %s7 = inlined_call_operand.vmem [shape: f32[1,256], index: 7, kind: input, shape index: {}]
  %s8 = inlined_call_operand.hbm [shape: f32[4,2,256], index: 8, kind: output, shape index: {}]
  %s9 = sld [smem:[#allocation0]]
  $region58: #{tpu_custom_call.1} parent=0
    _
  %s11 = ssub.s32 1, %s9
  %s12 = scalar_select 0, %s11, %s9
  $region1: #{tpu_custom_call.1} parent=0
    #allocation2 [shape = 'u8[16384]{0}', space=vmem, size = 0x4000, scoped, tag = 'input window, operand 0, single buffered']
    #allocation3 [shape = 's32[1]{0}', space=sflag, size = 0x4, scoped, tag = 'scoped memory for tpu_custom_call.1']
    #allocation4 [shape = 's32[1]{0}', space=sflag, size = 0x4, scoped, tag = 'scoped memory for tpu_custom_call.1']
    #allocation5 [shape = 's32[1]{0}', space=sflag, size = 0x4, scoped, tag = 'scoped memory for tpu_custom_call.1']
    #allocation6 [shape = 'u8[8192]{0}', space=vmem, size = 0x2000, scoped, tag = 'input window, operand 1, single buffered']
    #allocation7 [shape = 's32[1]{0}', space=sflag, size = 0x4, scoped, tag = 'scoped memory for tpu_custom_call.1']
    #allocation8 [shape = 'u8[1024]{0}', space=smem, size = 0x400, scoped, tag = 'input window, operand 2, single buffered']
    #allocation9 [shape = 'u8[1024]{0}', space=smem, size = 0x400, scoped, tag = 'input window, operand 5, single buffered']
    #allocation10 [shape = 's32[1]{0}', space=sflag, size = 0x4, scoped, tag = 'scoped memory for tpu_custom_call.1']
    #allocation11 [shape = 'u8[8192]{0}', space=vmem, size = 0x2000, scoped, tag = 'output window, operand 0, single buffered']
    %13 = vsyncpa [#allocation3], 0
    %14 = vsyncpa [#allocation7], 0
    %15 = vsyncpa [#allocation5], 0
    %16 = vsyncpa [#allocation10], 0
    %17 = vsyncpa [#allocation4], 0
    // Predicated region
    $region2: #{tpu_custom_call.1} parent=1 // pred_check
      _
    $region3: #{tpu_custom_call.1} parent=1 // pred_check_branch
      %19 = sbr.rel (0) target = $region5
    $region4: #{tpu_custom_call.1} parent=1 // pred_region
      %s21 = ssub.s32 512, 512
      %22 = vsyncadd [#allocation3], %s21
      %s23 = sshll.u32 [#allocation2], 4
      %s24 = int_to_ptr.vmem [resolvable:$true] %s23
      %29 = dma.hbm_to_vmem [thread:$0]  %s0, 512, %s24, [#allocation3], 256, 256, 16
    $region5: #{tpu_custom_call.1} parent=1 // pred_fallthru
      _
    // Predicated region
    $region6: #{tpu_custom_call.1} parent=1 // pred_check
      _
    $region7: #{tpu_custom_call.1} parent=1 // pred_check_branch
      %31 = sbr.rel (0) target = $region9
    $region8: #{tpu_custom_call.1} parent=1 // pred_region
      %s33 = ssub.s32 256, 256
      %34 = vsyncadd [#allocation7], %s33
      %s35 = sshll.u32 [#allocation6], 4
      %s36 = int_to_ptr.vmem [resolvable:$true] %s35
      %41 = dma.hbm_to_vmem [thread:$0]  %s1, 256, %s36, [#allocation7], 64, 64, 4
    $region9: #{tpu_custom_call.1} parent=1 // pred_fallthru
      _
    // Predicated region
    $region10: #{tpu_custom_call.1} parent=1 // pred_check
      _
    $region11: #{tpu_custom_call.1} parent=1 // pred_check_branch
      %43 = sbr.rel (0) target = $region13
    $region12: #{tpu_custom_call.1} parent=1 // pred_region
      %s45 = ssub.s32 32, 32
      %46 = vsyncadd [#allocation5], %s45
      %s48 = sshll.u32 %s2, 4
      %s49 = int_to_ptr.vmem [resolvable:$true] %s48
      %51 = dma.vmem_to_smem %s49, 32, [#allocation8], [#allocation5]
    $region13: #{tpu_custom_call.1} parent=1 // pred_fallthru
      _
    // Predicated region
    $region14: #{tpu_custom_call.1} parent=1 // pred_check
      _
    $region15: #{tpu_custom_call.1} parent=1 // pred_check_branch
      %53 = sbr.rel (0) target = $region17
    $region16: #{tpu_custom_call.1} parent=1 // pred_region
      _
    $region17: #{tpu_custom_call.1} parent=1 // pred_fallthru
      _
    // Predicated region
    $region18: #{tpu_custom_call.1} parent=1 // pred_check
      _
    $region19: #{tpu_custom_call.1} parent=1 // pred_check_branch
      %55 = sbr.rel (0) target = $region21
    $region20: #{tpu_custom_call.1} parent=1 // pred_region
      _
    $region21: #{tpu_custom_call.1} parent=1 // pred_fallthru
      _
    // Predicated region
    $region22: #{tpu_custom_call.1} parent=1 // pred_check
      _
    $region23: #{tpu_custom_call.1} parent=1 // pred_check_branch
      %57 = sbr.rel (0) target = $region25
    $region24: #{tpu_custom_call.1} parent=1 // pred_region
      %s59 = ssub.s32 32, 32
      %60 = vsyncadd [#allocation10], %s59
      %s62 = sshll.u32 %s5, 4
      %s63 = int_to_ptr.vmem [resolvable:$true] %s62
      %65 = dma.vmem_to_smem %s63, 32, [#allocation9], [#allocation10]
    $region25: #{tpu_custom_call.1} parent=1 // pred_fallthru
      _
    // Predicated region
    $region26: #{tpu_custom_call.1} parent=1 // pred_check
      _
    $region27: #{tpu_custom_call.1} parent=1 // pred_check_branch
      %67 = sbr.rel (0) target = $region29
    $region28: #{tpu_custom_call.1} parent=1 // pred_region
      _
    $region29: #{tpu_custom_call.1} parent=1 // pred_fallthru
      _
    // Predicated region
    $region30: #{tpu_custom_call.1} parent=1 // pred_check
      _
    $region31: #{tpu_custom_call.1} parent=1 // pred_check_branch
      %69 = sbr.rel (0) target = $region33
    $region32: #{tpu_custom_call.1} parent=1 // pred_region
      _
    $region33: #{tpu_custom_call.1} parent=1 // pred_fallthru
      _
    // Predicated region
    $region34: #{tpu_custom_call.1} parent=1 // pred_check
      _
    $region35: #{tpu_custom_call.1} parent=1 // pred_check_branch
      %71 = sbr.rel (0) target = $region37
    $region36: #{tpu_custom_call.1} parent=1 // pred_region
      %72 = dma.done [#allocation3], 512
    $region37: #{tpu_custom_call.1} parent=1 // pred_fallthru
      _
    // Predicated region
    $region38: #{tpu_custom_call.1} parent=1 // pred_check
      _
    $region39: #{tpu_custom_call.1} parent=1 // pred_check_branch
      %74 = sbr.rel (0) target = $region41
    $region40: #{tpu_custom_call.1} parent=1 // pred_region
      %75 = dma.done [#allocation7], 256
    $region41: #{tpu_custom_call.1} parent=1 // pred_fallthru
      _
    // Predicated region
    $region42: #{tpu_custom_call.1} parent=1 // pred_check
      _
    $region43: #{tpu_custom_call.1} parent=1 // pred_check_branch
      %77 = sbr.rel (0) target = $region45
    $region44: #{tpu_custom_call.1} parent=1 // pred_region
      %78 = dma.done [#allocation5], 32
    $region45: #{tpu_custom_call.1} parent=1 // pred_fallthru
      _
    // Predicated region
    $region46: #{tpu_custom_call.1} parent=1 // pred_check
      _
    $region47: #{tpu_custom_call.1} parent=1 // pred_check_branch
      %80 = sbr.rel (0) target = $region49
    $region48: #{tpu_custom_call.1} parent=1 // pred_region
      %81 = dma.done [#allocation10], 32
    $region49: #{tpu_custom_call.1} parent=1 // pred_fallthru
      _
    %82 = sfence
    %v83 = vld [vmem:[#allocation2] sm:$0xff]
    %v84 = vld [vmem:[#allocation2 + $0x8] sm:$0xff]
    %v85 = vld [vmem:[#allocation2 + $0x10] sm:$0x1]
    %v86 = vld [vmem:[#allocation2 + $0x18] sm:$0x1]
    %v87 = vld [vmem:[%s3] sm:$0x3]
    %v88 = vld [vmem:[%s4] sm:$0x3]
    %v89 = vld [vmem:[%s6] sm:$0x3]
    %v90 = vld [vmem:[%s7] sm:$0x3]
    %v91 = vld [vmem:[#allocation6] sm:$0xf]
    %s92 = scalar_lea.vmem [#allocation6], 4
    %v93 = vld [vmem:[%s92] sm:$0xf]
    %s94 = scalar_lea.vmem [#allocation6], 8
    %v95 = vld [vmem:[%s94] sm:$0xf]
    %s96 = scalar_lea.vmem [#allocation6], 12
    %v97 = vld [vmem:[%s96] sm:$0xf]
    %v100 = vunpack.c.l.s4 1983009808
    %v101 = vunpack.c.0.s8 %v100
    %v102 = vlaneseq
    %v103 = vshrl.u32 %v102, 7
    %v104 = vsub.s32 %v101, %v103
    %v105 = vrot.slane %v91, %v104
    %v106 = vcombine.high %v105, %v105
    %109 = vrot.lane.b32.xlu0 %v105, 17
    %v110 = vpop.permute.xlu0 %109
    %111 = vrot.lane.b32.xlu0 %v106, 17
    %v112 = vpop.permute.xlu0 %111
    %v113 = vlaneseq
    %v114 = vand.u32 %v113, 127
    %vm115 = vcmp.lt.s32.totalorder %v114, 17
    %v116 = vsel %vm115, %v110, %v112
    %v117 = vsel %vm115, %v112, %v110
    %v118 = vlaneseq
    %v119 = vshrl.u32 %v118, 7
    %v120 = vsub.s32 0, %v119
    %v121 = vrot.slane %v83, %v120
    %v122 = vlaneseq
    %v123 = vshrl.u32 %v122, 7
    %v124 = vsub.s32 0, %v123
    %v125 = vrot.slane %v84, %v124
    %v126 = vmul.f32 %v117, %v121
    %v127 = vmul.f32 %v116, %v125
    %s128 = sld [smem:[#allocation8]]
    %v129 = vstv %s128
    %v130 = vmul.f32 %v129, %v126
    %v131 = vmul.f32 %v129, %v127
    %s132 = sld [smem:[#allocation8 + $0x24]]
    %v133 = vstv %s132
    %v134 = vmul.f32 %v133, %v126
    %v135 = vmul.f32 %v133, %v127
    %s136 = sld [smem:[#allocation8 + $0x48]]
    %v137 = vstv %s136
    %v138 = vmul.f32 %v137, %v126
    %v139 = vmul.f32 %v137, %v127
    %s140 = sld [smem:[#allocation8 + $0x6c]]
    %v141 = vstv %s140
    %v142 = vmul.f32 %v141, %v126
    %v143 = vmul.f32 %v141, %v127
    %v146 = vunpack.c.l.s4 1983009808
    %v147 = vunpack.c.0.s8 %v146
    %v148 = vlaneseq
    %v149 = vshrl.u32 %v148, 7
    %v150 = vsub.s32 %v147, %v149
    %v151 = vrot.slane %v93, %v150
    %v152 = vcombine.high %v151, %v151
    %155 = vrot.lane.b32.xlu0 %v151, 17
    %v156 = vpop.permute.xlu0 %155
    %157 = vrot.lane.b32.xlu0 %v152, 17
    %v158 = vpop.permute.xlu0 %157
    %v159 = vsel %vm115, %v156, %v158
    %v160 = vsel %vm115, %v158, %v156
    %v161 = vmul.f32 %v160, %v121
    %v162 = vmul.f32 %v159, %v125
    %s163 = sld [smem:[#allocation8 + $0x9]]
    %v164 = vstv %s163
    %v165 = vmul.f32 %v164, %v161
    %v166 = vmul.f32 %v164, %v162
    %v167 = vadd.f32 %v130, %v165
    %v168 = vadd.f32 %v131, %v166
    %s169 = sld [smem:[#allocation8 + $0x2d]]
    %v170 = vstv %s169
    %v171 = vmul.f32 %v170, %v161
    %v172 = vmul.f32 %v170, %v162
    %v173 = vadd.f32 %v134, %v171
    %v174 = vadd.f32 %v135, %v172
    %s175 = sld [smem:[#allocation8 + $0x51]]
    %v176 = vstv %s175
    %v177 = vmul.f32 %v176, %v161
    %v178 = vmul.f32 %v176, %v162
    %v179 = vadd.f32 %v138, %v177
    %v180 = vadd.f32 %v139, %v178
    %s181 = sld [smem:[#allocation8 + $0x75]]
    %v182 = vstv %s181
    %v183 = vmul.f32 %v182, %v161
    %v184 = vmul.f32 %v182, %v162
    %v185 = vadd.f32 %v142, %v183
    %v186 = vadd.f32 %v143, %v184
    %v189 = vunpack.c.l.s4 1983009808
    %v190 = vunpack.c.0.s8 %v189
    %v191 = vlaneseq
    %v192 = vshrl.u32 %v191, 7
    %v193 = vsub.s32 %v190, %v192
    %v194 = vrot.slane %v95, %v193
    %v195 = vcombine.high %v194, %v194
    %198 = vrot.lane.b32.xlu0 %v194, 17
    %v199 = vpop.permute.xlu0 %198
    %200 = vrot.lane.b32.xlu0 %v195, 17
    %v201 = vpop.permute.xlu0 %200
    %v202 = vsel %vm115, %v199, %v201
    %v203 = vsel %vm115, %v201, %v199
    %v204 = vmul.f32 %v203, %v121
    %v205 = vmul.f32 %v202, %v125
    %s206 = sld [smem:[#allocation8 + $0x12]]
    %v207 = vstv %s206
    %v208 = vmul.f32 %v207, %v204
    %v209 = vmul.f32 %v207, %v205
    %v210 = vadd.f32 %v167, %v208
    %v211 = vadd.f32 %v168, %v209
    %s212 = sld [smem:[#allocation8 + $0x36]]
    %v213 = vstv %s212
    %v214 = vmul.f32 %v213, %v204
    %v215 = vmul.f32 %v213, %v205
    %v216 = vadd.f32 %v173, %v214
    %v217 = vadd.f32 %v174, %v215
    %s218 = sld [smem:[#allocation8 + $0x5a]]
    %v219 = vstv %s218
    %v220 = vmul.f32 %v219, %v204
    %v221 = vmul.f32 %v219, %v205
    %v222 = vadd.f32 %v179, %v220
    %v223 = vadd.f32 %v180, %v221
    %s224 = sld [smem:[#allocation8 + $0x7e]]
    %v225 = vstv %s224
    %v226 = vmul.f32 %v225, %v204
    %v227 = vmul.f32 %v225, %v205
    %v228 = vadd.f32 %v185, %v226
    %v229 = vadd.f32 %v186, %v227
    %v232 = vunpack.c.l.s4 1983009808
    %v233 = vunpack.c.0.s8 %v232
    %v234 = vlaneseq
    %v235 = vshrl.u32 %v234, 7
    %v236 = vsub.s32 %v233, %v235
    %v237 = vrot.slane %v97, %v236
    %v238 = vcombine.high %v237, %v237
    %241 = vrot.lane.b32.xlu0 %v237, 17
    %v242 = vpop.permute.xlu0 %241
    %243 = vrot.lane.b32.xlu0 %v238, 17
    %v244 = vpop.permute.xlu0 %243
    %v245 = vsel %vm115, %v242, %v244
    %v246 = vsel %vm115, %v244, %v242
    %v247 = vmul.f32 %v246, %v121
    %v248 = vmul.f32 %v245, %v125
    %s249 = sld [smem:[#allocation8 + $0x1b]]
    %v250 = vstv %s249
    %v251 = vmul.f32 %v250, %v247
    %v252 = vmul.f32 %v250, %v248
    %v253 = vadd.f32 %v210, %v251
    %v254 = vadd.f32 %v211, %v252
    %s255 = sld [smem:[#allocation8 + $0x3f]]
    %v256 = vstv %s255
    %v257 = vmul.f32 %v256, %v247
    %v258 = vmul.f32 %v256, %v248
    %v259 = vadd.f32 %v216, %v257
    %v260 = vadd.f32 %v217, %v258
    %s261 = sld [smem:[#allocation8 + $0x63]]
    %v262 = vstv %s261
    %v263 = vmul.f32 %v262, %v247
    %v264 = vmul.f32 %v262, %v248
    %v265 = vadd.f32 %v222, %v263
    %v266 = vadd.f32 %v223, %v264
    %s267 = sld [smem:[#allocation8 + $0x87]]
    %v268 = vstv %s267
    %v269 = vmul.f32 %v268, %v247
    %v270 = vmul.f32 %v268, %v248
    %v271 = vadd.f32 %v228, %v269
    %v272 = vadd.f32 %v229, %v270
    %273 = vrot.lane.b32.xlu0 %v105, 16
    %v274 = vpop.permute.xlu0 %273
    %275 = vrot.lane.b32.xlu0 %v106, 16
    %v276 = vpop.permute.xlu0 %275
    %vm277 = vcmp.lt.s32.totalorder %v114, 16
    %v278 = vsel %vm277, %v274, %v276
    %v279 = vsel %vm277, %v276, %v274
    %v280 = vlaneseq
    %v281 = vshrl.u32 %v280, 7
    %v282 = vsub.s32 1, %v281
    %v283 = vrot.slane %v83, %v282
    %v284 = vlaneseq
    %v285 = vshrl.u32 %v284, 7
    %v286 = vsub.s32 1, %v285
    %v287 = vrot.slane %v84, %v286
    %v288 = vmul.f32 %v279, %v283
    %v289 = vmul.f32 %v278, %v287
    %s290 = sld [smem:[#allocation8 + $0x1]]
    %v291 = vstv %s290
    %v292 = vmul.f32 %v291, %v288
    %v293 = vmul.f32 %v291, %v289
    %v294 = vadd.f32 %v253, %v292
    %v295 = vadd.f32 %v254, %v293
    %s296 = sld [smem:[#allocation8 + $0x25]]
    %v297 = vstv %s296
    %v298 = vmul.f32 %v297, %v288
    %v299 = vmul.f32 %v297, %v289
    %v300 = vadd.f32 %v259, %v298
    %v301 = vadd.f32 %v260, %v299
    %s302 = sld [smem:[#allocation8 + $0x49]]
    %v303 = vstv %s302
    %v304 = vmul.f32 %v303, %v288
    %v305 = vmul.f32 %v303, %v289
    %v306 = vadd.f32 %v265, %v304
    %v307 = vadd.f32 %v266, %v305
    %s308 = sld [smem:[#allocation8 + $0x6d]]
    %v309 = vstv %s308
    %v310 = vmul.f32 %v309, %v288
    %v311 = vmul.f32 %v309, %v289
    %v312 = vadd.f32 %v271, %v310
    %v313 = vadd.f32 %v272, %v311
    %314 = vrot.lane.b32.xlu0 %v151, 16
    %v315 = vpop.permute.xlu0 %314
    %316 = vrot.lane.b32.xlu0 %v152, 16
    %v317 = vpop.permute.xlu0 %316
    %v318 = vsel %vm277, %v315, %v317
    %v319 = vsel %vm277, %v317, %v315
    %v320 = vmul.f32 %v319, %v283
    %v321 = vmul.f32 %v318, %v287
    %s322 = sld [smem:[#allocation8 + $0xa]]
    %v323 = vstv %s322
    %v324 = vmul.f32 %v323, %v320
    %v325 = vmul.f32 %v323, %v321
    %v326 = vadd.f32 %v294, %v324
    %v327 = vadd.f32 %v295, %v325
    %s328 = sld [smem:[#allocation8 + $0x2e]]
    %v329 = vstv %s328
    %v330 = vmul.f32 %v329, %v320
    %v331 = vmul.f32 %v329, %v321
    %v332 = vadd.f32 %v300, %v330
    %v333 = vadd.f32 %v301, %v331
    %s334 = sld [smem:[#allocation8 + $0x52]]
    %v335 = vstv %s334
    %v336 = vmul.f32 %v335, %v320
    %v337 = vmul.f32 %v335, %v321
    %v338 = vadd.f32 %v306, %v336
    %v339 = vadd.f32 %v307, %v337
    %s340 = sld [smem:[#allocation8 + $0x76]]
    %v341 = vstv %s340
    %v342 = vmul.f32 %v341, %v320
    %v343 = vmul.f32 %v341, %v321
    %v344 = vadd.f32 %v312, %v342
    %v345 = vadd.f32 %v313, %v343
    %346 = vrot.lane.b32.xlu0 %v194, 16
    %v347 = vpop.permute.xlu0 %346
    %348 = vrot.lane.b32.xlu0 %v195, 16
    %v349 = vpop.permute.xlu0 %348
    %v350 = vsel %vm277, %v347, %v349
    %v351 = vsel %vm277, %v349, %v347
    %v352 = vmul.f32 %v351, %v283
    %v353 = vmul.f32 %v350, %v287
    %s354 = sld [smem:[#allocation8 + $0x13]]
    %v355 = vstv %s354
    %v356 = vmul.f32 %v355, %v352
    %v357 = vmul.f32 %v355, %v353
    %v358 = vadd.f32 %v326, %v356
    %v359 = vadd.f32 %v327, %v357
    %s360 = sld [smem:[#allocation8 + $0x37]]
    %v361 = vstv %s360
    %v362 = vmul.f32 %v361, %v352
    %v363 = vmul.f32 %v361, %v353
    %v364 = vadd.f32 %v332, %v362
    %v365 = vadd.f32 %v333, %v363
    %s366 = sld [smem:[#allocation8 + $0x5b]]
    %v367 = vstv %s366
    %v368 = vmul.f32 %v367, %v352
    %v369 = vmul.f32 %v367, %v353
    %v370 = vadd.f32 %v338, %v368
    %v371 = vadd.f32 %v339, %v369
    %s372 = sld [smem:[#allocation8 + $0x7f]]
    %v373 = vstv %s372
    %v374 = vmul.f32 %v373, %v352
    %v375 = vmul.f32 %v373, %v353
    %v376 = vadd.f32 %v344, %v374
    %v377 = vadd.f32 %v345, %v375
    %378 = vrot.lane.b32.xlu0 %v237, 16
    %v379 = vpop.permute.xlu0 %378
    %380 = vrot.lane.b32.xlu0 %v238, 16
    %v381 = vpop.permute.xlu0 %380
    %v382 = vsel %vm277, %v379, %v381
    %v383 = vsel %vm277, %v381, %v379
    %v384 = vmul.f32 %v383, %v283
    %v385 = vmul.f32 %v382, %v287
    %s386 = sld [smem:[#allocation8 + $0x1c]]
    %v387 = vstv %s386
    %v388 = vmul.f32 %v387, %v384
    %v389 = vmul.f32 %v387, %v385
    %v390 = vadd.f32 %v358, %v388
    %v391 = vadd.f32 %v359, %v389
    %s392 = sld [smem:[#allocation8 + $0x40]]
    %v393 = vstv %s392
    %v394 = vmul.f32 %v393, %v384
    %v395 = vmul.f32 %v393, %v385
    %v396 = vadd.f32 %v364, %v394
    %v397 = vadd.f32 %v365, %v395
    %s398 = sld [smem:[#allocation8 + $0x64]]
    %v399 = vstv %s398
    %v400 = vmul.f32 %v399, %v384
    %v401 = vmul.f32 %v399, %v385
    %v402 = vadd.f32 %v370, %v400
    %v403 = vadd.f32 %v371, %v401
    %s404 = sld [smem:[#allocation8 + $0x88]]
    %v405 = vstv %s404
    %v406 = vmul.f32 %v405, %v384
    %v407 = vmul.f32 %v405, %v385
    %v408 = vadd.f32 %v376, %v406
    %v409 = vadd.f32 %v377, %v407
    %410 = vrot.lane.b32.xlu0 %v105, 15
    %v411 = vpop.permute.xlu0 %410
    %412 = vrot.lane.b32.xlu0 %v106, 15
    %v413 = vpop.permute.xlu0 %412
    %vm414 = vcmp.lt.s32.totalorder %v114, 15
    %v415 = vsel %vm414, %v411, %v413
    %v416 = vsel %vm414, %v413, %v411
    %v417 = vlaneseq
    %v418 = vshrl.u32 %v417, 7
    %v419 = vsub.s32 2, %v418
    %v420 = vrot.slane %v83, %v419
    %v421 = vlaneseq
    %v422 = vshrl.u32 %v421, 7
    %v423 = vsub.s32 2, %v422
    %v424 = vrot.slane %v84, %v423
    %v425 = vmul.f32 %v416, %v420
    %v426 = vmul.f32 %v415, %v424
    %s427 = sld [smem:[#allocation8 + $0x2]]
    %v428 = vstv %s427
    %v429 = vmul.f32 %v428, %v425
    %v430 = vmul.f32 %v428, %v426
    %v431 = vadd.f32 %v390, %v429
    %v432 = vadd.f32 %v391, %v430
    %s433 = sld [smem:[#allocation8 + $0x26]]
    %v434 = vstv %s433
    %v435 = vmul.f32 %v434, %v425
    %v436 = vmul.f32 %v434, %v426
    %v437 = vadd.f32 %v396, %v435
    %v438 = vadd.f32 %v397, %v436
    %s439 = sld [smem:[#allocation8 + $0x4a]]
    %v440 = vstv %s439
    %v441 = vmul.f32 %v440, %v425
    %v442 = vmul.f32 %v440, %v426
    %v443 = vadd.f32 %v402, %v441
    %v444 = vadd.f32 %v403, %v442
    %s445 = sld [smem:[#allocation8 + $0x6e]]
    %v446 = vstv %s445
    %v447 = vmul.f32 %v446, %v425
    %v448 = vmul.f32 %v446, %v426
    %v449 = vadd.f32 %v408, %v447
    %v450 = vadd.f32 %v409, %v448
    %451 = vrot.lane.b32.xlu0 %v151, 15
    %v452 = vpop.permute.xlu0 %451
    %453 = vrot.lane.b32.xlu0 %v152, 15
    %v454 = vpop.permute.xlu0 %453
    %v455 = vsel %vm414, %v452, %v454
    %v456 = vsel %vm414, %v454, %v452
    %v457 = vmul.f32 %v456, %v420
    %v458 = vmul.f32 %v455, %v424
    %s459 = sld [smem:[#allocation8 + $0xb]]
    %v460 = vstv %s459
    %v461 = vmul.f32 %v460, %v457
    %v462 = vmul.f32 %v460, %v458
    %v463 = vadd.f32 %v431, %v461
    %v464 = vadd.f32 %v432, %v462
    %s465 = sld [smem:[#allocation8 + $0x2f]]
    %v466 = vstv %s465
    %v467 = vmul.f32 %v466, %v457
    %v468 = vmul.f32 %v466, %v458
    %v469 = vadd.f32 %v437, %v467
    %v470 = vadd.f32 %v438, %v468
    %s471 = sld [smem:[#allocation8 + $0x53]]
    %v472 = vstv %s471
    %v473 = vmul.f32 %v472, %v457
    %v474 = vmul.f32 %v472, %v458
    %v475 = vadd.f32 %v443, %v473
    %v476 = vadd.f32 %v444, %v474
    %s477 = sld [smem:[#allocation8 + $0x77]]
    %v478 = vstv %s477
    %v479 = vmul.f32 %v478, %v457
    %v480 = vmul.f32 %v478, %v458
    %v481 = vadd.f32 %v449, %v479
    %v482 = vadd.f32 %v450, %v480
    %483 = vrot.lane.b32.xlu0 %v194, 15
    %v484 = vpop.permute.xlu0 %483
    %485 = vrot.lane.b32.xlu0 %v195, 15
    %v486 = vpop.permute.xlu0 %485
    %v487 = vsel %vm414, %v484, %v486
    %v488 = vsel %vm414, %v486, %v484
    %v489 = vmul.f32 %v488, %v420
    %v490 = vmul.f32 %v487, %v424
    %s491 = sld [smem:[#allocation8 + $0x14]]
    %v492 = vstv %s491
    %v493 = vmul.f32 %v492, %v489
    %v494 = vmul.f32 %v492, %v490
    %v495 = vadd.f32 %v463, %v493
    %v496 = vadd.f32 %v464, %v494
    %s497 = sld [smem:[#allocation8 + $0x38]]
    %v498 = vstv %s497
    %v499 = vmul.f32 %v498, %v489
    %v500 = vmul.f32 %v498, %v490
    %v501 = vadd.f32 %v469, %v499
    %v502 = vadd.f32 %v470, %v500
    %s503 = sld [smem:[#allocation8 + $0x5c]]
    %v504 = vstv %s503
    %v505 = vmul.f32 %v504, %v489
    %v506 = vmul.f32 %v504, %v490
    %v507 = vadd.f32 %v475, %v505
    %v508 = vadd.f32 %v476, %v506
    %s509 = sld [smem:[#allocation8 + $0x80]]
    %v510 = vstv %s509
    %v511 = vmul.f32 %v510, %v489
    %v512 = vmul.f32 %v510, %v490
    %v513 = vadd.f32 %v481, %v511
    %v514 = vadd.f32 %v482, %v512
    %515 = vrot.lane.b32.xlu0 %v237, 15
    %v516 = vpop.permute.xlu0 %515
    %517 = vrot.lane.b32.xlu0 %v238, 15
    %v518 = vpop.permute.xlu0 %517
    %v519 = vsel %vm414, %v516, %v518
    %v520 = vsel %vm414, %v518, %v516
    %v521 = vmul.f32 %v520, %v420
    %v522 = vmul.f32 %v519, %v424
    %s523 = sld [smem:[#allocation8 + $0x1d]]
    %v524 = vstv %s523
    %v525 = vmul.f32 %v524, %v521
    %v526 = vmul.f32 %v524, %v522
    %v527 = vadd.f32 %v495, %v525
    %v528 = vadd.f32 %v496, %v526
    %s529 = sld [smem:[#allocation8 + $0x41]]
    %v530 = vstv %s529
    %v531 = vmul.f32 %v530, %v521
    %v532 = vmul.f32 %v530, %v522
    %v533 = vadd.f32 %v501, %v531
    %v534 = vadd.f32 %v502, %v532
    %s535 = sld [smem:[#allocation8 + $0x65]]
    %v536 = vstv %s535
    %v537 = vmul.f32 %v536, %v521
    %v538 = vmul.f32 %v536, %v522
    %v539 = vadd.f32 %v507, %v537
    %v540 = vadd.f32 %v508, %v538
    %s541 = sld [smem:[#allocation8 + $0x89]]
    %v542 = vstv %s541
    %v543 = vmul.f32 %v542, %v521
    %v544 = vmul.f32 %v542, %v522
    %v545 = vadd.f32 %v513, %v543
    %v546 = vadd.f32 %v514, %v544
    %547 = vrot.lane.b32.xlu0 %v105, 1
    %v548 = vpop.permute.xlu0 %547
    %549 = vrot.lane.b32.xlu0 %v106, 1
    %v550 = vpop.permute.xlu0 %549
    %vm551 = vcmp.lt.s32.totalorder %v114, 1
    %v552 = vsel %vm551, %v548, %v550
    %v553 = vsel %vm551, %v550, %v548
    %v554 = vlaneseq
    %v555 = vshrl.u32 %v554, 7
    %v556 = vsub.s32 3, %v555
    %v557 = vrot.slane %v83, %v556
    %v558 = vlaneseq
    %v559 = vshrl.u32 %v558, 7
    %v560 = vsub.s32 3, %v559
    %v561 = vrot.slane %v84, %v560
    %v562 = vmul.f32 %v553, %v557
    %v563 = vmul.f32 %v552, %v561
    %s564 = sld [smem:[#allocation8 + $0x3]]
    %v565 = vstv %s564
    %v566 = vmul.f32 %v565, %v562
    %v567 = vmul.f32 %v565, %v563
    %v568 = vadd.f32 %v527, %v566
    %v569 = vadd.f32 %v528, %v567
    %s570 = sld [smem:[#allocation8 + $0x27]]
    %v571 = vstv %s570
    %v572 = vmul.f32 %v571, %v562
    %v573 = vmul.f32 %v571, %v563
    %v574 = vadd.f32 %v533, %v572
    %v575 = vadd.f32 %v534, %v573
    %s576 = sld [smem:[#allocation8 + $0x4b]]
    %v577 = vstv %s576
    %v578 = vmul.f32 %v577, %v562
    %v579 = vmul.f32 %v577, %v563
    %v580 = vadd.f32 %v539, %v578
    %v581 = vadd.f32 %v540, %v579
    %s582 = sld [smem:[#allocation8 + $0x6f]]
    %v583 = vstv %s582
    %v584 = vmul.f32 %v583, %v562
    %v585 = vmul.f32 %v583, %v563
    %v586 = vadd.f32 %v545, %v584
    %v587 = vadd.f32 %v546, %v585
    %588 = vrot.lane.b32.xlu0 %v151, 1
    %v589 = vpop.permute.xlu0 %588
    %590 = vrot.lane.b32.xlu0 %v152, 1
    %v591 = vpop.permute.xlu0 %590
    %v592 = vsel %vm551, %v589, %v591
    %v593 = vsel %vm551, %v591, %v589
    %v594 = vmul.f32 %v593, %v557
    %v595 = vmul.f32 %v592, %v561
    %s596 = sld [smem:[#allocation8 + $0xc]]
    %v597 = vstv %s596
    %v598 = vmul.f32 %v597, %v594
    %v599 = vmul.f32 %v597, %v595
    %v600 = vadd.f32 %v568, %v598
    %v601 = vadd.f32 %v569, %v599
    %s602 = sld [smem:[#allocation8 + $0x30]]
    %v603 = vstv %s602
    %v604 = vmul.f32 %v603, %v594
    %v605 = vmul.f32 %v603, %v595
    %v606 = vadd.f32 %v574, %v604
    %v607 = vadd.f32 %v575, %v605
    %s608 = sld [smem:[#allocation8 + $0x54]]
    %v609 = vstv %s608
    %v610 = vmul.f32 %v609, %v594
    %v611 = vmul.f32 %v609, %v595
    %v612 = vadd.f32 %v580, %v610
    %v613 = vadd.f32 %v581, %v611
    %s614 = sld [smem:[#allocation8 + $0x78]]
    %v615 = vstv %s614
    %v616 = vmul.f32 %v615, %v594
    %v617 = vmul.f32 %v615, %v595
    %v618 = vadd.f32 %v586, %v616
    %v619 = vadd.f32 %v587, %v617
    %620 = vrot.lane.b32.xlu0 %v194, 1
    %v621 = vpop.permute.xlu0 %620
    %622 = vrot.lane.b32.xlu0 %v195, 1
    %v623 = vpop.permute.xlu0 %622
    %v624 = vsel %vm551, %v621, %v623
    %v625 = vsel %vm551, %v623, %v621
    %v626 = vmul.f32 %v625, %v557
    %v627 = vmul.f32 %v624, %v561
    %s628 = sld [smem:[#allocation8 + $0x15]]
    %v629 = vstv %s628
    %v630 = vmul.f32 %v629, %v626
    %v631 = vmul.f32 %v629, %v627
    %v632 = vadd.f32 %v600, %v630
    %v633 = vadd.f32 %v601, %v631
    %s634 = sld [smem:[#allocation8 + $0x39]]
    %v635 = vstv %s634
    %v636 = vmul.f32 %v635, %v626
    %v637 = vmul.f32 %v635, %v627
    %v638 = vadd.f32 %v606, %v636
    %v639 = vadd.f32 %v607, %v637
    %s640 = sld [smem:[#allocation8 + $0x5d]]
    %v641 = vstv %s640
    %v642 = vmul.f32 %v641, %v626
    %v643 = vmul.f32 %v641, %v627
    %v644 = vadd.f32 %v612, %v642
    %v645 = vadd.f32 %v613, %v643
    %s646 = sld [smem:[#allocation8 + $0x81]]
    %v647 = vstv %s646
    %v648 = vmul.f32 %v647, %v626
    %v649 = vmul.f32 %v647, %v627
    %v650 = vadd.f32 %v618, %v648
    %v651 = vadd.f32 %v619, %v649
    %652 = vrot.lane.b32.xlu0 %v237, 1
    %v653 = vpop.permute.xlu0 %652
    %654 = vrot.lane.b32.xlu0 %v238, 1
    %v655 = vpop.permute.xlu0 %654
    %v656 = vsel %vm551, %v653, %v655
    %v657 = vsel %vm551, %v655, %v653
    %v658 = vmul.f32 %v657, %v557
    %v659 = vmul.f32 %v656, %v561
    %s660 = sld [smem:[#allocation8 + $0x1e]]
    %v661 = vstv %s660
    %v662 = vmul.f32 %v661, %v658
    %v663 = vmul.f32 %v661, %v659
    %v664 = vadd.f32 %v632, %v662
    %v665 = vadd.f32 %v633, %v663
    %s666 = sld [smem:[#allocation8 + $0x42]]
    %v667 = vstv %s666
    %v668 = vmul.f32 %v667, %v658
    %v669 = vmul.f32 %v667, %v659
    %v670 = vadd.f32 %v638, %v668
    %v671 = vadd.f32 %v639, %v669
    %s672 = sld [smem:[#allocation8 + $0x66]]
    %v673 = vstv %s672
    %v674 = vmul.f32 %v673, %v658
    %v675 = vmul.f32 %v673, %v659
    %v676 = vadd.f32 %v644, %v674
    %v677 = vadd.f32 %v645, %v675
    %s678 = sld [smem:[#allocation8 + $0x8a]]
    %v679 = vstv %s678
    %v680 = vmul.f32 %v679, %v658
    %v681 = vmul.f32 %v679, %v659
    %v682 = vadd.f32 %v650, %v680
    %v683 = vadd.f32 %v651, %v681
    %s684 = sld [smem:[#allocation8 + $0x4]]
    %v685 = vstv %s684
    %v686 = vmul.f32 %v685, %v91
    %v689 = vunpack.c.l.s4 1983009808
    %v690 = vunpack.c.0.s8 %v689
    %v691 = vlaneseq
    %v692 = vshrl.u32 %v691, 7
    %v693 = vsub.s32 %v690, %v692
    %v694 = vrot.slane %v686, %v693
    %v695 = vcombine.high %v694, %v694
    %v698 = vadd.f32 %v664, %v694
    %v699 = vadd.f32 %v665, %v695
    %s700 = sld [smem:[#allocation8 + $0x28]]
    %v701 = vstv %s700
    %v702 = vmul.f32 %v701, %v91
    %v705 = vunpack.c.l.s4 1983009808
    %v706 = vunpack.c.0.s8 %v705
    %v707 = vlaneseq
    %v708 = vshrl.u32 %v707, 7
    %v709 = vsub.s32 %v706, %v708
    %v710 = vrot.slane %v702, %v709
    %v711 = vcombine.high %v710, %v710
    %v714 = vadd.f32 %v670, %v710
    %v715 = vadd.f32 %v671, %v711
    %s716 = sld [smem:[#allocation8 + $0x4c]]
    %v717 = vstv %s716
    %v718 = vmul.f32 %v717, %v91
    %v721 = vunpack.c.l.s4 1983009808
    %v722 = vunpack.c.0.s8 %v721
    %v723 = vlaneseq
    %v724 = vshrl.u32 %v723, 7
    %v725 = vsub.s32 %v722, %v724
    %v726 = vrot.slane %v718, %v725
    %v727 = vcombine.high %v726, %v726
    %v730 = vadd.f32 %v676, %v726
    %v731 = vadd.f32 %v677, %v727
    %s732 = sld [smem:[#allocation8 + $0x70]]
    %v733 = vstv %s732
    %v734 = vmul.f32 %v733, %v91
    %v737 = vunpack.c.l.s4 1983009808
    %v738 = vunpack.c.0.s8 %v737
    %v739 = vlaneseq
    %v740 = vshrl.u32 %v739, 7
    %v741 = vsub.s32 %v738, %v740
    %v742 = vrot.slane %v734, %v741
    %v743 = vcombine.high %v742, %v742
    %v746 = vadd.f32 %v682, %v742
    %v747 = vadd.f32 %v683, %v743
    %s748 = sld [smem:[#allocation8 + $0xd]]
    %v749 = vstv %s748
    %v750 = vmul.f32 %v749, %v93
    %v753 = vunpack.c.l.s4 1983009808
    %v754 = vunpack.c.0.s8 %v753
    %v755 = vlaneseq
    %v756 = vshrl.u32 %v755, 7
    %v757 = vsub.s32 %v754, %v756
    %v758 = vrot.slane %v750, %v757
    %v759 = vcombine.high %v758, %v758
    %v762 = vadd.f32 %v698, %v758
    %v763 = vadd.f32 %v699, %v759
    %s764 = sld [smem:[#allocation8 + $0x31]]
    %v765 = vstv %s764
    %v766 = vmul.f32 %v765, %v93
    %v769 = vunpack.c.l.s4 1983009808
    %v770 = vunpack.c.0.s8 %v769
    %v771 = vlaneseq
    %v772 = vshrl.u32 %v771, 7
    %v773 = vsub.s32 %v770, %v772
    %v774 = vrot.slane %v766, %v773
    %v775 = vcombine.high %v774, %v774
    %v778 = vadd.f32 %v714, %v774
    %v779 = vadd.f32 %v715, %v775
    %s780 = sld [smem:[#allocation8 + $0x55]]
    %v781 = vstv %s780
    %v782 = vmul.f32 %v781, %v93
    %v785 = vunpack.c.l.s4 1983009808
    %v786 = vunpack.c.0.s8 %v785
    %v787 = vlaneseq
    %v788 = vshrl.u32 %v787, 7
    %v789 = vsub.s32 %v786, %v788
    %v790 = vrot.slane %v782, %v789
    %v791 = vcombine.high %v790, %v790
    %v794 = vadd.f32 %v730, %v790
    %v795 = vadd.f32 %v731, %v791
    %s796 = sld [smem:[#allocation8 + $0x79]]
    %v797 = vstv %s796
    %v798 = vmul.f32 %v797, %v93
    %v801 = vunpack.c.l.s4 1983009808
    %v802 = vunpack.c.0.s8 %v801
    %v803 = vlaneseq
    %v804 = vshrl.u32 %v803, 7
    %v805 = vsub.s32 %v802, %v804
    %v806 = vrot.slane %v798, %v805
    %v807 = vcombine.high %v806, %v806
    %v810 = vadd.f32 %v746, %v806
    %v811 = vadd.f32 %v747, %v807
    %s812 = sld [smem:[#allocation8 + $0x16]]
    %v813 = vstv %s812
    %v814 = vmul.f32 %v813, %v95
    %v817 = vunpack.c.l.s4 1983009808
    %v818 = vunpack.c.0.s8 %v817
    %v819 = vlaneseq
    %v820 = vshrl.u32 %v819, 7
    %v821 = vsub.s32 %v818, %v820
    %v822 = vrot.slane %v814, %v821
    %v823 = vcombine.high %v822, %v822
    %v826 = vadd.f32 %v762, %v822
    %v827 = vadd.f32 %v763, %v823
    %s828 = sld [smem:[#allocation8 + $0x3a]]
    %v829 = vstv %s828
    %v830 = vmul.f32 %v829, %v95
    %v833 = vunpack.c.l.s4 1983009808
    %v834 = vunpack.c.0.s8 %v833
    %v835 = vlaneseq
    %v836 = vshrl.u32 %v835, 7
    %v837 = vsub.s32 %v834, %v836
    %v838 = vrot.slane %v830, %v837
    %v839 = vcombine.high %v838, %v838
    %v842 = vadd.f32 %v778, %v838
    %v843 = vadd.f32 %v779, %v839
    %s844 = sld [smem:[#allocation8 + $0x5e]]
    %v845 = vstv %s844
    %v846 = vmul.f32 %v845, %v95
    %v849 = vunpack.c.l.s4 1983009808
    %v850 = vunpack.c.0.s8 %v849
    %v851 = vlaneseq
    %v852 = vshrl.u32 %v851, 7
    %v853 = vsub.s32 %v850, %v852
    %v854 = vrot.slane %v846, %v853
    %v855 = vcombine.high %v854, %v854
    %v858 = vadd.f32 %v794, %v854
    %v859 = vadd.f32 %v795, %v855
    %s860 = sld [smem:[#allocation8 + $0x82]]
    %v861 = vstv %s860
    %v862 = vmul.f32 %v861, %v95
    %v865 = vunpack.c.l.s4 1983009808
    %v866 = vunpack.c.0.s8 %v865
    %v867 = vlaneseq
    %v868 = vshrl.u32 %v867, 7
    %v869 = vsub.s32 %v866, %v868
    %v870 = vrot.slane %v862, %v869
    %v871 = vcombine.high %v870, %v870
    %v874 = vadd.f32 %v810, %v870
    %v875 = vadd.f32 %v811, %v871
    %s876 = sld [smem:[#allocation8 + $0x1f]]
    %v877 = vstv %s876
    %v878 = vmul.f32 %v877, %v97
    %v881 = vunpack.c.l.s4 1983009808
    %v882 = vunpack.c.0.s8 %v881
    %v883 = vlaneseq
    %v884 = vshrl.u32 %v883, 7
    %v885 = vsub.s32 %v882, %v884
    %v886 = vrot.slane %v878, %v885
    %v887 = vcombine.high %v886, %v886
    %v890 = vadd.f32 %v826, %v886
    %v891 = vadd.f32 %v827, %v887
    %s892 = sld [smem:[#allocation8 + $0x43]]
    %v893 = vstv %s892
    %v894 = vmul.f32 %v893, %v97
    %v897 = vunpack.c.l.s4 1983009808
    %v898 = vunpack.c.0.s8 %v897
    %v899 = vlaneseq
    %v900 = vshrl.u32 %v899, 7
    %v901 = vsub.s32 %v898, %v900
    %v902 = vrot.slane %v894, %v901
    %v903 = vcombine.high %v902, %v902
    %v906 = vadd.f32 %v842, %v902
    %v907 = vadd.f32 %v843, %v903
    %s908 = sld [smem:[#allocation8 + $0x67]]
    %v909 = vstv %s908
    %v910 = vmul.f32 %v909, %v97
    %v913 = vunpack.c.l.s4 1983009808
    %v914 = vunpack.c.0.s8 %v913
    %v915 = vlaneseq
    %v916 = vshrl.u32 %v915, 7
    %v917 = vsub.s32 %v914, %v916
    %v918 = vrot.slane %v910, %v917
    %v919 = vcombine.high %v918, %v918
    %v922 = vadd.f32 %v858, %v918
    %v923 = vadd.f32 %v859, %v919
    %s924 = sld [smem:[#allocation8 + $0x8b]]
    %v925 = vstv %s924
    %v926 = vmul.f32 %v925, %v97
    %v929 = vunpack.c.l.s4 1983009808
    %v930 = vunpack.c.0.s8 %v929
    %v931 = vlaneseq
    %v932 = vshrl.u32 %v931, 7
    %v933 = vsub.s32 %v930, %v932
    %v934 = vrot.slane %v926, %v933
    %v935 = vcombine.high %v934, %v934
    %v938 = vadd.f32 %v874, %v934
    %v939 = vadd.f32 %v875, %v935
    %940 = vrot.lane.b32.xlu0 %v105, 127
    %v941 = vpop.permute.xlu0 %940
    %942 = vrot.lane.b32.xlu0 %v106, 127
    %v943 = vpop.permute.xlu0 %942
    %vm944 = vcmp.lt.s32.totalorder %v114, 127
    %v945 = vsel %vm944, %v941, %v943
    %v946 = vsel %vm944, %v943, %v941
    %v947 = vlaneseq
    %v948 = vshrl.u32 %v947, 7
    %v949 = vsub.s32 5, %v948
    %v950 = vrot.slane %v83, %v949
    %v951 = vlaneseq
    %v952 = vshrl.u32 %v951, 7
    %v953 = vsub.s32 5, %v952
    %v954 = vrot.slane %v84, %v953
    %v955 = vmul.f32 %v945, %v950
    %v956 = vmul.f32 %v946, %v954
    %s957 = sld [smem:[#allocation8 + $0x5]]
    %v958 = vstv %s957
    %v959 = vmul.f32 %v958, %v955
    %v960 = vmul.f32 %v958, %v956
    %v961 = vadd.f32 %v890, %v959
    %v962 = vadd.f32 %v891, %v960
    %s963 = sld [smem:[#allocation8 + $0x29]]
    %v964 = vstv %s963
    %v965 = vmul.f32 %v964, %v955
    %v966 = vmul.f32 %v964, %v956
    %v967 = vadd.f32 %v906, %v965
    %v968 = vadd.f32 %v907, %v966
    %s969 = sld [smem:[#allocation8 + $0x4d]]
    %v970 = vstv %s969
    %v971 = vmul.f32 %v970, %v955
    %v972 = vmul.f32 %v970, %v956
    %v973 = vadd.f32 %v922, %v971
    %v974 = vadd.f32 %v923, %v972
    %s975 = sld [smem:[#allocation8 + $0x71]]
    %v976 = vstv %s975
    %v977 = vmul.f32 %v976, %v955
    %v978 = vmul.f32 %v976, %v956
    %v979 = vadd.f32 %v938, %v977
    %v980 = vadd.f32 %v939, %v978
    %981 = vrot.lane.b32.xlu0 %v151, 127
    %v982 = vpop.permute.xlu0 %981
    %983 = vrot.lane.b32.xlu0 %v152, 127
    %v984 = vpop.permute.xlu0 %983
    %v985 = vsel %vm944, %v982, %v984
    %v986 = vsel %vm944, %v984, %v982
    %v987 = vmul.f32 %v985, %v950
    %v988 = vmul.f32 %v986, %v954
    %s989 = sld [smem:[#allocation8 + $0xe]]
    %v990 = vstv %s989
    %v991 = vmul.f32 %v990, %v987
    %v992 = vmul.f32 %v990, %v988
    %v993 = vadd.f32 %v961, %v991
    %v994 = vadd.f32 %v962, %v992
    %s995 = sld [smem:[#allocation8 + $0x32]]
    %v996 = vstv %s995
    %v997 = vmul.f32 %v996, %v987
    %v998 = vmul.f32 %v996, %v988
    %v999 = vadd.f32 %v967, %v997
    %v1000 = vadd.f32 %v968, %v998
    %s1001 = sld [smem:[#allocation8 + $0x56]]
    %v1002 = vstv %s1001
    %v1003 = vmul.f32 %v1002, %v987
    %v1004 = vmul.f32 %v1002, %v988
    %v1005 = vadd.f32 %v973, %v1003
    %v1006 = vadd.f32 %v974, %v1004
    %s1007 = sld [smem:[#allocation8 + $0x7a]]
    %v1008 = vstv %s1007
    %v1009 = vmul.f32 %v1008, %v987
    %v1010 = vmul.f32 %v1008, %v988
    %v1011 = vadd.f32 %v979, %v1009
    %v1012 = vadd.f32 %v980, %v1010
    %1013 = vrot.lane.b32.xlu0 %v194, 127
    %v1014 = vpop.permute.xlu0 %1013
    %1015 = vrot.lane.b32.xlu0 %v195, 127
    %v1016 = vpop.permute.xlu0 %1015
    %v1017 = vsel %vm944, %v1014, %v1016
    %v1018 = vsel %vm944, %v1016, %v1014
    %v1019 = vmul.f32 %v1017, %v950
    %v1020 = vmul.f32 %v1018, %v954
    %s1021 = sld [smem:[#allocation8 + $0x17]]
    %v1022 = vstv %s1021
    %v1023 = vmul.f32 %v1022, %v1019
    %v1024 = vmul.f32 %v1022, %v1020
    %v1025 = vadd.f32 %v993, %v1023
    %v1026 = vadd.f32 %v994, %v1024
    %s1027 = sld [smem:[#allocation8 + $0x3b]]
    %v1028 = vstv %s1027
    %v1029 = vmul.f32 %v1028, %v1019
    %v1030 = vmul.f32 %v1028, %v1020
    %v1031 = vadd.f32 %v999, %v1029
    %v1032 = vadd.f32 %v1000, %v1030
    %s1033 = sld [smem:[#allocation8 + $0x5f]]
    %v1034 = vstv %s1033
    %v1035 = vmul.f32 %v1034, %v1019
    %v1036 = vmul.f32 %v1034, %v1020
    %v1037 = vadd.f32 %v1005, %v1035
    %v1038 = vadd.f32 %v1006, %v1036
    %s1039 = sld [smem:[#allocation8 + $0x83]]
    %v1040 = vstv %s1039
    %v1041 = vmul.f32 %v1040, %v1019
    %v1042 = vmul.f32 %v1040, %v1020
    %v1043 = vadd.f32 %v1011, %v1041
    %v1044 = vadd.f32 %v1012, %v1042
    %1045 = vrot.lane.b32.xlu0 %v237, 127
    %v1046 = vpop.permute.xlu0 %1045
    %1047 = vrot.lane.b32.xlu0 %v238, 127
    %v1048 = vpop.permute.xlu0 %1047
    %v1049 = vsel %vm944, %v1046, %v1048
    %v1050 = vsel %vm944, %v1048, %v1046
    %v1051 = vmul.f32 %v1049, %v950
    %v1052 = vmul.f32 %v1050, %v954
    %s1053 = sld [smem:[#allocation8 + $0x20]]
    %v1054 = vstv %s1053
    %v1055 = vmul.f32 %v1054, %v1051
    %v1056 = vmul.f32 %v1054, %v1052
    %v1057 = vadd.f32 %v1025, %v1055
    %v1058 = vadd.f32 %v1026, %v1056
    %s1059 = sld [smem:[#allocation8 + $0x44]]
    %v1060 = vstv %s1059
    %v1061 = vmul.f32 %v1060, %v1051
    %v1062 = vmul.f32 %v1060, %v1052
    %v1063 = vadd.f32 %v1031, %v1061
    %v1064 = vadd.f32 %v1032, %v1062
    %s1065 = sld [smem:[#allocation8 + $0x68]]
    %v1066 = vstv %s1065
    %v1067 = vmul.f32 %v1066, %v1051
    %v1068 = vmul.f32 %v1066, %v1052
    %v1069 = vadd.f32 %v1037, %v1067
    %v1070 = vadd.f32 %v1038, %v1068
    %s1071 = sld [smem:[#allocation8 + $0x8c]]
    %v1072 = vstv %s1071
    %v1073 = vmul.f32 %v1072, %v1051
    %v1074 = vmul.f32 %v1072, %v1052
    %v1075 = vadd.f32 %v1043, %v1073
    %v1076 = vadd.f32 %v1044, %v1074
    %1077 = vrot.lane.b32.xlu0 %v105, 113
    %v1078 = vpop.permute.xlu0 %1077
    %1079 = vrot.lane.b32.xlu0 %v106, 113
    %v1080 = vpop.permute.xlu0 %1079
    %vm1081 = vcmp.lt.s32.totalorder %v114, 113
    %v1082 = vsel %vm1081, %v1078, %v1080
    %v1083 = vsel %vm1081, %v1080, %v1078
    %v1084 = vlaneseq
    %v1085 = vshrl.u32 %v1084, 7
    %v1086 = vsub.s32 6, %v1085
    %v1087 = vrot.slane %v83, %v1086
    %v1088 = vlaneseq
    %v1089 = vshrl.u32 %v1088, 7
    %v1090 = vsub.s32 6, %v1089
    %v1091 = vrot.slane %v84, %v1090
    %v1092 = vmul.f32 %v1082, %v1087
    %v1093 = vmul.f32 %v1083, %v1091
    %s1094 = sld [smem:[#allocation8 + $0x6]]
    %v1095 = vstv %s1094
    %v1096 = vmul.f32 %v1095, %v1092
    %v1097 = vmul.f32 %v1095, %v1093
    %v1098 = vadd.f32 %v1057, %v1096
    %v1099 = vadd.f32 %v1058, %v1097
    %s1100 = sld [smem:[#allocation8 + $0x2a]]
    %v1101 = vstv %s1100
    %v1102 = vmul.f32 %v1101, %v1092
    %v1103 = vmul.f32 %v1101, %v1093
    %v1104 = vadd.f32 %v1063, %v1102
    %v1105 = vadd.f32 %v1064, %v1103
    %s1106 = sld [smem:[#allocation8 + $0x4e]]
    %v1107 = vstv %s1106
    %v1108 = vmul.f32 %v1107, %v1092
    %v1109 = vmul.f32 %v1107, %v1093
    %v1110 = vadd.f32 %v1069, %v1108
    %v1111 = vadd.f32 %v1070, %v1109
    %s1112 = sld [smem:[#allocation8 + $0x72]]
    %v1113 = vstv %s1112
    %v1114 = vmul.f32 %v1113, %v1092
    %v1115 = vmul.f32 %v1113, %v1093
    %v1116 = vadd.f32 %v1075, %v1114
    %v1117 = vadd.f32 %v1076, %v1115
    %1118 = vrot.lane.b32.xlu0 %v151, 113
    %v1119 = vpop.permute.xlu0 %1118
    %1120 = vrot.lane.b32.xlu0 %v152, 113
    %v1121 = vpop.permute.xlu0 %1120
    %v1122 = vsel %vm1081, %v1119, %v1121
    %v1123 = vsel %vm1081, %v1121, %v1119
    %v1124 = vmul.f32 %v1122, %v1087
    %v1125 = vmul.f32 %v1123, %v1091
    %s1126 = sld [smem:[#allocation8 + $0xf]]
    %v1127 = vstv %s1126
    %v1128 = vmul.f32 %v1127, %v1124
    %v1129 = vmul.f32 %v1127, %v1125
    %v1130 = vadd.f32 %v1098, %v1128
    %v1131 = vadd.f32 %v1099, %v1129
    %s1132 = sld [smem:[#allocation8 + $0x33]]
    %v1133 = vstv %s1132
    %v1134 = vmul.f32 %v1133, %v1124
    %v1135 = vmul.f32 %v1133, %v1125
    %v1136 = vadd.f32 %v1104, %v1134
    %v1137 = vadd.f32 %v1105, %v1135
    %s1138 = sld [smem:[#allocation8 + $0x57]]
    %v1139 = vstv %s1138
    %v1140 = vmul.f32 %v1139, %v1124
    %v1141 = vmul.f32 %v1139, %v1125
    %v1142 = vadd.f32 %v1110, %v1140
    %v1143 = vadd.f32 %v1111, %v1141
    %s1144 = sld [smem:[#allocation8 + $0x7b]]
    %v1145 = vstv %s1144
    %v1146 = vmul.f32 %v1145, %v1124
    %v1147 = vmul.f32 %v1145, %v1125
    %v1148 = vadd.f32 %v1116, %v1146
    %v1149 = vadd.f32 %v1117, %v1147
    %1150 = vrot.lane.b32.xlu0 %v194, 113
    %v1151 = vpop.permute.xlu0 %1150
    %1152 = vrot.lane.b32.xlu0 %v195, 113
    %v1153 = vpop.permute.xlu0 %1152
    %v1154 = vsel %vm1081, %v1151, %v1153
    %v1155 = vsel %vm1081, %v1153, %v1151
    %v1156 = vmul.f32 %v1154, %v1087
    %v1157 = vmul.f32 %v1155, %v1091
    %s1158 = sld [smem:[#allocation8 + $0x18]]
    %v1159 = vstv %s1158
    %v1160 = vmul.f32 %v1159, %v1156
    %v1161 = vmul.f32 %v1159, %v1157
    %v1162 = vadd.f32 %v1130, %v1160
    %v1163 = vadd.f32 %v1131, %v1161
    %s1164 = sld [smem:[#allocation8 + $0x3c]]
    %v1165 = vstv %s1164
    %v1166 = vmul.f32 %v1165, %v1156
    %v1167 = vmul.f32 %v1165, %v1157
    %v1168 = vadd.f32 %v1136, %v1166
    %v1169 = vadd.f32 %v1137, %v1167
    %s1170 = sld [smem:[#allocation8 + $0x60]]
    %v1171 = vstv %s1170
    %v1172 = vmul.f32 %v1171, %v1156
    %v1173 = vmul.f32 %v1171, %v1157
    %v1174 = vadd.f32 %v1142, %v1172
    %v1175 = vadd.f32 %v1143, %v1173
    %s1176 = sld [smem:[#allocation8 + $0x84]]
    %v1177 = vstv %s1176
    %v1178 = vmul.f32 %v1177, %v1156
    %v1179 = vmul.f32 %v1177, %v1157
    %v1180 = vadd.f32 %v1148, %v1178
    %v1181 = vadd.f32 %v1149, %v1179
    %1182 = vrot.lane.b32.xlu0 %v237, 113
    %v1183 = vpop.permute.xlu0 %1182
    %1184 = vrot.lane.b32.xlu0 %v238, 113
    %v1185 = vpop.permute.xlu0 %1184
    %v1186 = vsel %vm1081, %v1183, %v1185
    %v1187 = vsel %vm1081, %v1185, %v1183
    %v1188 = vmul.f32 %v1186, %v1087
    %v1189 = vmul.f32 %v1187, %v1091
    %s1190 = sld [smem:[#allocation8 + $0x21]]
    %v1191 = vstv %s1190
    %v1192 = vmul.f32 %v1191, %v1188
    %v1193 = vmul.f32 %v1191, %v1189
    %v1194 = vadd.f32 %v1162, %v1192
    %v1195 = vadd.f32 %v1163, %v1193
    %s1196 = sld [smem:[#allocation8 + $0x45]]
    %v1197 = vstv %s1196
    %v1198 = vmul.f32 %v1197, %v1188
    %v1199 = vmul.f32 %v1197, %v1189
    %v1200 = vadd.f32 %v1168, %v1198
    %v1201 = vadd.f32 %v1169, %v1199
    %s1202 = sld [smem:[#allocation8 + $0x69]]
    %v1203 = vstv %s1202
    %v1204 = vmul.f32 %v1203, %v1188
    %v1205 = vmul.f32 %v1203, %v1189
    %v1206 = vadd.f32 %v1174, %v1204
    %v1207 = vadd.f32 %v1175, %v1205
    %s1208 = sld [smem:[#allocation8 + $0x8d]]
    %v1209 = vstv %s1208
    %v1210 = vmul.f32 %v1209, %v1188
    %v1211 = vmul.f32 %v1209, %v1189
    %v1212 = vadd.f32 %v1180, %v1210
    %v1213 = vadd.f32 %v1181, %v1211
    %1214 = vrot.lane.b32.xlu0 %v105, 112
    %v1215 = vpop.permute.xlu0 %1214
    %1216 = vrot.lane.b32.xlu0 %v106, 112
    %v1217 = vpop.permute.xlu0 %1216
    %vm1218 = vcmp.lt.s32.totalorder %v114, 112
    %v1219 = vsel %vm1218, %v1215, %v1217
    %v1220 = vsel %vm1218, %v1217, %v1215
    %v1221 = vlaneseq
    %v1222 = vshrl.u32 %v1221, 7
    %v1223 = vsub.s32 7, %v1222
    %v1224 = vrot.slane %v83, %v1223
    %v1225 = vlaneseq
    %v1226 = vshrl.u32 %v1225, 7
    %v1227 = vsub.s32 7, %v1226
    %v1228 = vrot.slane %v84, %v1227
    %v1229 = vmul.f32 %v1219, %v1224
    %v1230 = vmul.f32 %v1220, %v1228
    %s1231 = sld [smem:[#allocation8 + $0x7]]
    %v1232 = vstv %s1231
    %v1233 = vmul.f32 %v1232, %v1229
    %v1234 = vmul.f32 %v1232, %v1230
    %v1235 = vadd.f32 %v1194, %v1233
    %v1236 = vadd.f32 %v1195, %v1234
    %s1237 = sld [smem:[#allocation8 + $0x2b]]
    %v1238 = vstv %s1237
    %v1239 = vmul.f32 %v1238, %v1229
    %v1240 = vmul.f32 %v1238, %v1230
    %v1241 = vadd.f32 %v1200, %v1239
    %v1242 = vadd.f32 %v1201, %v1240
    %s1243 = sld [smem:[#allocation8 + $0x4f]]
    %v1244 = vstv %s1243
    %v1245 = vmul.f32 %v1244, %v1229
    %v1246 = vmul.f32 %v1244, %v1230
    %v1247 = vadd.f32 %v1206, %v1245
    %v1248 = vadd.f32 %v1207, %v1246
    %s1249 = sld [smem:[#allocation8 + $0x73]]
    %v1250 = vstv %s1249
    %v1251 = vmul.f32 %v1250, %v1229
    %v1252 = vmul.f32 %v1250, %v1230
    %v1253 = vadd.f32 %v1212, %v1251
    %v1254 = vadd.f32 %v1213, %v1252
    %1255 = vrot.lane.b32.xlu0 %v151, 112
    %v1256 = vpop.permute.xlu0 %1255
    %1257 = vrot.lane.b32.xlu0 %v152, 112
    %v1258 = vpop.permute.xlu0 %1257
    %v1259 = vsel %vm1218, %v1256, %v1258
    %v1260 = vsel %vm1218, %v1258, %v1256
    %v1261 = vmul.f32 %v1259, %v1224
    %v1262 = vmul.f32 %v1260, %v1228
    %s1263 = sld [smem:[#allocation8 + $0x10]]
    %v1264 = vstv %s1263
    %v1265 = vmul.f32 %v1264, %v1261
    %v1266 = vmul.f32 %v1264, %v1262
    %v1267 = vadd.f32 %v1235, %v1265
    %v1268 = vadd.f32 %v1236, %v1266
    %s1269 = sld [smem:[#allocation8 + $0x34]]
    %v1270 = vstv %s1269
    %v1271 = vmul.f32 %v1270, %v1261
    %v1272 = vmul.f32 %v1270, %v1262
    %v1273 = vadd.f32 %v1241, %v1271
    %v1274 = vadd.f32 %v1242, %v1272
    %s1275 = sld [smem:[#allocation8 + $0x58]]
    %v1276 = vstv %s1275
    %v1277 = vmul.f32 %v1276, %v1261
    %v1278 = vmul.f32 %v1276, %v1262
    %v1279 = vadd.f32 %v1247, %v1277
    %v1280 = vadd.f32 %v1248, %v1278
    %s1281 = sld [smem:[#allocation8 + $0x7c]]
    %v1282 = vstv %s1281
    %v1283 = vmul.f32 %v1282, %v1261
    %v1284 = vmul.f32 %v1282, %v1262
    %v1285 = vadd.f32 %v1253, %v1283
    %v1286 = vadd.f32 %v1254, %v1284
    %1287 = vrot.lane.b32.xlu0 %v194, 112
    %v1288 = vpop.permute.xlu0 %1287
    %1289 = vrot.lane.b32.xlu0 %v195, 112
    %v1290 = vpop.permute.xlu0 %1289
    %v1291 = vsel %vm1218, %v1288, %v1290
    %v1292 = vsel %vm1218, %v1290, %v1288
    %v1293 = vmul.f32 %v1291, %v1224
    %v1294 = vmul.f32 %v1292, %v1228
    %s1295 = sld [smem:[#allocation8 + $0x19]]
    %v1296 = vstv %s1295
    %v1297 = vmul.f32 %v1296, %v1293
    %v1298 = vmul.f32 %v1296, %v1294
    %v1299 = vadd.f32 %v1267, %v1297
    %v1300 = vadd.f32 %v1268, %v1298
    %s1301 = sld [smem:[#allocation8 + $0x3d]]
    %v1302 = vstv %s1301
    %v1303 = vmul.f32 %v1302, %v1293
    %v1304 = vmul.f32 %v1302, %v1294
    %v1305 = vadd.f32 %v1273, %v1303
    %v1306 = vadd.f32 %v1274, %v1304
    %s1307 = sld [smem:[#allocation8 + $0x61]]
    %v1308 = vstv %s1307
    %v1309 = vmul.f32 %v1308, %v1293
    %v1310 = vmul.f32 %v1308, %v1294
    %v1311 = vadd.f32 %v1279, %v1309
    %v1312 = vadd.f32 %v1280, %v1310
    %s1313 = sld [smem:[#allocation8 + $0x85]]
    %v1314 = vstv %s1313
    %v1315 = vmul.f32 %v1314, %v1293
    %v1316 = vmul.f32 %v1314, %v1294
    %v1317 = vadd.f32 %v1285, %v1315
    %v1318 = vadd.f32 %v1286, %v1316
    %1319 = vrot.lane.b32.xlu0 %v237, 112
    %v1320 = vpop.permute.xlu0 %1319
    %1321 = vrot.lane.b32.xlu0 %v238, 112
    %v1322 = vpop.permute.xlu0 %1321
    %v1323 = vsel %vm1218, %v1320, %v1322
    %v1324 = vsel %vm1218, %v1322, %v1320
    %v1325 = vmul.f32 %v1323, %v1224
    %v1326 = vmul.f32 %v1324, %v1228
    %s1327 = sld [smem:[#allocation8 + $0x22]]
    %v1328 = vstv %s1327
    %v1329 = vmul.f32 %v1328, %v1325
    %v1330 = vmul.f32 %v1328, %v1326
    %v1331 = vadd.f32 %v1299, %v1329
    %v1332 = vadd.f32 %v1300, %v1330
    %s1333 = sld [smem:[#allocation8 + $0x46]]
    %v1334 = vstv %s1333
    %v1335 = vmul.f32 %v1334, %v1325
    %v1336 = vmul.f32 %v1334, %v1326
    %v1337 = vadd.f32 %v1305, %v1335
    %v1338 = vadd.f32 %v1306, %v1336
    %s1339 = sld [smem:[#allocation8 + $0x6a]]
    %v1340 = vstv %s1339
    %v1341 = vmul.f32 %v1340, %v1325
    %v1342 = vmul.f32 %v1340, %v1326
    %v1343 = vadd.f32 %v1311, %v1341
    %v1344 = vadd.f32 %v1312, %v1342
    %s1345 = sld [smem:[#allocation8 + $0x8e]]
    %v1346 = vstv %s1345
    %v1347 = vmul.f32 %v1346, %v1325
    %v1348 = vmul.f32 %v1346, %v1326
    %v1349 = vadd.f32 %v1317, %v1347
    %v1350 = vadd.f32 %v1318, %v1348
    %1351 = vrot.lane.b32.xlu0 %v105, 111
    %v1352 = vpop.permute.xlu0 %1351
    %1353 = vrot.lane.b32.xlu0 %v106, 111
    %v1354 = vpop.permute.xlu0 %1353
    %vm1355 = vcmp.lt.s32.totalorder %v114, 111
    %v1356 = vsel %vm1355, %v1352, %v1354
    %v1357 = vsel %vm1355, %v1354, %v1352
    %v1358 = vlaneseq
    %v1359 = vshrl.u32 %v1358, 7
    %v1360 = vsub.s32 0, %v1359
    %v1361 = vrot.slane %v85, %v1360
    %v1362 = vlaneseq
    %v1363 = vshrl.u32 %v1362, 7
    %v1364 = vsub.s32 0, %v1363
    %v1365 = vrot.slane %v86, %v1364
    %v1366 = vmul.f32 %v1356, %v1361
    %v1367 = vmul.f32 %v1357, %v1365
    %s1368 = sld [smem:[#allocation8 + $0x8]]
    %v1369 = vstv %s1368
    %v1370 = vmul.f32 %v1369, %v1366
    %v1371 = vmul.f32 %v1369, %v1367
    %v1372 = vadd.f32 %v1331, %v1370
    %v1373 = vadd.f32 %v1332, %v1371
    %s1374 = sld [smem:[#allocation8 + $0x2c]]
    %v1375 = vstv %s1374
    %v1376 = vmul.f32 %v1375, %v1366
    %v1377 = vmul.f32 %v1375, %v1367
    %v1378 = vadd.f32 %v1337, %v1376
    %v1379 = vadd.f32 %v1338, %v1377
    %s1380 = sld [smem:[#allocation8 + $0x50]]
    %v1381 = vstv %s1380
    %v1382 = vmul.f32 %v1381, %v1366
    %v1383 = vmul.f32 %v1381, %v1367
    %v1384 = vadd.f32 %v1343, %v1382
    %v1385 = vadd.f32 %v1344, %v1383
    %s1386 = sld [smem:[#allocation8 + $0x74]]
    %v1387 = vstv %s1386
    %v1388 = vmul.f32 %v1387, %v1366
    %v1389 = vmul.f32 %v1387, %v1367
    %v1390 = vadd.f32 %v1349, %v1388
    %v1391 = vadd.f32 %v1350, %v1389
    %1392 = vrot.lane.b32.xlu0 %v151, 111
    %v1393 = vpop.permute.xlu0 %1392
    %1394 = vrot.lane.b32.xlu0 %v152, 111
    %v1395 = vpop.permute.xlu0 %1394
    %v1396 = vsel %vm1355, %v1393, %v1395
    %v1397 = vsel %vm1355, %v1395, %v1393
    %v1398 = vmul.f32 %v1396, %v1361
    %v1399 = vmul.f32 %v1397, %v1365
    %s1400 = sld [smem:[#allocation8 + $0x11]]
    %v1401 = vstv %s1400
    %v1402 = vmul.f32 %v1401, %v1398
    %v1403 = vmul.f32 %v1401, %v1399
    %v1404 = vadd.f32 %v1372, %v1402
    %v1405 = vadd.f32 %v1373, %v1403
    %s1406 = sld [smem:[#allocation8 + $0x35]]
    %v1407 = vstv %s1406
    %v1408 = vmul.f32 %v1407, %v1398
    %v1409 = vmul.f32 %v1407, %v1399
    %v1410 = vadd.f32 %v1378, %v1408
    %v1411 = vadd.f32 %v1379, %v1409
    %s1412 = sld [smem:[#allocation8 + $0x59]]
    %v1413 = vstv %s1412
    %v1414 = vmul.f32 %v1413, %v1398
    %v1415 = vmul.f32 %v1413, %v1399
    %v1416 = vadd.f32 %v1384, %v1414
    %v1417 = vadd.f32 %v1385, %v1415
    %s1418 = sld [smem:[#allocation8 + $0x7d]]
    %v1419 = vstv %s1418
    %v1420 = vmul.f32 %v1419, %v1398
    %v1421 = vmul.f32 %v1419, %v1399
    %v1422 = vadd.f32 %v1390, %v1420
    %v1423 = vadd.f32 %v1391, %v1421
    %1424 = vrot.lane.b32.xlu0 %v194, 111
    %v1425 = vpop.permute.xlu0 %1424
    %1426 = vrot.lane.b32.xlu0 %v195, 111
    %v1427 = vpop.permute.xlu0 %1426
    %v1428 = vsel %vm1355, %v1425, %v1427
    %v1429 = vsel %vm1355, %v1427, %v1425
    %v1430 = vmul.f32 %v1428, %v1361
    %v1431 = vmul.f32 %v1429, %v1365
    %s1432 = sld [smem:[#allocation8 + $0x1a]]
    %v1433 = vstv %s1432
    %v1434 = vmul.f32 %v1433, %v1430
    %v1435 = vmul.f32 %v1433, %v1431
    %v1436 = vadd.f32 %v1404, %v1434
    %v1437 = vadd.f32 %v1405, %v1435
    %s1438 = sld [smem:[#allocation8 + $0x3e]]
    %v1439 = vstv %s1438
    %v1440 = vmul.f32 %v1439, %v1430
    %v1441 = vmul.f32 %v1439, %v1431
    %v1442 = vadd.f32 %v1410, %v1440
    %v1443 = vadd.f32 %v1411, %v1441
    %s1444 = sld [smem:[#allocation8 + $0x62]]
    %v1445 = vstv %s1444
    %v1446 = vmul.f32 %v1445, %v1430
    %v1447 = vmul.f32 %v1445, %v1431
    %v1448 = vadd.f32 %v1416, %v1446
    %v1449 = vadd.f32 %v1417, %v1447
    %s1450 = sld [smem:[#allocation8 + $0x86]]
    %v1451 = vstv %s1450
    %v1452 = vmul.f32 %v1451, %v1430
    %v1453 = vmul.f32 %v1451, %v1431
    %v1454 = vadd.f32 %v1422, %v1452
    %v1455 = vadd.f32 %v1423, %v1453
    %1456 = vrot.lane.b32.xlu0 %v237, 111
    %v1457 = vpop.permute.xlu0 %1456
    %1458 = vrot.lane.b32.xlu0 %v238, 111
    %v1459 = vpop.permute.xlu0 %1458
    %v1460 = vsel %vm1355, %v1457, %v1459
    %v1461 = vsel %vm1355, %v1459, %v1457
    %v1462 = vmul.f32 %v1460, %v1361
    %v1463 = vmul.f32 %v1461, %v1365
    %s1464 = sld [smem:[#allocation8 + $0x23]]
    %v1465 = vstv %s1464
    %v1466 = vmul.f32 %v1465, %v1462
    %v1467 = vmul.f32 %v1465, %v1463
    %v1468 = vadd.f32 %v1436, %v1466
    %v1469 = vadd.f32 %v1437, %v1467
    %s1470 = sld [smem:[#allocation8 + $0x47]]
    %v1471 = vstv %s1470
    %v1472 = vmul.f32 %v1471, %v1462
    %v1473 = vmul.f32 %v1471, %v1463
    %v1474 = vadd.f32 %v1442, %v1472
    %v1475 = vadd.f32 %v1443, %v1473
    %s1476 = sld [smem:[#allocation8 + $0x6b]]
    %v1477 = vstv %s1476
    %v1478 = vmul.f32 %v1477, %v1462
    %v1479 = vmul.f32 %v1477, %v1463
    %v1480 = vadd.f32 %v1448, %v1478
    %v1481 = vadd.f32 %v1449, %v1479
    %s1482 = sld [smem:[#allocation8 + $0x8f]]
    %v1483 = vstv %s1482
    %v1484 = vmul.f32 %v1483, %v1462
    %v1485 = vmul.f32 %v1483, %v1463
    %v1486 = vadd.f32 %v1454, %v1484
    %v1487 = vadd.f32 %v1455, %v1485
    %vm1488 = vcmask 1041408
    %v1489 = vsel %vm1488, %v1468, 0.0
    %v1490 = vsel %vm1488, %v1469, 0.0
    %v1491 = vadd.f32 %v1489, %v1490
    %1492 = vadd.xlane.f32.xlu0 %v1491
    %v1493 = vpop.xlane.xlu0 %1492
    %v1494 = vrcp.pop 256.0
    %v1495 = vmul.f32 %v1493, %v1494
    %v1496 = vsub.f32 %v1468, %v1495
    %v1497 = vsub.f32 %v1469, %v1495
    %v1498 = vmul.f32 %v1496, %v1496
    %v1499 = vmul.f32 %v1497, %v1497
    %v1500 = vsel %vm1488, %v1498, 0.0
    %v1501 = vsel %vm1488, %v1499, 0.0
    %v1502 = vadd.f32 %v1500, %v1501
    %1503 = vadd.xlane.f32.xlu0 %v1502
    %v1504 = vpop.xlane.xlu0 %1503
    %v1505 = vmul.f32 %v1504, %v1494
    %v1506 = vadd.f32 %v1505, 1e-05
    %v1507 = vrsqrt.pop %v1506
    %v1508 = vmul.f32 %v1496, %v1507
    %v1509 = vmul.f32 %v1497, %v1507
    %v1511 = vlaneseq
    %v1512 = vshrl.u32 %v1511, 7
    %v1513 = vsub.s32 0, %v1512
    %v1514 = vrot.slane %v87, %v1513
    %v1515 = vlaneseq
    %v1516 = vshrl.u32 %v1515, 7
    %v1517 = vsub.s32 1, %v1516
    %v1518 = vrot.slane %v87, %v1517
    %v1521 = vmul.f32 %v1508, %v1514
    %v1522 = vmul.f32 %v1509, %v1518
    %v1524 = vlaneseq
    %v1525 = vshrl.u32 %v1524, 7
    %v1526 = vsub.s32 0, %v1525
    %v1527 = vrot.slane %v88, %v1526
    %v1528 = vlaneseq
    %v1529 = vshrl.u32 %v1528, 7
    %v1530 = vsub.s32 1, %v1529
    %v1531 = vrot.slane %v88, %v1530
    %v1534 = vadd.f32 %v1521, %v1527
    %v1535 = vadd.f32 %v1522, %v1531
    %v1536 = vmul.f32 %v1534, 0.5
    %v1537 = vmul.f32 %v1535, 0.5
    %v1538 = vmul.f32 %v1534, 0.70710677
    %v1539 = vmul.f32 %v1535, 0.70710677
    %v1540 = vand.u32 2147483647, %v1538
    %v1541 = vand.u32 2147483647, %v1539
    %v1542 = vmul.f32 %v1540, 0.3275911
    %v1543 = vmul.f32 %v1541, 0.3275911
    %v1544 = vadd.f32 %v1542, 1.0
    %v1545 = vadd.f32 %v1543, 1.0
    %v1546 = vrcp.pop %v1544
    %v1547 = vmul.f32 1.0, %v1546
    %v1548 = vrcp.pop %v1545
    %v1549 = vmul.f32 1.0, %v1548
    %v1550 = vmul.f32 %v1547, 1.0614054
    %v1551 = vmul.f32 %v1549, 1.0614054
    %v1552 = vadd.f32 %v1550, -1.4531521
    %v1553 = vadd.f32 %v1551, -1.4531521
    %v1554 = vmul.f32 %v1552, %v1547
    %v1555 = vmul.f32 %v1553, %v1549
    %v1556 = vadd.f32 %v1554, 1.4214138
    %v1557 = vadd.f32 %v1555, 1.4214138
    %v1558 = vmul.f32 %v1556, %v1547
    %v1559 = vmul.f32 %v1557, %v1549
    %v1560 = vadd.f32 %v1558, -0.28449672
    %v1561 = vadd.f32 %v1559, -0.28449672
    %v1562 = vmul.f32 %v1560, %v1547
    %v1563 = vmul.f32 %v1561, %v1549
    %v1564 = vadd.f32 %v1562, 0.2548296
    %v1565 = vadd.f32 %v1563, 0.2548296
    %v1566 = vmul.f32 %v1564, %v1547
    %v1567 = vmul.f32 %v1565, %v1549
    %v1568 = vsub.f32 0.0, %v1540
    %v1569 = vsub.f32 0.0, %v1541
    %v1570 = vmul.f32 %v1568, %v1540
    %v1571 = vmul.f32 %v1569, %v1541
    %v1572 = vmul.f32 %v1570, 1.442695
    %v1573 = vpow.pop %v1572
    %v1574 = vmul.f32 %v1571, 1.442695
    %v1575 = vpow.pop %v1574
    %v1576 = vmul.f32 %v1566, %v1573
    %v1577 = vmul.f32 %v1567, %v1575
    %v1578 = vsub.f32 1.0, %v1576
    %v1579 = vsub.f32 1.0, %v1577
    %vm1580 = vcmp.ge.f32.partialorder %v1538, 0.0
    %vm1581 = vcmp.ge.f32.partialorder %v1539, 0.0
    %v1582 = vsub.f32 0.0, %v1578
    %v1583 = vsub.f32 0.0, %v1579
    %v1584 = vsel %vm1580, %v1578, %v1582
    %v1585 = vsel %vm1581, %v1579, %v1583
    %v1586 = vadd.f32 %v1584, 1.0
    %v1587 = vadd.f32 %v1585, 1.0
    %v1588 = vmul.f32 %v1536, %v1586
    %v1589 = vmul.f32 %v1537, %v1587
    %v1590 = vsel %vm1488, %v1474, 0.0
    %v1591 = vsel %vm1488, %v1475, 0.0
    %v1592 = vadd.f32 %v1590, %v1591
    %1593 = vadd.xlane.f32.xlu0 %v1592
    %v1594 = vpop.xlane.xlu0 %1593
    %v1595 = vmul.f32 %v1594, %v1494
    %v1596 = vsub.f32 %v1474, %v1595
    %v1597 = vsub.f32 %v1475, %v1595
    %v1598 = vmul.f32 %v1596, %v1596
    %v1599 = vmul.f32 %v1597, %v1597
    %v1600 = vsel %vm1488, %v1598, 0.0
    %v1601 = vsel %vm1488, %v1599, 0.0
    %v1602 = vadd.f32 %v1600, %v1601
    %1603 = vadd.xlane.f32.xlu0 %v1602
    %v1604 = vpop.xlane.xlu0 %1603
    %v1605 = vmul.f32 %v1604, %v1494
    %v1606 = vadd.f32 %v1605, 1e-05
    %v1607 = vrsqrt.pop %v1606
    %v1608 = vmul.f32 %v1596, %v1607
    %v1609 = vmul.f32 %v1597, %v1607
    %v1610 = vmul.f32 %v1608, %v1514
    %v1611 = vmul.f32 %v1609, %v1518
    %v1612 = vadd.f32 %v1610, %v1527
    %v1613 = vadd.f32 %v1611, %v1531
    %v1614 = vmul.f32 %v1612, 0.5
    %v1615 = vmul.f32 %v1613, 0.5
    %v1616 = vmul.f32 %v1612, 0.70710677
    %v1617 = vmul.f32 %v1613, 0.70710677
    %v1618 = vand.u32 2147483647, %v1616
    %v1619 = vand.u32 2147483647, %v1617
    %v1620 = vmul.f32 %v1618, 0.3275911
    %v1621 = vmul.f32 %v1619, 0.3275911
    %v1622 = vadd.f32 %v1620, 1.0
    %v1623 = vadd.f32 %v1621, 1.0
    %v1624 = vrcp.pop %v1622
    %v1625 = vmul.f32 1.0, %v1624
    %v1626 = vrcp.pop %v1623
    %v1627 = vmul.f32 1.0, %v1626
    %v1628 = vmul.f32 %v1625, 1.0614054
    %v1629 = vmul.f32 %v1627, 1.0614054
    %v1630 = vadd.f32 %v1628, -1.4531521
    %v1631 = vadd.f32 %v1629, -1.4531521
    %v1632 = vmul.f32 %v1630, %v1625
    %v1633 = vmul.f32 %v1631, %v1627
    %v1634 = vadd.f32 %v1632, 1.4214138
    %v1635 = vadd.f32 %v1633, 1.4214138
    %v1636 = vmul.f32 %v1634, %v1625
    %v1637 = vmul.f32 %v1635, %v1627
    %v1638 = vadd.f32 %v1636, -0.28449672
    %v1639 = vadd.f32 %v1637, -0.28449672
    %v1640 = vmul.f32 %v1638, %v1625
    %v1641 = vmul.f32 %v1639, %v1627
    %v1642 = vadd.f32 %v1640, 0.2548296
    %v1643 = vadd.f32 %v1641, 0.2548296
    %v1644 = vmul.f32 %v1642, %v1625
    %v1645 = vmul.f32 %v1643, %v1627
    %v1646 = vsub.f32 0.0, %v1618
    %v1647 = vsub.f32 0.0, %v1619
    %v1648 = vmul.f32 %v1646, %v1618
    %v1649 = vmul.f32 %v1647, %v1619
    %v1650 = vmul.f32 %v1648, 1.442695
    %v1651 = vpow.pop %v1650
    %v1652 = vmul.f32 %v1649, 1.442695
    %v1653 = vpow.pop %v1652
    %v1654 = vmul.f32 %v1644, %v1651
    %v1655 = vmul.f32 %v1645, %v1653
    %v1656 = vsub.f32 1.0, %v1654
    %v1657 = vsub.f32 1.0, %v1655
    %vm1658 = vcmp.ge.f32.partialorder %v1616, 0.0
    %vm1659 = vcmp.ge.f32.partialorder %v1617, 0.0
    %v1660 = vsub.f32 0.0, %v1656
    %v1661 = vsub.f32 0.0, %v1657
    %v1662 = vsel %vm1658, %v1656, %v1660
    %v1663 = vsel %vm1659, %v1657, %v1661
    %v1664 = vadd.f32 %v1662, 1.0
    %v1665 = vadd.f32 %v1663, 1.0
    %v1666 = vmul.f32 %v1614, %v1664
    %v1667 = vmul.f32 %v1615, %v1665
    %v1668 = vsel %vm1488, %v1480, 0.0
    %v1669 = vsel %vm1488, %v1481, 0.0
    %v1670 = vadd.f32 %v1668, %v1669
    %1671 = vadd.xlane.f32.xlu0 %v1670
    %v1672 = vpop.xlane.xlu0 %1671
    %v1673 = vmul.f32 %v1672, %v1494
    %v1674 = vsub.f32 %v1480, %v1673
    %v1675 = vsub.f32 %v1481, %v1673
    %v1676 = vmul.f32 %v1674, %v1674
    %v1677 = vmul.f32 %v1675, %v1675
    %v1678 = vsel %vm1488, %v1676, 0.0
    %v1679 = vsel %vm1488, %v1677, 0.0
    %v1680 = vadd.f32 %v1678, %v1679
    %1681 = vadd.xlane.f32.xlu0 %v1680
    %v1682 = vpop.xlane.xlu0 %1681
    %v1683 = vmul.f32 %v1682, %v1494
    %v1684 = vadd.f32 %v1683, 1e-05
    %v1685 = vrsqrt.pop %v1684
    %v1686 = vmul.f32 %v1674, %v1685
    %v1687 = vmul.f32 %v1675, %v1685
    %v1688 = vmul.f32 %v1686, %v1514
    %v1689 = vmul.f32 %v1687, %v1518
    %v1690 = vadd.f32 %v1688, %v1527
    %v1691 = vadd.f32 %v1689, %v1531
    %v1692 = vmul.f32 %v1690, 0.5
    %v1693 = vmul.f32 %v1691, 0.5
    %v1694 = vmul.f32 %v1690, 0.70710677
    %v1695 = vmul.f32 %v1691, 0.70710677
    %v1696 = vand.u32 2147483647, %v1694
    %v1697 = vand.u32 2147483647, %v1695
    %v1698 = vmul.f32 %v1696, 0.3275911
    %v1699 = vmul.f32 %v1697, 0.3275911
    %v1700 = vadd.f32 %v1698, 1.0
    %v1701 = vadd.f32 %v1699, 1.0
    %v1702 = vrcp.pop %v1700
    %v1703 = vmul.f32 1.0, %v1702
    %v1704 = vrcp.pop %v1701
    %v1705 = vmul.f32 1.0, %v1704
    %v1706 = vmul.f32 %v1703, 1.0614054
    %v1707 = vmul.f32 %v1705, 1.0614054
    %v1708 = vadd.f32 %v1706, -1.4531521
    %v1709 = vadd.f32 %v1707, -1.4531521
    %v1710 = vmul.f32 %v1708, %v1703
    %v1711 = vmul.f32 %v1709, %v1705
    %v1712 = vadd.f32 %v1710, 1.4214138
    %v1713 = vadd.f32 %v1711, 1.4214138
    %v1714 = vmul.f32 %v1712, %v1703
    %v1715 = vmul.f32 %v1713, %v1705
    %v1716 = vadd.f32 %v1714, -0.28449672
    %v1717 = vadd.f32 %v1715, -0.28449672
    %v1718 = vmul.f32 %v1716, %v1703
    %v1719 = vmul.f32 %v1717, %v1705
    %v1720 = vadd.f32 %v1718, 0.2548296
    %v1721 = vadd.f32 %v1719, 0.2548296
    %v1722 = vmul.f32 %v1720, %v1703
    %v1723 = vmul.f32 %v1721, %v1705
    %v1724 = vsub.f32 0.0, %v1696
    %v1725 = vsub.f32 0.0, %v1697
    %v1726 = vmul.f32 %v1724, %v1696
    %v1727 = vmul.f32 %v1725, %v1697
    %v1728 = vmul.f32 %v1726, 1.442695
    %v1729 = vpow.pop %v1728
    %v1730 = vmul.f32 %v1727, 1.442695
    %v1731 = vpow.pop %v1730
    %v1732 = vmul.f32 %v1722, %v1729
    %v1733 = vmul.f32 %v1723, %v1731
    %v1734 = vsub.f32 1.0, %v1732
    %v1735 = vsub.f32 1.0, %v1733
    %vm1736 = vcmp.ge.f32.partialorder %v1694, 0.0
    %vm1737 = vcmp.ge.f32.partialorder %v1695, 0.0
    %v1738 = vsub.f32 0.0, %v1734
    %v1739 = vsub.f32 0.0, %v1735
    %v1740 = vsel %vm1736, %v1734, %v1738
    %v1741 = vsel %vm1737, %v1735, %v1739
    %v1742 = vadd.f32 %v1740, 1.0
    %v1743 = vadd.f32 %v1741, 1.0
    %v1744 = vmul.f32 %v1692, %v1742
    %v1745 = vmul.f32 %v1693, %v1743
    %v1746 = vsel %vm1488, %v1486, 0.0
    %v1747 = vsel %vm1488, %v1487, 0.0
    %v1748 = vadd.f32 %v1746, %v1747
    %1749 = vadd.xlane.f32.xlu0 %v1748
    %v1750 = vpop.xlane.xlu0 %1749
    %v1751 = vmul.f32 %v1750, %v1494
    %v1752 = vsub.f32 %v1486, %v1751
    %v1753 = vsub.f32 %v1487, %v1751
    %v1754 = vmul.f32 %v1752, %v1752
    %v1755 = vmul.f32 %v1753, %v1753
    %v1756 = vsel %vm1488, %v1754, 0.0
    %v1757 = vsel %vm1488, %v1755, 0.0
    %v1758 = vadd.f32 %v1756, %v1757
    %1759 = vadd.xlane.f32.xlu0 %v1758
    %v1760 = vpop.xlane.xlu0 %1759
    %v1761 = vmul.f32 %v1760, %v1494
    %v1762 = vadd.f32 %v1761, 1e-05
    %v1763 = vrsqrt.pop %v1762
    %v1764 = vmul.f32 %v1752, %v1763
    %v1765 = vmul.f32 %v1753, %v1763
    %v1766 = vmul.f32 %v1764, %v1514
    %v1767 = vmul.f32 %v1765, %v1518
    %v1768 = vadd.f32 %v1766, %v1527
    %v1769 = vadd.f32 %v1767, %v1531
    %v1770 = vmul.f32 %v1768, 0.5
    %v1771 = vmul.f32 %v1769, 0.5
    %v1772 = vmul.f32 %v1768, 0.70710677
    %v1773 = vmul.f32 %v1769, 0.70710677
    %v1774 = vand.u32 2147483647, %v1772
    %v1775 = vand.u32 2147483647, %v1773
    %v1776 = vmul.f32 %v1774, 0.3275911
    %v1777 = vmul.f32 %v1775, 0.3275911
    %v1778 = vadd.f32 %v1776, 1.0
    %v1779 = vadd.f32 %v1777, 1.0
    %v1780 = vrcp.pop %v1778
    %v1781 = vmul.f32 1.0, %v1780
    %v1782 = vrcp.pop %v1779
    %v1783 = vmul.f32 1.0, %v1782
    %v1784 = vmul.f32 %v1781, 1.0614054
    %v1785 = vmul.f32 %v1783, 1.0614054
    %v1786 = vadd.f32 %v1784, -1.4531521
    %v1787 = vadd.f32 %v1785, -1.4531521
    %v1788 = vmul.f32 %v1786, %v1781
    %v1789 = vmul.f32 %v1787, %v1783
    %v1790 = vadd.f32 %v1788, 1.4214138
    %v1791 = vadd.f32 %v1789, 1.4214138
    %v1792 = vmul.f32 %v1790, %v1781
    %v1793 = vmul.f32 %v1791, %v1783
    %v1794 = vadd.f32 %v1792, -0.28449672
    %v1795 = vadd.f32 %v1793, -0.28449672
    %v1796 = vmul.f32 %v1794, %v1781
    %v1797 = vmul.f32 %v1795, %v1783
    %v1798 = vadd.f32 %v1796, 0.2548296
    %v1799 = vadd.f32 %v1797, 0.2548296
    %v1800 = vmul.f32 %v1798, %v1781
    %v1801 = vmul.f32 %v1799, %v1783
    %v1802 = vsub.f32 0.0, %v1774
    %v1803 = vsub.f32 0.0, %v1775
    %v1804 = vmul.f32 %v1802, %v1774
    %v1805 = vmul.f32 %v1803, %v1775
    %v1806 = vmul.f32 %v1804, 1.442695
    %v1807 = vpow.pop %v1806
    %v1808 = vmul.f32 %v1805, 1.442695
    %v1809 = vpow.pop %v1808
    %v1810 = vmul.f32 %v1800, %v1807
    %v1811 = vmul.f32 %v1801, %v1809
    %v1812 = vsub.f32 1.0, %v1810
    %v1813 = vsub.f32 1.0, %v1811
    %vm1814 = vcmp.ge.f32.partialorder %v1772, 0.0
    %vm1815 = vcmp.ge.f32.partialorder %v1773, 0.0
    %v1816 = vsub.f32 0.0, %v1812
    %v1817 = vsub.f32 0.0, %v1813
    %v1818 = vsel %vm1814, %v1812, %v1816
    %v1819 = vsel %vm1815, %v1813, %v1817
    %v1820 = vadd.f32 %v1818, 1.0
    %v1821 = vadd.f32 %v1819, 1.0
    %v1822 = vmul.f32 %v1770, %v1820
    %v1823 = vmul.f32 %v1771, %v1821
    %1824 = vrot.lane.b32.xlu0 %v1588, 17
    %v1825 = vpop.permute.xlu0 %1824
    %1826 = vrot.lane.b32.xlu0 %v1589, 17
    %v1827 = vpop.permute.xlu0 %1826
    %v1828 = vsel %vm115, %v1825, %v1827
    %v1829 = vsel %vm115, %v1827, %v1825
    %v1830 = vmul.f32 %v1829, %v121
    %v1831 = vmul.f32 %v1828, %v125
    %s1832 = sld [smem:[#allocation9]]
    %v1833 = vstv %s1832
    %v1834 = vmul.f32 %v1833, %v1830
    %v1835 = vmul.f32 %v1833, %v1831
    %s1836 = sld [smem:[#allocation9 + $0x24]]
    %v1837 = vstv %s1836
    %v1838 = vmul.f32 %v1837, %v1830
    %v1839 = vmul.f32 %v1837, %v1831
    %s1840 = sld [smem:[#allocation9 + $0x48]]
    %v1841 = vstv %s1840
    %v1842 = vmul.f32 %v1841, %v1830
    %v1843 = vmul.f32 %v1841, %v1831
    %s1844 = sld [smem:[#allocation9 + $0x6c]]
    %v1845 = vstv %s1844
    %v1846 = vmul.f32 %v1845, %v1830
    %v1847 = vmul.f32 %v1845, %v1831
    %1848 = vrot.lane.b32.xlu0 %v1666, 17
    %v1849 = vpop.permute.xlu0 %1848
    %1850 = vrot.lane.b32.xlu0 %v1667, 17
    %v1851 = vpop.permute.xlu0 %1850
    %v1852 = vsel %vm115, %v1849, %v1851
    %v1853 = vsel %vm115, %v1851, %v1849
    %v1854 = vmul.f32 %v1853, %v121
    %v1855 = vmul.f32 %v1852, %v125
    %s1856 = sld [smem:[#allocation9 + $0x9]]
    %v1857 = vstv %s1856
    %v1858 = vmul.f32 %v1857, %v1854
    %v1859 = vmul.f32 %v1857, %v1855
    %v1860 = vadd.f32 %v1834, %v1858
    %v1861 = vadd.f32 %v1835, %v1859
    %s1862 = sld [smem:[#allocation9 + $0x2d]]
    %v1863 = vstv %s1862
    %v1864 = vmul.f32 %v1863, %v1854
    %v1865 = vmul.f32 %v1863, %v1855
    %v1866 = vadd.f32 %v1838, %v1864
    %v1867 = vadd.f32 %v1839, %v1865
    %s1868 = sld [smem:[#allocation9 + $0x51]]
    %v1869 = vstv %s1868
    %v1870 = vmul.f32 %v1869, %v1854
    %v1871 = vmul.f32 %v1869, %v1855
    %v1872 = vadd.f32 %v1842, %v1870
    %v1873 = vadd.f32 %v1843, %v1871
    %s1874 = sld [smem:[#allocation9 + $0x75]]
    %v1875 = vstv %s1874
    %v1876 = vmul.f32 %v1875, %v1854
    %v1877 = vmul.f32 %v1875, %v1855
    %v1878 = vadd.f32 %v1846, %v1876
    %v1879 = vadd.f32 %v1847, %v1877
    %1880 = vrot.lane.b32.xlu0 %v1744, 17
    %v1881 = vpop.permute.xlu0 %1880
    %1882 = vrot.lane.b32.xlu0 %v1745, 17
    %v1883 = vpop.permute.xlu0 %1882
    %v1884 = vsel %vm115, %v1881, %v1883
    %v1885 = vsel %vm115, %v1883, %v1881
    %v1886 = vmul.f32 %v1885, %v121
    %v1887 = vmul.f32 %v1884, %v125
    %s1888 = sld [smem:[#allocation9 + $0x12]]
    %v1889 = vstv %s1888
    %v1890 = vmul.f32 %v1889, %v1886
    %v1891 = vmul.f32 %v1889, %v1887
    %v1892 = vadd.f32 %v1860, %v1890
    %v1893 = vadd.f32 %v1861, %v1891
    %s1894 = sld [smem:[#allocation9 + $0x36]]
    %v1895 = vstv %s1894
    %v1896 = vmul.f32 %v1895, %v1886
    %v1897 = vmul.f32 %v1895, %v1887
    %v1898 = vadd.f32 %v1866, %v1896
    %v1899 = vadd.f32 %v1867, %v1897
    %s1900 = sld [smem:[#allocation9 + $0x5a]]
    %v1901 = vstv %s1900
    %v1902 = vmul.f32 %v1901, %v1886
    %v1903 = vmul.f32 %v1901, %v1887
    %v1904 = vadd.f32 %v1872, %v1902
    %v1905 = vadd.f32 %v1873, %v1903
    %s1906 = sld [smem:[#allocation9 + $0x7e]]
    %v1907 = vstv %s1906
    %v1908 = vmul.f32 %v1907, %v1886
    %v1909 = vmul.f32 %v1907, %v1887
    %v1910 = vadd.f32 %v1878, %v1908
    %v1911 = vadd.f32 %v1879, %v1909
    %1912 = vrot.lane.b32.xlu0 %v1822, 17
    %v1913 = vpop.permute.xlu0 %1912
    %1914 = vrot.lane.b32.xlu0 %v1823, 17
    %v1915 = vpop.permute.xlu0 %1914
    %v1916 = vsel %vm115, %v1913, %v1915
    %v1917 = vsel %vm115, %v1915, %v1913
    %v1918 = vmul.f32 %v1917, %v121
    %v1919 = vmul.f32 %v1916, %v125
    %s1920 = sld [smem:[#allocation9 + $0x1b]]
    %v1921 = vstv %s1920
    %v1922 = vmul.f32 %v1921, %v1918
    %v1923 = vmul.f32 %v1921, %v1919
    %v1924 = vadd.f32 %v1892, %v1922
    %v1925 = vadd.f32 %v1893, %v1923
    %s1926 = sld [smem:[#allocation9 + $0x3f]]
    %v1927 = vstv %s1926
    %v1928 = vmul.f32 %v1927, %v1918
    %v1929 = vmul.f32 %v1927, %v1919
    %v1930 = vadd.f32 %v1898, %v1928
    %v1931 = vadd.f32 %v1899, %v1929
    %s1932 = sld [smem:[#allocation9 + $0x63]]
    %v1933 = vstv %s1932
    %v1934 = vmul.f32 %v1933, %v1918
    %v1935 = vmul.f32 %v1933, %v1919
    %v1936 = vadd.f32 %v1904, %v1934
    %v1937 = vadd.f32 %v1905, %v1935
    %s1938 = sld [smem:[#allocation9 + $0x87]]
    %v1939 = vstv %s1938
    %v1940 = vmul.f32 %v1939, %v1918
    %v1941 = vmul.f32 %v1939, %v1919
    %v1942 = vadd.f32 %v1910, %v1940
    %v1943 = vadd.f32 %v1911, %v1941
    %1944 = vrot.lane.b32.xlu0 %v1588, 16
    %v1945 = vpop.permute.xlu0 %1944
    %1946 = vrot.lane.b32.xlu0 %v1589, 16
    %v1947 = vpop.permute.xlu0 %1946
    %v1948 = vsel %vm277, %v1945, %v1947
    %v1949 = vsel %vm277, %v1947, %v1945
    %v1950 = vmul.f32 %v1949, %v283
    %v1951 = vmul.f32 %v1948, %v287
    %s1952 = sld [smem:[#allocation9 + $0x1]]
    %v1953 = vstv %s1952
    %v1954 = vmul.f32 %v1953, %v1950
    %v1955 = vmul.f32 %v1953, %v1951
    %v1956 = vadd.f32 %v1924, %v1954
    %v1957 = vadd.f32 %v1925, %v1955
    %s1958 = sld [smem:[#allocation9 + $0x25]]
    %v1959 = vstv %s1958
    %v1960 = vmul.f32 %v1959, %v1950
    %v1961 = vmul.f32 %v1959, %v1951
    %v1962 = vadd.f32 %v1930, %v1960
    %v1963 = vadd.f32 %v1931, %v1961
    %s1964 = sld [smem:[#allocation9 + $0x49]]
    %v1965 = vstv %s1964
    %v1966 = vmul.f32 %v1965, %v1950
    %v1967 = vmul.f32 %v1965, %v1951
    %v1968 = vadd.f32 %v1936, %v1966
    %v1969 = vadd.f32 %v1937, %v1967
    %s1970 = sld [smem:[#allocation9 + $0x6d]]
    %v1971 = vstv %s1970
    %v1972 = vmul.f32 %v1971, %v1950
    %v1973 = vmul.f32 %v1971, %v1951
    %v1974 = vadd.f32 %v1942, %v1972
    %v1975 = vadd.f32 %v1943, %v1973
    %1976 = vrot.lane.b32.xlu0 %v1666, 16
    %v1977 = vpop.permute.xlu0 %1976
    %1978 = vrot.lane.b32.xlu0 %v1667, 16
    %v1979 = vpop.permute.xlu0 %1978
    %v1980 = vsel %vm277, %v1977, %v1979
    %v1981 = vsel %vm277, %v1979, %v1977
    %v1982 = vmul.f32 %v1981, %v283
    %v1983 = vmul.f32 %v1980, %v287
    %s1984 = sld [smem:[#allocation9 + $0xa]]
    %v1985 = vstv %s1984
    %v1986 = vmul.f32 %v1985, %v1982
    %v1987 = vmul.f32 %v1985, %v1983
    %v1988 = vadd.f32 %v1956, %v1986
    %v1989 = vadd.f32 %v1957, %v1987
    %s1990 = sld [smem:[#allocation9 + $0x2e]]
    %v1991 = vstv %s1990
    %v1992 = vmul.f32 %v1991, %v1982
    %v1993 = vmul.f32 %v1991, %v1983
    %v1994 = vadd.f32 %v1962, %v1992
    %v1995 = vadd.f32 %v1963, %v1993
    %s1996 = sld [smem:[#allocation9 + $0x52]]
    %v1997 = vstv %s1996
    %v1998 = vmul.f32 %v1997, %v1982
    %v1999 = vmul.f32 %v1997, %v1983
    %v2000 = vadd.f32 %v1968, %v1998
    %v2001 = vadd.f32 %v1969, %v1999
    %s2002 = sld [smem:[#allocation9 + $0x76]]
    %v2003 = vstv %s2002
    %v2004 = vmul.f32 %v2003, %v1982
    %v2005 = vmul.f32 %v2003, %v1983
    %v2006 = vadd.f32 %v1974, %v2004
    %v2007 = vadd.f32 %v1975, %v2005
    %2008 = vrot.lane.b32.xlu0 %v1744, 16
    %v2009 = vpop.permute.xlu0 %2008
    %2010 = vrot.lane.b32.xlu0 %v1745, 16
    %v2011 = vpop.permute.xlu0 %2010
    %v2012 = vsel %vm277, %v2009, %v2011
    %v2013 = vsel %vm277, %v2011, %v2009
    %v2014 = vmul.f32 %v2013, %v283
    %v2015 = vmul.f32 %v2012, %v287
    %s2016 = sld [smem:[#allocation9 + $0x13]]
    %v2017 = vstv %s2016
    %v2018 = vmul.f32 %v2017, %v2014
    %v2019 = vmul.f32 %v2017, %v2015
    %v2020 = vadd.f32 %v1988, %v2018
    %v2021 = vadd.f32 %v1989, %v2019
    %s2022 = sld [smem:[#allocation9 + $0x37]]
    %v2023 = vstv %s2022
    %v2024 = vmul.f32 %v2023, %v2014
    %v2025 = vmul.f32 %v2023, %v2015
    %v2026 = vadd.f32 %v1994, %v2024
    %v2027 = vadd.f32 %v1995, %v2025
    %s2028 = sld [smem:[#allocation9 + $0x5b]]
    %v2029 = vstv %s2028
    %v2030 = vmul.f32 %v2029, %v2014
    %v2031 = vmul.f32 %v2029, %v2015
    %v2032 = vadd.f32 %v2000, %v2030
    %v2033 = vadd.f32 %v2001, %v2031
    %s2034 = sld [smem:[#allocation9 + $0x7f]]
    %v2035 = vstv %s2034
    %v2036 = vmul.f32 %v2035, %v2014
    %v2037 = vmul.f32 %v2035, %v2015
    %v2038 = vadd.f32 %v2006, %v2036
    %v2039 = vadd.f32 %v2007, %v2037
    %2040 = vrot.lane.b32.xlu0 %v1822, 16
    %v2041 = vpop.permute.xlu0 %2040
    %2042 = vrot.lane.b32.xlu0 %v1823, 16
    %v2043 = vpop.permute.xlu0 %2042
    %v2044 = vsel %vm277, %v2041, %v2043
    %v2045 = vsel %vm277, %v2043, %v2041
    %v2046 = vmul.f32 %v2045, %v283
    %v2047 = vmul.f32 %v2044, %v287
    %s2048 = sld [smem:[#allocation9 + $0x1c]]
    %v2049 = vstv %s2048
    %v2050 = vmul.f32 %v2049, %v2046
    %v2051 = vmul.f32 %v2049, %v2047
    %v2052 = vadd.f32 %v2020, %v2050
    %v2053 = vadd.f32 %v2021, %v2051
    %s2054 = sld [smem:[#allocation9 + $0x40]]
    %v2055 = vstv %s2054
    %v2056 = vmul.f32 %v2055, %v2046
    %v2057 = vmul.f32 %v2055, %v2047
    %v2058 = vadd.f32 %v2026, %v2056
    %v2059 = vadd.f32 %v2027, %v2057
    %s2060 = sld [smem:[#allocation9 + $0x64]]
    %v2061 = vstv %s2060
    %v2062 = vmul.f32 %v2061, %v2046
    %v2063 = vmul.f32 %v2061, %v2047
    %v2064 = vadd.f32 %v2032, %v2062
    %v2065 = vadd.f32 %v2033, %v2063
    %s2066 = sld [smem:[#allocation9 + $0x88]]
    %v2067 = vstv %s2066
    %v2068 = vmul.f32 %v2067, %v2046
    %v2069 = vmul.f32 %v2067, %v2047
    %v2070 = vadd.f32 %v2038, %v2068
    %v2071 = vadd.f32 %v2039, %v2069
    %2072 = vrot.lane.b32.xlu0 %v1588, 15
    %v2073 = vpop.permute.xlu0 %2072
    %2074 = vrot.lane.b32.xlu0 %v1589, 15
    %v2075 = vpop.permute.xlu0 %2074
    %v2076 = vsel %vm414, %v2073, %v2075
    %v2077 = vsel %vm414, %v2075, %v2073
    %v2078 = vmul.f32 %v2077, %v420
    %v2079 = vmul.f32 %v2076, %v424
    %s2080 = sld [smem:[#allocation9 + $0x2]]
    %v2081 = vstv %s2080
    %v2082 = vmul.f32 %v2081, %v2078
    %v2083 = vmul.f32 %v2081, %v2079
    %v2084 = vadd.f32 %v2052, %v2082
    %v2085 = vadd.f32 %v2053, %v2083
    %s2086 = sld [smem:[#allocation9 + $0x26]]
    %v2087 = vstv %s2086
    %v2088 = vmul.f32 %v2087, %v2078
    %v2089 = vmul.f32 %v2087, %v2079
    %v2090 = vadd.f32 %v2058, %v2088
    %v2091 = vadd.f32 %v2059, %v2089
    %s2092 = sld [smem:[#allocation9 + $0x4a]]
    %v2093 = vstv %s2092
    %v2094 = vmul.f32 %v2093, %v2078
    %v2095 = vmul.f32 %v2093, %v2079
    %v2096 = vadd.f32 %v2064, %v2094
    %v2097 = vadd.f32 %v2065, %v2095
    %s2098 = sld [smem:[#allocation9 + $0x6e]]
    %v2099 = vstv %s2098
    %v2100 = vmul.f32 %v2099, %v2078
    %v2101 = vmul.f32 %v2099, %v2079
    %v2102 = vadd.f32 %v2070, %v2100
    %v2103 = vadd.f32 %v2071, %v2101
    %2104 = vrot.lane.b32.xlu0 %v1666, 15
    %v2105 = vpop.permute.xlu0 %2104
    %2106 = vrot.lane.b32.xlu0 %v1667, 15
    %v2107 = vpop.permute.xlu0 %2106
    %v2108 = vsel %vm414, %v2105, %v2107
    %v2109 = vsel %vm414, %v2107, %v2105
    %v2110 = vmul.f32 %v2109, %v420
    %v2111 = vmul.f32 %v2108, %v424
    %s2112 = sld [smem:[#allocation9 + $0xb]]
    %v2113 = vstv %s2112
    %v2114 = vmul.f32 %v2113, %v2110
    %v2115 = vmul.f32 %v2113, %v2111
    %v2116 = vadd.f32 %v2084, %v2114
    %v2117 = vadd.f32 %v2085, %v2115
    %s2118 = sld [smem:[#allocation9 + $0x2f]]
    %v2119 = vstv %s2118
    %v2120 = vmul.f32 %v2119, %v2110
    %v2121 = vmul.f32 %v2119, %v2111
    %v2122 = vadd.f32 %v2090, %v2120
    %v2123 = vadd.f32 %v2091, %v2121
    %s2124 = sld [smem:[#allocation9 + $0x53]]
    %v2125 = vstv %s2124
    %v2126 = vmul.f32 %v2125, %v2110
    %v2127 = vmul.f32 %v2125, %v2111
    %v2128 = vadd.f32 %v2096, %v2126
    %v2129 = vadd.f32 %v2097, %v2127
    %s2130 = sld [smem:[#allocation9 + $0x77]]
    %v2131 = vstv %s2130
    %v2132 = vmul.f32 %v2131, %v2110
    %v2133 = vmul.f32 %v2131, %v2111
    %v2134 = vadd.f32 %v2102, %v2132
    %v2135 = vadd.f32 %v2103, %v2133
    %2136 = vrot.lane.b32.xlu0 %v1744, 15
    %v2137 = vpop.permute.xlu0 %2136
    %2138 = vrot.lane.b32.xlu0 %v1745, 15
    %v2139 = vpop.permute.xlu0 %2138
    %v2140 = vsel %vm414, %v2137, %v2139
    %v2141 = vsel %vm414, %v2139, %v2137
    %v2142 = vmul.f32 %v2141, %v420
    %v2143 = vmul.f32 %v2140, %v424
    %s2144 = sld [smem:[#allocation9 + $0x14]]
    %v2145 = vstv %s2144
    %v2146 = vmul.f32 %v2145, %v2142
    %v2147 = vmul.f32 %v2145, %v2143
    %v2148 = vadd.f32 %v2116, %v2146
    %v2149 = vadd.f32 %v2117, %v2147
    %s2150 = sld [smem:[#allocation9 + $0x38]]
    %v2151 = vstv %s2150
    %v2152 = vmul.f32 %v2151, %v2142
    %v2153 = vmul.f32 %v2151, %v2143
    %v2154 = vadd.f32 %v2122, %v2152
    %v2155 = vadd.f32 %v2123, %v2153
    %s2156 = sld [smem:[#allocation9 + $0x5c]]
    %v2157 = vstv %s2156
    %v2158 = vmul.f32 %v2157, %v2142
    %v2159 = vmul.f32 %v2157, %v2143
    %v2160 = vadd.f32 %v2128, %v2158
    %v2161 = vadd.f32 %v2129, %v2159
    %s2162 = sld [smem:[#allocation9 + $0x80]]
    %v2163 = vstv %s2162
    %v2164 = vmul.f32 %v2163, %v2142
    %v2165 = vmul.f32 %v2163, %v2143
    %v2166 = vadd.f32 %v2134, %v2164
    %v2167 = vadd.f32 %v2135, %v2165
    %2168 = vrot.lane.b32.xlu0 %v1822, 15
    %v2169 = vpop.permute.xlu0 %2168
    %2170 = vrot.lane.b32.xlu0 %v1823, 15
    %v2171 = vpop.permute.xlu0 %2170
    %v2172 = vsel %vm414, %v2169, %v2171
    %v2173 = vsel %vm414, %v2171, %v2169
    %v2174 = vmul.f32 %v2173, %v420
    %v2175 = vmul.f32 %v2172, %v424
    %s2176 = sld [smem:[#allocation9 + $0x1d]]
    %v2177 = vstv %s2176
    %v2178 = vmul.f32 %v2177, %v2174
    %v2179 = vmul.f32 %v2177, %v2175
    %v2180 = vadd.f32 %v2148, %v2178
    %v2181 = vadd.f32 %v2149, %v2179
    %s2182 = sld [smem:[#allocation9 + $0x41]]
    %v2183 = vstv %s2182
    %v2184 = vmul.f32 %v2183, %v2174
    %v2185 = vmul.f32 %v2183, %v2175
    %v2186 = vadd.f32 %v2154, %v2184
    %v2187 = vadd.f32 %v2155, %v2185
    %s2188 = sld [smem:[#allocation9 + $0x65]]
    %v2189 = vstv %s2188
    %v2190 = vmul.f32 %v2189, %v2174
    %v2191 = vmul.f32 %v2189, %v2175
    %v2192 = vadd.f32 %v2160, %v2190
    %v2193 = vadd.f32 %v2161, %v2191
    %s2194 = sld [smem:[#allocation9 + $0x89]]
    %v2195 = vstv %s2194
    %v2196 = vmul.f32 %v2195, %v2174
    %v2197 = vmul.f32 %v2195, %v2175
    %v2198 = vadd.f32 %v2166, %v2196
    %v2199 = vadd.f32 %v2167, %v2197
    %2200 = vrot.lane.b32.xlu0 %v1588, 1
    %v2201 = vpop.permute.xlu0 %2200
    %2202 = vrot.lane.b32.xlu0 %v1589, 1
    %v2203 = vpop.permute.xlu0 %2202
    %v2204 = vsel %vm551, %v2201, %v2203
    %v2205 = vsel %vm551, %v2203, %v2201
    %v2206 = vmul.f32 %v2205, %v557
    %v2207 = vmul.f32 %v2204, %v561
    %s2208 = sld [smem:[#allocation9 + $0x3]]
    %v2209 = vstv %s2208
    %v2210 = vmul.f32 %v2209, %v2206
    %v2211 = vmul.f32 %v2209, %v2207
    %v2212 = vadd.f32 %v2180, %v2210
    %v2213 = vadd.f32 %v2181, %v2211
    %s2214 = sld [smem:[#allocation9 + $0x27]]
    %v2215 = vstv %s2214
    %v2216 = vmul.f32 %v2215, %v2206
    %v2217 = vmul.f32 %v2215, %v2207
    %v2218 = vadd.f32 %v2186, %v2216
    %v2219 = vadd.f32 %v2187, %v2217
    %s2220 = sld [smem:[#allocation9 + $0x4b]]
    %v2221 = vstv %s2220
    %v2222 = vmul.f32 %v2221, %v2206
    %v2223 = vmul.f32 %v2221, %v2207
    %v2224 = vadd.f32 %v2192, %v2222
    %v2225 = vadd.f32 %v2193, %v2223
    %s2226 = sld [smem:[#allocation9 + $0x6f]]
    %v2227 = vstv %s2226
    %v2228 = vmul.f32 %v2227, %v2206
    %v2229 = vmul.f32 %v2227, %v2207
    %v2230 = vadd.f32 %v2198, %v2228
    %v2231 = vadd.f32 %v2199, %v2229
    %2232 = vrot.lane.b32.xlu0 %v1666, 1
    %v2233 = vpop.permute.xlu0 %2232
    %2234 = vrot.lane.b32.xlu0 %v1667, 1
    %v2235 = vpop.permute.xlu0 %2234
    %v2236 = vsel %vm551, %v2233, %v2235
    %v2237 = vsel %vm551, %v2235, %v2233
    %v2238 = vmul.f32 %v2237, %v557
    %v2239 = vmul.f32 %v2236, %v561
    %s2240 = sld [smem:[#allocation9 + $0xc]]
    %v2241 = vstv %s2240
    %v2242 = vmul.f32 %v2241, %v2238
    %v2243 = vmul.f32 %v2241, %v2239
    %v2244 = vadd.f32 %v2212, %v2242
    %v2245 = vadd.f32 %v2213, %v2243
    %s2246 = sld [smem:[#allocation9 + $0x30]]
    %v2247 = vstv %s2246
    %v2248 = vmul.f32 %v2247, %v2238
    %v2249 = vmul.f32 %v2247, %v2239
    %v2250 = vadd.f32 %v2218, %v2248
    %v2251 = vadd.f32 %v2219, %v2249
    %s2252 = sld [smem:[#allocation9 + $0x54]]
    %v2253 = vstv %s2252
    %v2254 = vmul.f32 %v2253, %v2238
    %v2255 = vmul.f32 %v2253, %v2239
    %v2256 = vadd.f32 %v2224, %v2254
    %v2257 = vadd.f32 %v2225, %v2255
    %s2258 = sld [smem:[#allocation9 + $0x78]]
    %v2259 = vstv %s2258
    %v2260 = vmul.f32 %v2259, %v2238
    %v2261 = vmul.f32 %v2259, %v2239
    %v2262 = vadd.f32 %v2230, %v2260
    %v2263 = vadd.f32 %v2231, %v2261
    %2264 = vrot.lane.b32.xlu0 %v1744, 1
    %v2265 = vpop.permute.xlu0 %2264
    %2266 = vrot.lane.b32.xlu0 %v1745, 1
    %v2267 = vpop.permute.xlu0 %2266
    %v2268 = vsel %vm551, %v2265, %v2267
    %v2269 = vsel %vm551, %v2267, %v2265
    %v2270 = vmul.f32 %v2269, %v557
    %v2271 = vmul.f32 %v2268, %v561
    %s2272 = sld [smem:[#allocation9 + $0x15]]
    %v2273 = vstv %s2272
    %v2274 = vmul.f32 %v2273, %v2270
    %v2275 = vmul.f32 %v2273, %v2271
    %v2276 = vadd.f32 %v2244, %v2274
    %v2277 = vadd.f32 %v2245, %v2275
    %s2278 = sld [smem:[#allocation9 + $0x39]]
    %v2279 = vstv %s2278
    %v2280 = vmul.f32 %v2279, %v2270
    %v2281 = vmul.f32 %v2279, %v2271
    %v2282 = vadd.f32 %v2250, %v2280
    %v2283 = vadd.f32 %v2251, %v2281
    %s2284 = sld [smem:[#allocation9 + $0x5d]]
    %v2285 = vstv %s2284
    %v2286 = vmul.f32 %v2285, %v2270
    %v2287 = vmul.f32 %v2285, %v2271
    %v2288 = vadd.f32 %v2256, %v2286
    %v2289 = vadd.f32 %v2257, %v2287
    %s2290 = sld [smem:[#allocation9 + $0x81]]
    %v2291 = vstv %s2290
    %v2292 = vmul.f32 %v2291, %v2270
    %v2293 = vmul.f32 %v2291, %v2271
    %v2294 = vadd.f32 %v2262, %v2292
    %v2295 = vadd.f32 %v2263, %v2293
    %2296 = vrot.lane.b32.xlu0 %v1822, 1
    %v2297 = vpop.permute.xlu0 %2296
    %2298 = vrot.lane.b32.xlu0 %v1823, 1
    %v2299 = vpop.permute.xlu0 %2298
    %v2300 = vsel %vm551, %v2297, %v2299
    %v2301 = vsel %vm551, %v2299, %v2297
    %v2302 = vmul.f32 %v2301, %v557
    %v2303 = vmul.f32 %v2300, %v561
    %s2304 = sld [smem:[#allocation9 + $0x1e]]
    %v2305 = vstv %s2304
    %v2306 = vmul.f32 %v2305, %v2302
    %v2307 = vmul.f32 %v2305, %v2303
    %v2308 = vadd.f32 %v2276, %v2306
    %v2309 = vadd.f32 %v2277, %v2307
    %s2310 = sld [smem:[#allocation9 + $0x42]]
    %v2311 = vstv %s2310
    %v2312 = vmul.f32 %v2311, %v2302
    %v2313 = vmul.f32 %v2311, %v2303
    %v2314 = vadd.f32 %v2282, %v2312
    %v2315 = vadd.f32 %v2283, %v2313
    %s2316 = sld [smem:[#allocation9 + $0x66]]
    %v2317 = vstv %s2316
    %v2318 = vmul.f32 %v2317, %v2302
    %v2319 = vmul.f32 %v2317, %v2303
    %v2320 = vadd.f32 %v2288, %v2318
    %v2321 = vadd.f32 %v2289, %v2319
    %s2322 = sld [smem:[#allocation9 + $0x8a]]
    %v2323 = vstv %s2322
    %v2324 = vmul.f32 %v2323, %v2302
    %v2325 = vmul.f32 %v2323, %v2303
    %v2326 = vadd.f32 %v2294, %v2324
    %v2327 = vadd.f32 %v2295, %v2325
    %s2328 = sld [smem:[#allocation9 + $0x4]]
    %v2329 = vstv %s2328
    %v2330 = vmul.f32 %v2329, %v1588
    %v2331 = vmul.f32 %v2329, %v1589
    %v2332 = vadd.f32 %v2308, %v2330
    %v2333 = vadd.f32 %v2309, %v2331
    %s2334 = sld [smem:[#allocation9 + $0x28]]
    %v2335 = vstv %s2334
    %v2336 = vmul.f32 %v2335, %v1588
    %v2337 = vmul.f32 %v2335, %v1589
    %v2338 = vadd.f32 %v2314, %v2336
    %v2339 = vadd.f32 %v2315, %v2337
    %s2340 = sld [smem:[#allocation9 + $0x4c]]
    %v2341 = vstv %s2340
    %v2342 = vmul.f32 %v2341, %v1588
    %v2343 = vmul.f32 %v2341, %v1589
    %v2344 = vadd.f32 %v2320, %v2342
    %v2345 = vadd.f32 %v2321, %v2343
    %s2346 = sld [smem:[#allocation9 + $0x70]]
    %v2347 = vstv %s2346
    %v2348 = vmul.f32 %v2347, %v1588
    %v2349 = vmul.f32 %v2347, %v1589
    %v2350 = vadd.f32 %v2326, %v2348
    %v2351 = vadd.f32 %v2327, %v2349
    %s2352 = sld [smem:[#allocation9 + $0xd]]
    %v2353 = vstv %s2352
    %v2354 = vmul.f32 %v2353, %v1666
    %v2355 = vmul.f32 %v2353, %v1667
    %v2356 = vadd.f32 %v2332, %v2354
    %v2357 = vadd.f32 %v2333, %v2355
    %s2358 = sld [smem:[#allocation9 + $0x31]]
    %v2359 = vstv %s2358
    %v2360 = vmul.f32 %v2359, %v1666
    %v2361 = vmul.f32 %v2359, %v1667
    %v2362 = vadd.f32 %v2338, %v2360
    %v2363 = vadd.f32 %v2339, %v2361
    %s2364 = sld [smem:[#allocation9 + $0x55]]
    %v2365 = vstv %s2364
    %v2366 = vmul.f32 %v2365, %v1666
    %v2367 = vmul.f32 %v2365, %v1667
    %v2368 = vadd.f32 %v2344, %v2366
    %v2369 = vadd.f32 %v2345, %v2367
    %s2370 = sld [smem:[#allocation9 + $0x79]]
    %v2371 = vstv %s2370
    %v2372 = vmul.f32 %v2371, %v1666
    %v2373 = vmul.f32 %v2371, %v1667
    %v2374 = vadd.f32 %v2350, %v2372
    %v2375 = vadd.f32 %v2351, %v2373
    %s2376 = sld [smem:[#allocation9 + $0x16]]
    %v2377 = vstv %s2376
    %v2378 = vmul.f32 %v2377, %v1744
    %v2379 = vmul.f32 %v2377, %v1745
    %v2380 = vadd.f32 %v2356, %v2378
    %v2381 = vadd.f32 %v2357, %v2379
    %s2382 = sld [smem:[#allocation9 + $0x3a]]
    %v2383 = vstv %s2382
    %v2384 = vmul.f32 %v2383, %v1744
    %v2385 = vmul.f32 %v2383, %v1745
    %v2386 = vadd.f32 %v2362, %v2384
    %v2387 = vadd.f32 %v2363, %v2385
    %s2388 = sld [smem:[#allocation9 + $0x5e]]
    %v2389 = vstv %s2388
    %v2390 = vmul.f32 %v2389, %v1744
    %v2391 = vmul.f32 %v2389, %v1745
    %v2392 = vadd.f32 %v2368, %v2390
    %v2393 = vadd.f32 %v2369, %v2391
    %s2394 = sld [smem:[#allocation9 + $0x82]]
    %v2395 = vstv %s2394
    %v2396 = vmul.f32 %v2395, %v1744
    %v2397 = vmul.f32 %v2395, %v1745
    %v2398 = vadd.f32 %v2374, %v2396
    %v2399 = vadd.f32 %v2375, %v2397
    %s2400 = sld [smem:[#allocation9 + $0x1f]]
    %v2401 = vstv %s2400
    %v2402 = vmul.f32 %v2401, %v1822
    %v2403 = vmul.f32 %v2401, %v1823
    %v2404 = vadd.f32 %v2380, %v2402
    %v2405 = vadd.f32 %v2381, %v2403
    %s2406 = sld [smem:[#allocation9 + $0x43]]
    %v2407 = vstv %s2406
    %v2408 = vmul.f32 %v2407, %v1822
    %v2409 = vmul.f32 %v2407, %v1823
    %v2410 = vadd.f32 %v2386, %v2408
    %v2411 = vadd.f32 %v2387, %v2409
    %s2412 = sld [smem:[#allocation9 + $0x67]]
    %v2413 = vstv %s2412
    %v2414 = vmul.f32 %v2413, %v1822
    %v2415 = vmul.f32 %v2413, %v1823
    %v2416 = vadd.f32 %v2392, %v2414
    %v2417 = vadd.f32 %v2393, %v2415
    %s2418 = sld [smem:[#allocation9 + $0x8b]]
    %v2419 = vstv %s2418
    %v2420 = vmul.f32 %v2419, %v1822
    %v2421 = vmul.f32 %v2419, %v1823
    %v2422 = vadd.f32 %v2398, %v2420
    %v2423 = vadd.f32 %v2399, %v2421
    %2424 = vrot.lane.b32.xlu0 %v1588, 127
    %v2425 = vpop.permute.xlu0 %2424
    %2426 = vrot.lane.b32.xlu0 %v1589, 127
    %v2427 = vpop.permute.xlu0 %2426
    %v2428 = vsel %vm944, %v2425, %v2427
    %v2429 = vsel %vm944, %v2427, %v2425
    %v2430 = vmul.f32 %v2428, %v950
    %v2431 = vmul.f32 %v2429, %v954
    %s2432 = sld [smem:[#allocation9 + $0x5]]
    %v2433 = vstv %s2432
    %v2434 = vmul.f32 %v2433, %v2430
    %v2435 = vmul.f32 %v2433, %v2431
    %v2436 = vadd.f32 %v2404, %v2434
    %v2437 = vadd.f32 %v2405, %v2435
    %s2438 = sld [smem:[#allocation9 + $0x29]]
    %v2439 = vstv %s2438
    %v2440 = vmul.f32 %v2439, %v2430
    %v2441 = vmul.f32 %v2439, %v2431
    %v2442 = vadd.f32 %v2410, %v2440
    %v2443 = vadd.f32 %v2411, %v2441
    %s2444 = sld [smem:[#allocation9 + $0x4d]]
    %v2445 = vstv %s2444
    %v2446 = vmul.f32 %v2445, %v2430
    %v2447 = vmul.f32 %v2445, %v2431
    %v2448 = vadd.f32 %v2416, %v2446
    %v2449 = vadd.f32 %v2417, %v2447
    %s2450 = sld [smem:[#allocation9 + $0x71]]
    %v2451 = vstv %s2450
    %v2452 = vmul.f32 %v2451, %v2430
    %v2453 = vmul.f32 %v2451, %v2431
    %v2454 = vadd.f32 %v2422, %v2452
    %v2455 = vadd.f32 %v2423, %v2453
    %2456 = vrot.lane.b32.xlu0 %v1666, 127
    %v2457 = vpop.permute.xlu0 %2456
    %2458 = vrot.lane.b32.xlu0 %v1667, 127
    %v2459 = vpop.permute.xlu0 %2458
    %v2460 = vsel %vm944, %v2457, %v2459
    %v2461 = vsel %vm944, %v2459, %v2457
    %v2462 = vmul.f32 %v2460, %v950
    %v2463 = vmul.f32 %v2461, %v954
    %s2464 = sld [smem:[#allocation9 + $0xe]]
    %v2465 = vstv %s2464
    %v2466 = vmul.f32 %v2465, %v2462
    %v2467 = vmul.f32 %v2465, %v2463
    %v2468 = vadd.f32 %v2436, %v2466
    %v2469 = vadd.f32 %v2437, %v2467
    %s2470 = sld [smem:[#allocation9 + $0x32]]
    %v2471 = vstv %s2470
    %v2472 = vmul.f32 %v2471, %v2462
    %v2473 = vmul.f32 %v2471, %v2463
    %v2474 = vadd.f32 %v2442, %v2472
    %v2475 = vadd.f32 %v2443, %v2473
    %s2476 = sld [smem:[#allocation9 + $0x56]]
    %v2477 = vstv %s2476
    %v2478 = vmul.f32 %v2477, %v2462
    %v2479 = vmul.f32 %v2477, %v2463
    %v2480 = vadd.f32 %v2448, %v2478
    %v2481 = vadd.f32 %v2449, %v2479
    %s2482 = sld [smem:[#allocation9 + $0x7a]]
    %v2483 = vstv %s2482
    %v2484 = vmul.f32 %v2483, %v2462
    %v2485 = vmul.f32 %v2483, %v2463
    %v2486 = vadd.f32 %v2454, %v2484
    %v2487 = vadd.f32 %v2455, %v2485
    %2488 = vrot.lane.b32.xlu0 %v1744, 127
    %v2489 = vpop.permute.xlu0 %2488
    %2490 = vrot.lane.b32.xlu0 %v1745, 127
    %v2491 = vpop.permute.xlu0 %2490
    %v2492 = vsel %vm944, %v2489, %v2491
    %v2493 = vsel %vm944, %v2491, %v2489
    %v2494 = vmul.f32 %v2492, %v950
    %v2495 = vmul.f32 %v2493, %v954
    %s2496 = sld [smem:[#allocation9 + $0x17]]
    %v2497 = vstv %s2496
    %v2498 = vmul.f32 %v2497, %v2494
    %v2499 = vmul.f32 %v2497, %v2495
    %v2500 = vadd.f32 %v2468, %v2498
    %v2501 = vadd.f32 %v2469, %v2499
    %s2502 = sld [smem:[#allocation9 + $0x3b]]
    %v2503 = vstv %s2502
    %v2504 = vmul.f32 %v2503, %v2494
    %v2505 = vmul.f32 %v2503, %v2495
    %v2506 = vadd.f32 %v2474, %v2504
    %v2507 = vadd.f32 %v2475, %v2505
    %s2508 = sld [smem:[#allocation9 + $0x5f]]
    %v2509 = vstv %s2508
    %v2510 = vmul.f32 %v2509, %v2494
    %v2511 = vmul.f32 %v2509, %v2495
    %v2512 = vadd.f32 %v2480, %v2510
    %v2513 = vadd.f32 %v2481, %v2511
    %s2514 = sld [smem:[#allocation9 + $0x83]]
    %v2515 = vstv %s2514
    %v2516 = vmul.f32 %v2515, %v2494
    %v2517 = vmul.f32 %v2515, %v2495
    %v2518 = vadd.f32 %v2486, %v2516
    %v2519 = vadd.f32 %v2487, %v2517
    %2520 = vrot.lane.b32.xlu0 %v1822, 127
    %v2521 = vpop.permute.xlu0 %2520
    %2522 = vrot.lane.b32.xlu0 %v1823, 127
    %v2523 = vpop.permute.xlu0 %2522
    %v2524 = vsel %vm944, %v2521, %v2523
    %v2525 = vsel %vm944, %v2523, %v2521
    %v2526 = vmul.f32 %v2524, %v950
    %v2527 = vmul.f32 %v2525, %v954
    %s2528 = sld [smem:[#allocation9 + $0x20]]
    %v2529 = vstv %s2528
    %v2530 = vmul.f32 %v2529, %v2526
    %v2531 = vmul.f32 %v2529, %v2527
    %v2532 = vadd.f32 %v2500, %v2530
    %v2533 = vadd.f32 %v2501, %v2531
    %s2534 = sld [smem:[#allocation9 + $0x44]]
    %v2535 = vstv %s2534
    %v2536 = vmul.f32 %v2535, %v2526
    %v2537 = vmul.f32 %v2535, %v2527
    %v2538 = vadd.f32 %v2506, %v2536
    %v2539 = vadd.f32 %v2507, %v2537
    %s2540 = sld [smem:[#allocation9 + $0x68]]
    %v2541 = vstv %s2540
    %v2542 = vmul.f32 %v2541, %v2526
    %v2543 = vmul.f32 %v2541, %v2527
    %v2544 = vadd.f32 %v2512, %v2542
    %v2545 = vadd.f32 %v2513, %v2543
    %s2546 = sld [smem:[#allocation9 + $0x8c]]
    %v2547 = vstv %s2546
    %v2548 = vmul.f32 %v2547, %v2526
    %v2549 = vmul.f32 %v2547, %v2527
    %v2550 = vadd.f32 %v2518, %v2548
    %v2551 = vadd.f32 %v2519, %v2549
    %2552 = vrot.lane.b32.xlu0 %v1588, 113
    %v2553 = vpop.permute.xlu0 %2552
    %2554 = vrot.lane.b32.xlu0 %v1589, 113
    %v2555 = vpop.permute.xlu0 %2554
    %v2556 = vsel %vm1081, %v2553, %v2555
    %v2557 = vsel %vm1081, %v2555, %v2553
    %v2558 = vmul.f32 %v2556, %v1087
    %v2559 = vmul.f32 %v2557, %v1091
    %s2560 = sld [smem:[#allocation9 + $0x6]]
    %v2561 = vstv %s2560
    %v2562 = vmul.f32 %v2561, %v2558
    %v2563 = vmul.f32 %v2561, %v2559
    %v2564 = vadd.f32 %v2532, %v2562
    %v2565 = vadd.f32 %v2533, %v2563
    %s2566 = sld [smem:[#allocation9 + $0x2a]]
    %v2567 = vstv %s2566
    %v2568 = vmul.f32 %v2567, %v2558
    %v2569 = vmul.f32 %v2567, %v2559
    %v2570 = vadd.f32 %v2538, %v2568
    %v2571 = vadd.f32 %v2539, %v2569
    %s2572 = sld [smem:[#allocation9 + $0x4e]]
    %v2573 = vstv %s2572
    %v2574 = vmul.f32 %v2573, %v2558
    %v2575 = vmul.f32 %v2573, %v2559
    %v2576 = vadd.f32 %v2544, %v2574
    %v2577 = vadd.f32 %v2545, %v2575
    %s2578 = sld [smem:[#allocation9 + $0x72]]
    %v2579 = vstv %s2578
    %v2580 = vmul.f32 %v2579, %v2558
    %v2581 = vmul.f32 %v2579, %v2559
    %v2582 = vadd.f32 %v2550, %v2580
    %v2583 = vadd.f32 %v2551, %v2581
    %2584 = vrot.lane.b32.xlu0 %v1666, 113
    %v2585 = vpop.permute.xlu0 %2584
    %2586 = vrot.lane.b32.xlu0 %v1667, 113
    %v2587 = vpop.permute.xlu0 %2586
    %v2588 = vsel %vm1081, %v2585, %v2587
    %v2589 = vsel %vm1081, %v2587, %v2585
    %v2590 = vmul.f32 %v2588, %v1087
    %v2591 = vmul.f32 %v2589, %v1091
    %s2592 = sld [smem:[#allocation9 + $0xf]]
    %v2593 = vstv %s2592
    %v2594 = vmul.f32 %v2593, %v2590
    %v2595 = vmul.f32 %v2593, %v2591
    %v2596 = vadd.f32 %v2564, %v2594
    %v2597 = vadd.f32 %v2565, %v2595
    %s2598 = sld [smem:[#allocation9 + $0x33]]
    %v2599 = vstv %s2598
    %v2600 = vmul.f32 %v2599, %v2590
    %v2601 = vmul.f32 %v2599, %v2591
    %v2602 = vadd.f32 %v2570, %v2600
    %v2603 = vadd.f32 %v2571, %v2601
    %s2604 = sld [smem:[#allocation9 + $0x57]]
    %v2605 = vstv %s2604
    %v2606 = vmul.f32 %v2605, %v2590
    %v2607 = vmul.f32 %v2605, %v2591
    %v2608 = vadd.f32 %v2576, %v2606
    %v2609 = vadd.f32 %v2577, %v2607
    %s2610 = sld [smem:[#allocation9 + $0x7b]]
    %v2611 = vstv %s2610
    %v2612 = vmul.f32 %v2611, %v2590
    %v2613 = vmul.f32 %v2611, %v2591
    %v2614 = vadd.f32 %v2582, %v2612
    %v2615 = vadd.f32 %v2583, %v2613
    %2616 = vrot.lane.b32.xlu0 %v1744, 113
    %v2617 = vpop.permute.xlu0 %2616
    %2618 = vrot.lane.b32.xlu0 %v1745, 113
    %v2619 = vpop.permute.xlu0 %2618
    %v2620 = vsel %vm1081, %v2617, %v2619
    %v2621 = vsel %vm1081, %v2619, %v2617
    %v2622 = vmul.f32 %v2620, %v1087
    %v2623 = vmul.f32 %v2621, %v1091
    %s2624 = sld [smem:[#allocation9 + $0x18]]
    %v2625 = vstv %s2624
    %v2626 = vmul.f32 %v2625, %v2622
    %v2627 = vmul.f32 %v2625, %v2623
    %v2628 = vadd.f32 %v2596, %v2626
    %v2629 = vadd.f32 %v2597, %v2627
    %s2630 = sld [smem:[#allocation9 + $0x3c]]
    %v2631 = vstv %s2630
    %v2632 = vmul.f32 %v2631, %v2622
    %v2633 = vmul.f32 %v2631, %v2623
    %v2634 = vadd.f32 %v2602, %v2632
    %v2635 = vadd.f32 %v2603, %v2633
    %s2636 = sld [smem:[#allocation9 + $0x60]]
    %v2637 = vstv %s2636
    %v2638 = vmul.f32 %v2637, %v2622
    %v2639 = vmul.f32 %v2637, %v2623
    %v2640 = vadd.f32 %v2608, %v2638
    %v2641 = vadd.f32 %v2609, %v2639
    %s2642 = sld [smem:[#allocation9 + $0x84]]
    %v2643 = vstv %s2642
    %v2644 = vmul.f32 %v2643, %v2622
    %v2645 = vmul.f32 %v2643, %v2623
    %v2646 = vadd.f32 %v2614, %v2644
    %v2647 = vadd.f32 %v2615, %v2645
    %2648 = vrot.lane.b32.xlu0 %v1822, 113
    %v2649 = vpop.permute.xlu0 %2648
    %2650 = vrot.lane.b32.xlu0 %v1823, 113
    %v2651 = vpop.permute.xlu0 %2650
    %v2652 = vsel %vm1081, %v2649, %v2651
    %v2653 = vsel %vm1081, %v2651, %v2649
    %v2654 = vmul.f32 %v2652, %v1087
    %v2655 = vmul.f32 %v2653, %v1091
    %s2656 = sld [smem:[#allocation9 + $0x21]]
    %v2657 = vstv %s2656
    %v2658 = vmul.f32 %v2657, %v2654
    %v2659 = vmul.f32 %v2657, %v2655
    %v2660 = vadd.f32 %v2628, %v2658
    %v2661 = vadd.f32 %v2629, %v2659
    %s2662 = sld [smem:[#allocation9 + $0x45]]
    %v2663 = vstv %s2662
    %v2664 = vmul.f32 %v2663, %v2654
    %v2665 = vmul.f32 %v2663, %v2655
    %v2666 = vadd.f32 %v2634, %v2664
    %v2667 = vadd.f32 %v2635, %v2665
    %s2668 = sld [smem:[#allocation9 + $0x69]]
    %v2669 = vstv %s2668
    %v2670 = vmul.f32 %v2669, %v2654
    %v2671 = vmul.f32 %v2669, %v2655
    %v2672 = vadd.f32 %v2640, %v2670
    %v2673 = vadd.f32 %v2641, %v2671
    %s2674 = sld [smem:[#allocation9 + $0x8d]]
    %v2675 = vstv %s2674
    %v2676 = vmul.f32 %v2675, %v2654
    %v2677 = vmul.f32 %v2675, %v2655
    %v2678 = vadd.f32 %v2646, %v2676
    %v2679 = vadd.f32 %v2647, %v2677
    %2680 = vrot.lane.b32.xlu0 %v1588, 112
    %v2681 = vpop.permute.xlu0 %2680
    %2682 = vrot.lane.b32.xlu0 %v1589, 112
    %v2683 = vpop.permute.xlu0 %2682
    %v2684 = vsel %vm1218, %v2681, %v2683
    %v2685 = vsel %vm1218, %v2683, %v2681
    %v2686 = vmul.f32 %v2684, %v1224
    %v2687 = vmul.f32 %v2685, %v1228
    %s2688 = sld [smem:[#allocation9 + $0x7]]
    %v2689 = vstv %s2688
    %v2690 = vmul.f32 %v2689, %v2686
    %v2691 = vmul.f32 %v2689, %v2687
    %v2692 = vadd.f32 %v2660, %v2690
    %v2693 = vadd.f32 %v2661, %v2691
    %s2694 = sld [smem:[#allocation9 + $0x2b]]
    %v2695 = vstv %s2694
    %v2696 = vmul.f32 %v2695, %v2686
    %v2697 = vmul.f32 %v2695, %v2687
    %v2698 = vadd.f32 %v2666, %v2696
    %v2699 = vadd.f32 %v2667, %v2697
    %s2700 = sld [smem:[#allocation9 + $0x4f]]
    %v2701 = vstv %s2700
    %v2702 = vmul.f32 %v2701, %v2686
    %v2703 = vmul.f32 %v2701, %v2687
    %v2704 = vadd.f32 %v2672, %v2702
    %v2705 = vadd.f32 %v2673, %v2703
    %s2706 = sld [smem:[#allocation9 + $0x73]]
    %v2707 = vstv %s2706
    %v2708 = vmul.f32 %v2707, %v2686
    %v2709 = vmul.f32 %v2707, %v2687
    %v2710 = vadd.f32 %v2678, %v2708
    %v2711 = vadd.f32 %v2679, %v2709
    %2712 = vrot.lane.b32.xlu0 %v1666, 112
    %v2713 = vpop.permute.xlu0 %2712
    %2714 = vrot.lane.b32.xlu0 %v1667, 112
    %v2715 = vpop.permute.xlu0 %2714
    %v2716 = vsel %vm1218, %v2713, %v2715
    %v2717 = vsel %vm1218, %v2715, %v2713
    %v2718 = vmul.f32 %v2716, %v1224
    %v2719 = vmul.f32 %v2717, %v1228
    %s2720 = sld [smem:[#allocation9 + $0x10]]
    %v2721 = vstv %s2720
    %v2722 = vmul.f32 %v2721, %v2718
    %v2723 = vmul.f32 %v2721, %v2719
    %v2724 = vadd.f32 %v2692, %v2722
    %v2725 = vadd.f32 %v2693, %v2723
    %s2726 = sld [smem:[#allocation9 + $0x34]]
    %v2727 = vstv %s2726
    %v2728 = vmul.f32 %v2727, %v2718
    %v2729 = vmul.f32 %v2727, %v2719
    %v2730 = vadd.f32 %v2698, %v2728
    %v2731 = vadd.f32 %v2699, %v2729
    %s2732 = sld [smem:[#allocation9 + $0x58]]
    %v2733 = vstv %s2732
    %v2734 = vmul.f32 %v2733, %v2718
    %v2735 = vmul.f32 %v2733, %v2719
    %v2736 = vadd.f32 %v2704, %v2734
    %v2737 = vadd.f32 %v2705, %v2735
    %s2738 = sld [smem:[#allocation9 + $0x7c]]
    %v2739 = vstv %s2738
    %v2740 = vmul.f32 %v2739, %v2718
    %v2741 = vmul.f32 %v2739, %v2719
    %v2742 = vadd.f32 %v2710, %v2740
    %v2743 = vadd.f32 %v2711, %v2741
    %2744 = vrot.lane.b32.xlu0 %v1744, 112
    %v2745 = vpop.permute.xlu0 %2744
    %2746 = vrot.lane.b32.xlu0 %v1745, 112
    %v2747 = vpop.permute.xlu0 %2746
    %v2748 = vsel %vm1218, %v2745, %v2747
    %v2749 = vsel %vm1218, %v2747, %v2745
    %v2750 = vmul.f32 %v2748, %v1224
    %v2751 = vmul.f32 %v2749, %v1228
    %s2752 = sld [smem:[#allocation9 + $0x19]]
    %v2753 = vstv %s2752
    %v2754 = vmul.f32 %v2753, %v2750
    %v2755 = vmul.f32 %v2753, %v2751
    %v2756 = vadd.f32 %v2724, %v2754
    %v2757 = vadd.f32 %v2725, %v2755
    %s2758 = sld [smem:[#allocation9 + $0x3d]]
    %v2759 = vstv %s2758
    %v2760 = vmul.f32 %v2759, %v2750
    %v2761 = vmul.f32 %v2759, %v2751
    %v2762 = vadd.f32 %v2730, %v2760
    %v2763 = vadd.f32 %v2731, %v2761
    %s2764 = sld [smem:[#allocation9 + $0x61]]
    %v2765 = vstv %s2764
    %v2766 = vmul.f32 %v2765, %v2750
    %v2767 = vmul.f32 %v2765, %v2751
    %v2768 = vadd.f32 %v2736, %v2766
    %v2769 = vadd.f32 %v2737, %v2767
    %s2770 = sld [smem:[#allocation9 + $0x85]]
    %v2771 = vstv %s2770
    %v2772 = vmul.f32 %v2771, %v2750
    %v2773 = vmul.f32 %v2771, %v2751
    %v2774 = vadd.f32 %v2742, %v2772
    %v2775 = vadd.f32 %v2743, %v2773
    %2776 = vrot.lane.b32.xlu0 %v1822, 112
    %v2777 = vpop.permute.xlu0 %2776
    %2778 = vrot.lane.b32.xlu0 %v1823, 112
    %v2779 = vpop.permute.xlu0 %2778
    %v2780 = vsel %vm1218, %v2777, %v2779
    %v2781 = vsel %vm1218, %v2779, %v2777
    %v2782 = vmul.f32 %v2780, %v1224
    %v2783 = vmul.f32 %v2781, %v1228
    %s2784 = sld [smem:[#allocation9 + $0x22]]
    %v2785 = vstv %s2784
    %v2786 = vmul.f32 %v2785, %v2782
    %v2787 = vmul.f32 %v2785, %v2783
    %v2788 = vadd.f32 %v2756, %v2786
    %v2789 = vadd.f32 %v2757, %v2787
    %s2790 = sld [smem:[#allocation9 + $0x46]]
    %v2791 = vstv %s2790
    %v2792 = vmul.f32 %v2791, %v2782
    %v2793 = vmul.f32 %v2791, %v2783
    %v2794 = vadd.f32 %v2762, %v2792
    %v2795 = vadd.f32 %v2763, %v2793
    %s2796 = sld [smem:[#allocation9 + $0x6a]]
    %v2797 = vstv %s2796
    %v2798 = vmul.f32 %v2797, %v2782
    %v2799 = vmul.f32 %v2797, %v2783
    %v2800 = vadd.f32 %v2768, %v2798
    %v2801 = vadd.f32 %v2769, %v2799
    %s2802 = sld [smem:[#allocation9 + $0x8e]]
    %v2803 = vstv %s2802
    %v2804 = vmul.f32 %v2803, %v2782
    %v2805 = vmul.f32 %v2803, %v2783
    %v2806 = vadd.f32 %v2774, %v2804
    %v2807 = vadd.f32 %v2775, %v2805
    %2808 = vrot.lane.b32.xlu0 %v1588, 111
    %v2809 = vpop.permute.xlu0 %2808
    %2810 = vrot.lane.b32.xlu0 %v1589, 111
    %v2811 = vpop.permute.xlu0 %2810
    %v2812 = vsel %vm1355, %v2809, %v2811
    %v2813 = vsel %vm1355, %v2811, %v2809
    %v2814 = vmul.f32 %v2812, %v1361
    %v2815 = vmul.f32 %v2813, %v1365
    %s2816 = sld [smem:[#allocation9 + $0x8]]
    %v2817 = vstv %s2816
    %v2818 = vmul.f32 %v2817, %v2814
    %v2819 = vmul.f32 %v2817, %v2815
    %v2820 = vadd.f32 %v2788, %v2818
    %v2821 = vadd.f32 %v2789, %v2819
    %s2822 = sld [smem:[#allocation9 + $0x2c]]
    %v2823 = vstv %s2822
    %v2824 = vmul.f32 %v2823, %v2814
    %v2825 = vmul.f32 %v2823, %v2815
    %v2826 = vadd.f32 %v2794, %v2824
    %v2827 = vadd.f32 %v2795, %v2825
    %s2828 = sld [smem:[#allocation9 + $0x50]]
    %v2829 = vstv %s2828
    %v2830 = vmul.f32 %v2829, %v2814
    %v2831 = vmul.f32 %v2829, %v2815
    %v2832 = vadd.f32 %v2800, %v2830
    %v2833 = vadd.f32 %v2801, %v2831
    %s2834 = sld [smem:[#allocation9 + $0x74]]
    %v2835 = vstv %s2834
    %v2836 = vmul.f32 %v2835, %v2814
    %v2837 = vmul.f32 %v2835, %v2815
    %v2838 = vadd.f32 %v2806, %v2836
    %v2839 = vadd.f32 %v2807, %v2837
    %2840 = vrot.lane.b32.xlu0 %v1666, 111
    %v2841 = vpop.permute.xlu0 %2840
    %2842 = vrot.lane.b32.xlu0 %v1667, 111
    %v2843 = vpop.permute.xlu0 %2842
    %v2844 = vsel %vm1355, %v2841, %v2843
    %v2845 = vsel %vm1355, %v2843, %v2841
    %v2846 = vmul.f32 %v2844, %v1361
    %v2847 = vmul.f32 %v2845, %v1365
    %s2848 = sld [smem:[#allocation9 + $0x11]]
    %v2849 = vstv %s2848
    %v2850 = vmul.f32 %v2849, %v2846
    %v2851 = vmul.f32 %v2849, %v2847
    %v2852 = vadd.f32 %v2820, %v2850
    %v2853 = vadd.f32 %v2821, %v2851
    %s2854 = sld [smem:[#allocation9 + $0x35]]
    %v2855 = vstv %s2854
    %v2856 = vmul.f32 %v2855, %v2846
    %v2857 = vmul.f32 %v2855, %v2847
    %v2858 = vadd.f32 %v2826, %v2856
    %v2859 = vadd.f32 %v2827, %v2857
    %s2860 = sld [smem:[#allocation9 + $0x59]]
    %v2861 = vstv %s2860
    %v2862 = vmul.f32 %v2861, %v2846
    %v2863 = vmul.f32 %v2861, %v2847
    %v2864 = vadd.f32 %v2832, %v2862
    %v2865 = vadd.f32 %v2833, %v2863
    %s2866 = sld [smem:[#allocation9 + $0x7d]]
    %v2867 = vstv %s2866
    %v2868 = vmul.f32 %v2867, %v2846
    %v2869 = vmul.f32 %v2867, %v2847
    %v2870 = vadd.f32 %v2838, %v2868
    %v2871 = vadd.f32 %v2839, %v2869
    %2872 = vrot.lane.b32.xlu0 %v1744, 111
    %v2873 = vpop.permute.xlu0 %2872
    %2874 = vrot.lane.b32.xlu0 %v1745, 111
    %v2875 = vpop.permute.xlu0 %2874
    %v2876 = vsel %vm1355, %v2873, %v2875
    %v2877 = vsel %vm1355, %v2875, %v2873
    %v2878 = vmul.f32 %v2876, %v1361
    %v2879 = vmul.f32 %v2877, %v1365
    %s2880 = sld [smem:[#allocation9 + $0x1a]]
    %v2881 = vstv %s2880
    %v2882 = vmul.f32 %v2881, %v2878
    %v2883 = vmul.f32 %v2881, %v2879
    %v2884 = vadd.f32 %v2852, %v2882
    %v2885 = vadd.f32 %v2853, %v2883
    %s2886 = sld [smem:[#allocation9 + $0x3e]]
    %v2887 = vstv %s2886
    %v2888 = vmul.f32 %v2887, %v2878
    %v2889 = vmul.f32 %v2887, %v2879
    %v2890 = vadd.f32 %v2858, %v2888
    %v2891 = vadd.f32 %v2859, %v2889
    %s2892 = sld [smem:[#allocation9 + $0x62]]
    %v2893 = vstv %s2892
    %v2894 = vmul.f32 %v2893, %v2878
    %v2895 = vmul.f32 %v2893, %v2879
    %v2896 = vadd.f32 %v2864, %v2894
    %v2897 = vadd.f32 %v2865, %v2895
    %s2898 = sld [smem:[#allocation9 + $0x86]]
    %v2899 = vstv %s2898
    %v2900 = vmul.f32 %v2899, %v2878
    %v2901 = vmul.f32 %v2899, %v2879
    %v2902 = vadd.f32 %v2870, %v2900
    %v2903 = vadd.f32 %v2871, %v2901
    %2904 = vrot.lane.b32.xlu0 %v1822, 111
    %v2905 = vpop.permute.xlu0 %2904
    %2906 = vrot.lane.b32.xlu0 %v1823, 111
    %v2907 = vpop.permute.xlu0 %2906
    %v2908 = vsel %vm1355, %v2905, %v2907
    %v2909 = vsel %vm1355, %v2907, %v2905
    %v2910 = vmul.f32 %v2908, %v1361
    %v2911 = vmul.f32 %v2909, %v1365
    %s2912 = sld [smem:[#allocation9 + $0x23]]
    %v2913 = vstv %s2912
    %v2914 = vmul.f32 %v2913, %v2910
    %v2915 = vmul.f32 %v2913, %v2911
    %v2916 = vadd.f32 %v2884, %v2914
    %v2917 = vadd.f32 %v2885, %v2915
    %s2918 = sld [smem:[#allocation9 + $0x47]]
    %v2919 = vstv %s2918
    %v2920 = vmul.f32 %v2919, %v2910
    %v2921 = vmul.f32 %v2919, %v2911
    %v2922 = vadd.f32 %v2890, %v2920
    %v2923 = vadd.f32 %v2891, %v2921
    %s2924 = sld [smem:[#allocation9 + $0x6b]]
    %v2925 = vstv %s2924
    %v2926 = vmul.f32 %v2925, %v2910
    %v2927 = vmul.f32 %v2925, %v2911
    %v2928 = vadd.f32 %v2896, %v2926
    %v2929 = vadd.f32 %v2897, %v2927
    %s2930 = sld [smem:[#allocation9 + $0x8f]]
    %v2931 = vstv %s2930
    %v2932 = vmul.f32 %v2931, %v2910
    %v2933 = vmul.f32 %v2931, %v2911
    %v2934 = vadd.f32 %v2902, %v2932
    %v2935 = vadd.f32 %v2903, %v2933
    %v2936 = vsel %vm1488, %v2916, 0.0
    %v2937 = vsel %vm1488, %v2917, 0.0
    %v2938 = vadd.f32 %v2936, %v2937
    %2939 = vadd.xlane.f32.xlu0 %v2938
    %v2940 = vpop.xlane.xlu0 %2939
    %v2941 = vmul.f32 %v2940, %v1494
    %v2942 = vsub.f32 %v2916, %v2941
    %v2943 = vsub.f32 %v2917, %v2941
    %v2944 = vmul.f32 %v2942, %v2942
    %v2945 = vmul.f32 %v2943, %v2943
    %v2946 = vsel %vm1488, %v2944, 0.0
    %v2947 = vsel %vm1488, %v2945, 0.0
    %v2948 = vadd.f32 %v2946, %v2947
    %2949 = vadd.xlane.f32.xlu0 %v2948
    %v2950 = vpop.xlane.xlu0 %2949
    %v2951 = vmul.f32 %v2950, %v1494
    %v2952 = vadd.f32 %v2951, 1e-05
    %v2953 = vrsqrt.pop %v2952
    %v2954 = vmul.f32 %v2942, %v2953
    %v2955 = vmul.f32 %v2943, %v2953
    %v2957 = vlaneseq
    %v2958 = vshrl.u32 %v2957, 7
    %v2959 = vsub.s32 0, %v2958
    %v2960 = vrot.slane %v89, %v2959
    %v2961 = vlaneseq
    %v2962 = vshrl.u32 %v2961, 7
    %v2963 = vsub.s32 1, %v2962
    %v2964 = vrot.slane %v89, %v2963
    %v2967 = vmul.f32 %v2954, %v2960
    %v2968 = vmul.f32 %v2955, %v2964
    %v2970 = vlaneseq
    %v2971 = vshrl.u32 %v2970, 7
    %v2972 = vsub.s32 0, %v2971
    %v2973 = vrot.slane %v90, %v2972
    %v2974 = vlaneseq
    %v2975 = vshrl.u32 %v2974, 7
    %v2976 = vsub.s32 1, %v2975
    %v2977 = vrot.slane %v90, %v2976
    %v2980 = vadd.f32 %v2967, %v2973
    %v2981 = vadd.f32 %v2968, %v2977
    %v2982 = vadd.f32 %v2980, %v105
    %v2983 = vadd.f32 %v2981, %v106
    %v2984 = vmul.f32 %v2982, 0.5
    %v2985 = vmul.f32 %v2983, 0.5
    %v2986 = vmul.f32 %v2982, 0.70710677
    %v2987 = vmul.f32 %v2983, 0.70710677
    %v2988 = vand.u32 2147483647, %v2986
    %v2989 = vand.u32 2147483647, %v2987
    %v2990 = vmul.f32 %v2988, 0.3275911
    %v2991 = vmul.f32 %v2989, 0.3275911
    %v2992 = vadd.f32 %v2990, 1.0
    %v2993 = vadd.f32 %v2991, 1.0
    %v2994 = vrcp.pop %v2992
    %v2995 = vmul.f32 1.0, %v2994
    %v2996 = vrcp.pop %v2993
    %v2997 = vmul.f32 1.0, %v2996
    %v2998 = vmul.f32 %v2995, 1.0614054
    %v2999 = vmul.f32 %v2997, 1.0614054
    %v3000 = vadd.f32 %v2998, -1.4531521
    %v3001 = vadd.f32 %v2999, -1.4531521
    %v3002 = vmul.f32 %v3000, %v2995
    %v3003 = vmul.f32 %v3001, %v2997
    %v3004 = vadd.f32 %v3002, 1.4214138
    %v3005 = vadd.f32 %v3003, 1.4214138
    %v3006 = vmul.f32 %v3004, %v2995
    %v3007 = vmul.f32 %v3005, %v2997
    %v3008 = vadd.f32 %v3006, -0.28449672
    %v3009 = vadd.f32 %v3007, -0.28449672
    %v3010 = vmul.f32 %v3008, %v2995
    %v3011 = vmul.f32 %v3009, %v2997
    %v3012 = vadd.f32 %v3010, 0.2548296
    %v3013 = vadd.f32 %v3011, 0.2548296
    %v3014 = vmul.f32 %v3012, %v2995
    %v3015 = vmul.f32 %v3013, %v2997
    %v3016 = vsub.f32 0.0, %v2988
    %v3017 = vsub.f32 0.0, %v2989
    %v3018 = vmul.f32 %v3016, %v2988
    %v3019 = vmul.f32 %v3017, %v2989
    %v3020 = vmul.f32 %v3018, 1.442695
    %v3021 = vpow.pop %v3020
    %v3022 = vmul.f32 %v3019, 1.442695
    %v3023 = vpow.pop %v3022
    %v3024 = vmul.f32 %v3014, %v3021
    %v3025 = vmul.f32 %v3015, %v3023
    %v3026 = vsub.f32 1.0, %v3024
    %v3027 = vsub.f32 1.0, %v3025
    %vm3028 = vcmp.ge.f32.partialorder %v2986, 0.0
    %vm3029 = vcmp.ge.f32.partialorder %v2987, 0.0
    %v3030 = vsub.f32 0.0, %v3026
    %v3031 = vsub.f32 0.0, %v3027
    %v3032 = vsel %vm3028, %v3026, %v3030
    %v3033 = vsel %vm3029, %v3027, %v3031
    %v3034 = vadd.f32 %v3032, 1.0
    %v3035 = vadd.f32 %v3033, 1.0
    %v3036 = vmul.f32 %v2984, %v3034
    %v3037 = vmul.f32 %v2985, %v3035
    %v3040 = vcombine.low %v3036, %v3037
    %v3042 = vunpack.c.l.s4 1983009808
    %v3043 = vunpack.c.0.s8 %v3042
    %v3044 = vlaneseq
    %v3045 = vshrl.u32 %v3044, 7
    %v3046 = vsub.s32 %v3043, %v3045
    %v3047 = vrot.slane %v3040, %v3046
    %3049 = vst [vmem:[#allocation11] sm:$0xf] %v3047
    %v3050 = vsel %vm1488, %v2922, 0.0
    %v3051 = vsel %vm1488, %v2923, 0.0
    %v3052 = vadd.f32 %v3050, %v3051
    %3053 = vadd.xlane.f32.xlu0 %v3052
    %v3054 = vpop.xlane.xlu0 %3053
    %v3055 = vmul.f32 %v3054, %v1494
    %v3056 = vsub.f32 %v2922, %v3055
    %v3057 = vsub.f32 %v2923, %v3055
    %v3058 = vmul.f32 %v3056, %v3056
    %v3059 = vmul.f32 %v3057, %v3057
    %v3060 = vsel %vm1488, %v3058, 0.0
    %v3061 = vsel %vm1488, %v3059, 0.0
    %v3062 = vadd.f32 %v3060, %v3061
    %3063 = vadd.xlane.f32.xlu0 %v3062
    %v3064 = vpop.xlane.xlu0 %3063
    %v3065 = vmul.f32 %v3064, %v1494
    %v3066 = vadd.f32 %v3065, 1e-05
    %v3067 = vrsqrt.pop %v3066
    %v3068 = vmul.f32 %v3056, %v3067
    %v3069 = vmul.f32 %v3057, %v3067
    %v3070 = vmul.f32 %v3068, %v2960
    %v3071 = vmul.f32 %v3069, %v2964
    %v3072 = vadd.f32 %v3070, %v2973
    %v3073 = vadd.f32 %v3071, %v2977
    %v3074 = vadd.f32 %v3072, %v151
    %v3075 = vadd.f32 %v3073, %v152
    %v3076 = vmul.f32 %v3074, 0.5
    %v3077 = vmul.f32 %v3075, 0.5
    %v3078 = vmul.f32 %v3074, 0.70710677
    %v3079 = vmul.f32 %v3075, 0.70710677
    %v3080 = vand.u32 2147483647, %v3078
    %v3081 = vand.u32 2147483647, %v3079
    %v3082 = vmul.f32 %v3080, 0.3275911
    %v3083 = vmul.f32 %v3081, 0.3275911
    %v3084 = vadd.f32 %v3082, 1.0
    %v3085 = vadd.f32 %v3083, 1.0
    %v3086 = vrcp.pop %v3084
    %v3087 = vmul.f32 1.0, %v3086
    %v3088 = vrcp.pop %v3085
    %v3089 = vmul.f32 1.0, %v3088
    %v3090 = vmul.f32 %v3087, 1.0614054
    %v3091 = vmul.f32 %v3089, 1.0614054
    %v3092 = vadd.f32 %v3090, -1.4531521
    %v3093 = vadd.f32 %v3091, -1.4531521
    %v3094 = vmul.f32 %v3092, %v3087
    %v3095 = vmul.f32 %v3093, %v3089
    %v3096 = vadd.f32 %v3094, 1.4214138
    %v3097 = vadd.f32 %v3095, 1.4214138
    %v3098 = vmul.f32 %v3096, %v3087
    %v3099 = vmul.f32 %v3097, %v3089
    %v3100 = vadd.f32 %v3098, -0.28449672
    %v3101 = vadd.f32 %v3099, -0.28449672
    %v3102 = vmul.f32 %v3100, %v3087
    %v3103 = vmul.f32 %v3101, %v3089
    %v3104 = vadd.f32 %v3102, 0.2548296
    %v3105 = vadd.f32 %v3103, 0.2548296
    %v3106 = vmul.f32 %v3104, %v3087
    %v3107 = vmul.f32 %v3105, %v3089
    %v3108 = vsub.f32 0.0, %v3080
    %v3109 = vsub.f32 0.0, %v3081
    %v3110 = vmul.f32 %v3108, %v3080
    %v3111 = vmul.f32 %v3109, %v3081
    %v3112 = vmul.f32 %v3110, 1.442695
    %v3113 = vpow.pop %v3112
    %v3114 = vmul.f32 %v3111, 1.442695
    %v3115 = vpow.pop %v3114
    %v3116 = vmul.f32 %v3106, %v3113
    %v3117 = vmul.f32 %v3107, %v3115
    %v3118 = vsub.f32 1.0, %v3116
    %v3119 = vsub.f32 1.0, %v3117
    %vm3120 = vcmp.ge.f32.partialorder %v3078, 0.0
    %vm3121 = vcmp.ge.f32.partialorder %v3079, 0.0
    %v3122 = vsub.f32 0.0, %v3118
    %v3123 = vsub.f32 0.0, %v3119
    %v3124 = vsel %vm3120, %v3118, %v3122
    %v3125 = vsel %vm3121, %v3119, %v3123
    %v3126 = vadd.f32 %v3124, 1.0
    %v3127 = vadd.f32 %v3125, 1.0
    %v3128 = vmul.f32 %v3076, %v3126
    %v3129 = vmul.f32 %v3077, %v3127
    %v3132 = vcombine.low %v3128, %v3129
    %v3134 = vunpack.c.l.s4 1983009808
    %v3135 = vunpack.c.0.s8 %v3134
    %v3136 = vlaneseq
    %v3137 = vshrl.u32 %v3136, 7
    %v3138 = vsub.s32 %v3135, %v3137
    %v3139 = vrot.slane %v3132, %v3138
    %s3141 = scalar_lea.vmem [#allocation11], 4
    %3142 = vst [vmem:[%s3141] sm:$0xf] %v3139
    %v3143 = vsel %vm1488, %v2928, 0.0
    %v3144 = vsel %vm1488, %v2929, 0.0
    %v3145 = vadd.f32 %v3143, %v3144
    %3146 = vadd.xlane.f32.xlu0 %v3145
    %v3147 = vpop.xlane.xlu0 %3146
    %v3148 = vmul.f32 %v3147, %v1494
    %v3149 = vsub.f32 %v2928, %v3148
    %v3150 = vsub.f32 %v2929, %v3148
    %v3151 = vmul.f32 %v3149, %v3149
    %v3152 = vmul.f32 %v3150, %v3150
    %v3153 = vsel %vm1488, %v3151, 0.0
    %v3154 = vsel %vm1488, %v3152, 0.0
    %v3155 = vadd.f32 %v3153, %v3154
    %3156 = vadd.xlane.f32.xlu0 %v3155
    %v3157 = vpop.xlane.xlu0 %3156
    %v3158 = vmul.f32 %v3157, %v1494
    %v3159 = vadd.f32 %v3158, 1e-05
    %v3160 = vrsqrt.pop %v3159
    %v3161 = vmul.f32 %v3149, %v3160
    %v3162 = vmul.f32 %v3150, %v3160
    %v3163 = vmul.f32 %v3161, %v2960
    %v3164 = vmul.f32 %v3162, %v2964
    %v3165 = vadd.f32 %v3163, %v2973
    %v3166 = vadd.f32 %v3164, %v2977
    %v3167 = vadd.f32 %v3165, %v194
    %v3168 = vadd.f32 %v3166, %v195
    %v3169 = vmul.f32 %v3167, 0.5
    %v3170 = vmul.f32 %v3168, 0.5
    %v3171 = vmul.f32 %v3167, 0.70710677
    %v3172 = vmul.f32 %v3168, 0.70710677
    %v3173 = vand.u32 2147483647, %v3171
    %v3174 = vand.u32 2147483647, %v3172
    %v3175 = vmul.f32 %v3173, 0.3275911
    %v3176 = vmul.f32 %v3174, 0.3275911
    %v3177 = vadd.f32 %v3175, 1.0
    %v3178 = vadd.f32 %v3176, 1.0
    %v3179 = vrcp.pop %v3177
    %v3180 = vmul.f32 1.0, %v3179
    %v3181 = vrcp.pop %v3178
    %v3182 = vmul.f32 1.0, %v3181
    %v3183 = vmul.f32 %v3180, 1.0614054
    %v3184 = vmul.f32 %v3182, 1.0614054
    %v3185 = vadd.f32 %v3183, -1.4531521
    %v3186 = vadd.f32 %v3184, -1.4531521
    %v3187 = vmul.f32 %v3185, %v3180
    %v3188 = vmul.f32 %v3186, %v3182
    %v3189 = vadd.f32 %v3187, 1.4214138
    %v3190 = vadd.f32 %v3188, 1.4214138
    %v3191 = vmul.f32 %v3189, %v3180
    %v3192 = vmul.f32 %v3190, %v3182
    %v3193 = vadd.f32 %v3191, -0.28449672
    %v3194 = vadd.f32 %v3192, -0.28449672
    %v3195 = vmul.f32 %v3193, %v3180
    %v3196 = vmul.f32 %v3194, %v3182
    %v3197 = vadd.f32 %v3195, 0.2548296
    %v3198 = vadd.f32 %v3196, 0.2548296
    %v3199 = vmul.f32 %v3197, %v3180
    %v3200 = vmul.f32 %v3198, %v3182
    %v3201 = vsub.f32 0.0, %v3173
    %v3202 = vsub.f32 0.0, %v3174
    %v3203 = vmul.f32 %v3201, %v3173
    %v3204 = vmul.f32 %v3202, %v3174
    %v3205 = vmul.f32 %v3203, 1.442695
    %v3206 = vpow.pop %v3205
    %v3207 = vmul.f32 %v3204, 1.442695
    %v3208 = vpow.pop %v3207
    %v3209 = vmul.f32 %v3199, %v3206
    %v3210 = vmul.f32 %v3200, %v3208
    %v3211 = vsub.f32 1.0, %v3209
    %v3212 = vsub.f32 1.0, %v3210
    %vm3213 = vcmp.ge.f32.partialorder %v3171, 0.0
    %vm3214 = vcmp.ge.f32.partialorder %v3172, 0.0
    %v3215 = vsub.f32 0.0, %v3211
    %v3216 = vsub.f32 0.0, %v3212
    %v3217 = vsel %vm3213, %v3211, %v3215
    %v3218 = vsel %vm3214, %v3212, %v3216
    %v3219 = vadd.f32 %v3217, 1.0
    %v3220 = vadd.f32 %v3218, 1.0
    %v3221 = vmul.f32 %v3169, %v3219
    %v3222 = vmul.f32 %v3170, %v3220
    %v3225 = vcombine.low %v3221, %v3222
    %v3227 = vunpack.c.l.s4 1983009808
    %v3228 = vunpack.c.0.s8 %v3227
    %v3229 = vlaneseq
    %v3230 = vshrl.u32 %v3229, 7
    %v3231 = vsub.s32 %v3228, %v3230
    %v3232 = vrot.slane %v3225, %v3231
    %s3234 = scalar_lea.vmem [#allocation11], 8
    %3235 = vst [vmem:[%s3234] sm:$0xf] %v3232
    %v3236 = vsel %vm1488, %v2934, 0.0
    %v3237 = vsel %vm1488, %v2935, 0.0
    %v3238 = vadd.f32 %v3236, %v3237
    %3239 = vadd.xlane.f32.xlu0 %v3238
    %v3240 = vpop.xlane.xlu0 %3239
    %v3241 = vmul.f32 %v3240, %v1494
    %v3242 = vsub.f32 %v2934, %v3241
    %v3243 = vsub.f32 %v2935, %v3241
    %v3244 = vmul.f32 %v3242, %v3242
    %v3245 = vmul.f32 %v3243, %v3243
    %v3246 = vsel %vm1488, %v3244, 0.0
    %v3247 = vsel %vm1488, %v3245, 0.0
    %v3248 = vadd.f32 %v3246, %v3247
    %3249 = vadd.xlane.f32.xlu0 %v3248
    %v3250 = vpop.xlane.xlu0 %3249
    %v3251 = vmul.f32 %v3250, %v1494
    %v3252 = vadd.f32 %v3251, 1e-05
    %v3253 = vrsqrt.pop %v3252
    %v3254 = vmul.f32 %v3242, %v3253
    %v3255 = vmul.f32 %v3243, %v3253
    %v3256 = vmul.f32 %v3254, %v2960
    %v3257 = vmul.f32 %v3255, %v2964
    %v3258 = vadd.f32 %v3256, %v2973
    %v3259 = vadd.f32 %v3257, %v2977
    %v3260 = vadd.f32 %v3258, %v237
    %v3261 = vadd.f32 %v3259, %v238
    %v3262 = vmul.f32 %v3260, 0.5
    %v3263 = vmul.f32 %v3261, 0.5
    %v3264 = vmul.f32 %v3260, 0.70710677
    %v3265 = vmul.f32 %v3261, 0.70710677
    %v3266 = vand.u32 2147483647, %v3264
    %v3267 = vand.u32 2147483647, %v3265
    %v3268 = vmul.f32 %v3266, 0.3275911
    %v3269 = vmul.f32 %v3267, 0.3275911
    %v3270 = vadd.f32 %v3268, 1.0
    %v3271 = vadd.f32 %v3269, 1.0
    %v3272 = vrcp.pop %v3270
    %v3273 = vmul.f32 1.0, %v3272
    %v3274 = vrcp.pop %v3271
    %v3275 = vmul.f32 1.0, %v3274
    %v3276 = vmul.f32 %v3273, 1.0614054
    %v3277 = vmul.f32 %v3275, 1.0614054
    %v3278 = vadd.f32 %v3276, -1.4531521
    %v3279 = vadd.f32 %v3277, -1.4531521
    %v3280 = vmul.f32 %v3278, %v3273
    %v3281 = vmul.f32 %v3279, %v3275
    %v3282 = vadd.f32 %v3280, 1.4214138
    %v3283 = vadd.f32 %v3281, 1.4214138
    %v3284 = vmul.f32 %v3282, %v3273
    %v3285 = vmul.f32 %v3283, %v3275
    %v3286 = vadd.f32 %v3284, -0.28449672
    %v3287 = vadd.f32 %v3285, -0.28449672
    %v3288 = vmul.f32 %v3286, %v3273
    %v3289 = vmul.f32 %v3287, %v3275
    %v3290 = vadd.f32 %v3288, 0.2548296
    %v3291 = vadd.f32 %v3289, 0.2548296
    %v3292 = vmul.f32 %v3290, %v3273
    %v3293 = vmul.f32 %v3291, %v3275
    %v3294 = vsub.f32 0.0, %v3266
    %v3295 = vsub.f32 0.0, %v3267
    %v3296 = vmul.f32 %v3294, %v3266
    %v3297 = vmul.f32 %v3295, %v3267
    %v3298 = vmul.f32 %v3296, 1.442695
    %v3299 = vpow.pop %v3298
    %v3300 = vmul.f32 %v3297, 1.442695
    %v3301 = vpow.pop %v3300
    %v3302 = vmul.f32 %v3292, %v3299
    %v3303 = vmul.f32 %v3293, %v3301
    %v3304 = vsub.f32 1.0, %v3302
    %v3305 = vsub.f32 1.0, %v3303
    %vm3306 = vcmp.ge.f32.partialorder %v3264, 0.0
    %vm3307 = vcmp.ge.f32.partialorder %v3265, 0.0
    %v3308 = vsub.f32 0.0, %v3304
    %v3309 = vsub.f32 0.0, %v3305
    %v3310 = vsel %vm3306, %v3304, %v3308
    %v3311 = vsel %vm3307, %v3305, %v3309
    %v3312 = vadd.f32 %v3310, 1.0
    %v3313 = vadd.f32 %v3311, 1.0
    %v3314 = vmul.f32 %v3262, %v3312
    %v3315 = vmul.f32 %v3263, %v3313
    %v3318 = vcombine.low %v3314, %v3315
    %v3320 = vunpack.c.l.s4 1983009808
    %v3321 = vunpack.c.0.s8 %v3320
    %v3322 = vlaneseq
    %v3323 = vshrl.u32 %v3322, 7
    %v3324 = vsub.s32 %v3321, %v3323
    %v3325 = vrot.slane %v3318, %v3324
    %s3327 = scalar_lea.vmem [#allocation11], 12
    %3328 = vst [vmem:[%s3327] sm:$0xf] %v3325
    // Predicated region
    $region50: #{tpu_custom_call.1} parent=1 // pred_check
      _
    $region51: #{tpu_custom_call.1} parent=1 // pred_check_branch
      %3330 = sbr.rel (0) target = $region53
    $region52: #{tpu_custom_call.1} parent=1 // pred_region
      %s3332 = ssub.s32 256, 256
      %3333 = vsyncadd [#allocation4], %s3332
      %s3334 = sshll.u32 [#allocation11], 4
      %s3335 = int_to_ptr.vmem [resolvable:$true] %s3334
      %3340 = dma.vmem_to_hbm [thread:$0]  %s3335, 256, %s8, [#allocation4], 64, 64, 4
    $region53: #{tpu_custom_call.1} parent=1 // pred_fallthru
      _
    // Predicated region
    $region54: #{tpu_custom_call.1} parent=1 // pred_check
      _
    $region55: #{tpu_custom_call.1} parent=1 // pred_check_branch
      %3342 = sbr.rel (0) target = $region57
    $region56: #{tpu_custom_call.1} parent=1 // pred_region
      %3343 = dma.done [#allocation4], 256
    $region57: #{tpu_custom_call.1} parent=1 // pred_fallthru
      _
    %3344 = vsyncpa [#allocation3], 1
    %3345 = vsyncpa [#allocation7], 1
    %3346 = vsyncpa [#allocation4], 1
    %3347 = vsyncpa [#allocation5], 1
    %3348 = vsyncpa [#allocation10], 1

</llo_original>
